<compile_context>
chip_gen: v6e
topology: v6e:2x2x1
jax: 0.10.0
libtpu: 0.0.40
codegen_flags: <defaults>
</compile_context>

<pallas_src>
import functools

import jax
import jax.numpy as jnp
from jax.experimental import pallas as pl
from jax.experimental.pallas import tpu as pltpu

EPS = 1e-5  # torch.nn.InstanceNorm2d default eps


def _instance_norm(acc, gamma, beta):
    # acc: (HW, C2) f32.  One-pass stats (sum / sum-of-squares, biased
    # variance) over the spatial axis; per-lane => per-image per-channel for
    # the packed layout.  Affine folded into a single scale/shift.
    n = acc.shape[0]
    s1 = jnp.sum(acc, axis=0, keepdims=True)
    s2 = jnp.sum(acc * acc, axis=0, keepdims=True)
    mean = s1 * (1.0 / n)
    var = jnp.maximum(s2 * (1.0 / n) - mean * mean, 0.0)
    scale = jax.lax.rsqrt(var + EPS) * gamma          # (1, C2)
    shift = beta - mean * scale                       # (1, C2)
    return acc * scale + shift


def _conv(y, masks, w_ref, *, KH, KW, W):
    """KHxKW conv (stride 1, top-left tap offset (-1,-1), zero pad) on a
    flattened channels-last slab, as KH accumulating K=KW*C2 matmuls.

    y:     (HW, C2) f32 activation (two images lane-packed).
    masks: dict dx -> (HW, C2) bool column-validity mask (hoisted).
    w_ref: (KH*KW*C2, C2) bf16 block-diagonal im2col weights.
    """
    HW, C2 = y.shape
    # Column (kw) shifts: shift + mask in f32, cast each slab to bf16 once.
    slabs = []
    for kw in range(KW):
        dx = kw - 1
        if dx == 0:
            sx = y
        elif dx > 0:
            s = jnp.concatenate(
                [y[dx:], jnp.zeros((dx, C2), jnp.float32)], axis=0)
            sx = jnp.where(masks[dx], s, 0.0)
        else:  # dx < 0
            s = jnp.concatenate(
                [jnp.zeros((-dx, C2), jnp.float32), y[:HW + dx]], axis=0)
            sx = jnp.where(masks[dx], s, 0.0)
        slabs.append(sx.astype(jnp.bfloat16))
    # Row (kh) shifts: sublane-tile-aligned (multiples of W=16 rows) slices of
    # zero-extended bf16 slabs — rows outside the image read exact zeros.
    zero_top = jnp.zeros((W, C2), jnp.bfloat16)
    zero_bot = jnp.zeros(((KH - 2) * W, C2), jnp.bfloat16)
    exts = [jnp.concatenate([zero_top, s, zero_bot], axis=0) for s in slabs]

    acc = jnp.zeros((HW, C2), jnp.float32)
    for kh in range(KH):
        p_kh = jnp.concatenate(
            [exts[kw][kh * W:kh * W + HW] for kw in range(KW)], axis=1)
        w_kh = w_ref[kh * KW * C2:(kh + 1) * KW * C2, :]
        acc = acc + jnp.dot(p_kh, w_kh, preferred_element_type=jnp.float32)
    return acc


def _residual_block_kernel(x_ref, col_ref, w1_ref, w2_ref, par_ref, o_ref, *, W):
    _, HW, C2 = x_ref.shape
    x = x_ref[0]            # (HW, C2) f32 — conv_1 input AND the residual
    col = col_ref[...]      # (HW, 1) int32 — column index of each row
    par = par_ref[...]      # (5, C2) f32
    g1, b1, alpha, g2, b2 = [par[k:k + 1] for k in range(5)]

    # Hoisted column-validity masks, reused by both convs.
    col_b = jnp.broadcast_to(col, (HW, C2))
    masks = {-1: col_b >= 1, 1: col_b < W - 1, 2: col_b < W - 2}

    # ---- conv_1: 4x4, stride 1, asymmetric zero pad (1, 2) -----------------
    acc1 = _conv(x, masks, w1_ref, KH=4, KW=4, W=W)

    # ---- InstanceNorm2d(64, affine) + per-channel PReLU (f32) --------------
    y = _instance_norm(acc1, g1, b1)
    y = jnp.where(y > 0, y, alpha * y)

    # ---- conv_2: 3x3, stride 1, zero pad 1 ----------------------------------
    acc2 = _conv(y, masks, w2_ref, KH=3, KW=3, W=W)

    # ---- InstanceNorm2d #2 + residual add -----------------------------------
    o_ref[0] = _instance_norm(acc2, g2, b2) + x


def residual_block_forward(x_nchw, params):
    """x: (N, 64, H, W) f32 NCHW; params = (w1, g1, b1, alpha, w2, g2, b2)."""
    w1, g1, b1, a, w2, g2, b2 = params
    N, C, H, W = x_nchw.shape
    HW = H * W
    C2 = 2 * C

    # Pad batch to even so images can be lane-packed in pairs.
    n_pad = N % 2
    if n_pad:
        x_nchw = jnp.concatenate([x_nchw, jnp.zeros_like(x_nchw[:1])], axis=0)
    Nt = N + n_pad
    NP = Nt // 2

    # Layout glue: NCHW -> flattened channels-last, then pack image pairs
    # along the lane axis: lanes [0,C) = image 2b, lanes [C,2C) = image 2b+1.
    x_flat = jnp.transpose(x_nchw, (0, 2, 3, 1)).reshape(Nt, HW, C)
    x_flat = x_flat.astype(jnp.float32)
    x_pack = x_flat.reshape(NP, 2, HW, C).transpose(0, 2, 1, 3).reshape(NP, HW, C2)

    def pack_weight(w, taps):
        # torch (Cout, Cin, kh, kw) -> (kh, kw, cin, cout) -> per-tap
        # block-diagonal (2C, 2C) so lane-packed images don't mix channels.
        wc = jnp.transpose(w, (2, 3, 1, 0)).reshape(taps, C, C)
        z = jnp.zeros_like(wc)
        wp = jnp.concatenate(
            [jnp.concatenate([wc, z], axis=2),
             jnp.concatenate([z, wc], axis=2)], axis=1)       # (taps, 2C, 2C)
        return wp.reshape(taps * C2, C2).astype(jnp.bfloat16)

    w1col = pack_weight(w1, 16)                               # (2048, 128) bf16
    w2col = pack_weight(w2, 9)                                # (1152, 128) bf16
    par = jnp.tile(jnp.stack([g1, b1, a, g2, b2]).astype(jnp.float32), (1, 2))
    # Column index of every flattened spatial row (avoids in-kernel div/mod).
    col_idx = jnp.tile(jnp.arange(W, dtype=jnp.int32), H).reshape(HW, 1)

    kernel = functools.partial(_residual_block_kernel, W=W)

    out = pl.pallas_call(
        kernel,
        out_shape=jax.ShapeDtypeStruct((NP, HW, C2), jnp.float32),
        grid_spec=pltpu.PrefetchScalarGridSpec(
            num_scalar_prefetch=0,
            grid=(NP,),   # one lane-packed image pair per step; NP>=2 keeps
                          # both v7x TensorCores busy
            in_specs=[
                pl.BlockSpec((1, HW, C2), lambda b: (b, 0, 0)),
                pl.BlockSpec((HW, 1), lambda b: (0, 0)),
                pl.BlockSpec((16 * C2, C2), lambda b: (0, 0)),
                pl.BlockSpec((9 * C2, C2), lambda b: (0, 0)),
                pl.BlockSpec((5, C2), lambda b: (0, 0)),
            ],
            out_specs=pl.BlockSpec((1, HW, C2), lambda b: (b, 0, 0)),
        ),
        compiler_params=pltpu.CompilerParams(
            dimension_semantics=("parallel",),
            vmem_limit_bytes=32 * 1024 * 1024,  # ample here; re-derive for
                                                # large H,W (v7x: 64 MiB phys)
        ),
    )(x_pack, col_idx, w1col, w2col, par)

    # Unpack lanes back to per-image layout and restore NCHW.
    out = out.reshape(NP, HW, 2, C).transpose(0, 2, 1, 3).reshape(Nt, HW, C)
    out = out[:N].reshape(N, H, W, C)
    return jnp.transpose(out, (0, 3, 1, 2))


def residual_block_reference(x, params):
    """Pure-JAX/XLA mirror of the PyTorch forward (NCHW, f32, default
    precision — i.e. the standard bf16-operand MXU path on TPU)."""
    w1, g1, b1, a, w2, g2, b2 = params

    def inorm(t, g, b):
        m = jnp.mean(t, axis=(2, 3), keepdims=True)
        v = jnp.mean((t - m) ** 2, axis=(2, 3), keepdims=True)
        return ((t - m) * jax.lax.rsqrt(v + EPS) * g.reshape(1, -1, 1, 1)
                + b.reshape(1, -1, 1, 1))

    xp = jnp.pad(x, ((0, 0), (0, 0), (1, 2), (1, 2)))   # pad(x, kernel_size=4)
    y = jax.lax.conv_general_dilated(
        xp, w1, (1, 1), 'VALID',
        dimension_numbers=('NCHW', 'OIHW', 'NCHW'))
    y = inorm(y, g1, b1)
    y = jnp.where(y > 0, y, a.reshape(1, -1, 1, 1) * y)
    y = jax.lax.conv_general_dilated(
        y, w2, (1, 1), ((1, 1), (1, 1)),
        dimension_numbers=('NCHW', 'OIHW', 'NCHW'))
    y = inorm(y, g2, b2)
    return y + x


if __name__ == "__main__":
    # Channel count is fixed at 64 by the module; N=4 so the lane-packed grid
    # still has 2 parallel steps (both v7x TensorCores get work).
    N, C, H, W = 4, 64, 16, 16

    key = jax.random.PRNGKey(0)
    ks = jax.random.split(key, 8)
    w1 = jax.random.normal(ks[0], (C, C, 4, 4), jnp.float32) * 0.05   # conv_1
    w2 = jax.random.normal(ks[1], (C, C, 3, 3), jnp.float32) * 0.05   # conv_2
    g1 = 1.0 + 0.1 * jax.random.normal(ks[2], (C,), jnp.float32)      # IN gamma
    b1 = 0.1 * jax.random.normal(ks[3], (C,), jnp.float32)            # IN beta
    g2 = 1.0 + 0.1 * jax.random.normal(ks[4], (C,), jnp.float32)
    b2 = 0.1 * jax.random.normal(ks[5], (C,), jnp.float32)
    a = 0.25 + 0.05 * jax.random.normal(ks[6], (C,), jnp.float32)     # PReLU
    params = (w1, g1, b1, a, w2, g2, b2)

    x = jax.random.normal(ks[7], (N, C, H, W), jnp.float32)

    out = jax.block_until_ready(residual_block_forward(x, params))
    ref = jax.block_until_ready(residual_block_reference(x, params))

    assert out.shape == x.shape
    max_err = float(jnp.max(jnp.abs(out - ref)))
    # Kernel matmuls use bf16 operands (single MXU pass, f32 accumulation);
    # the XLA reference also uses the default bf16 MXU conv path, so observed
    # error is typically ~1e-4.  3e-2 also bounds the case where XLA picks a
    # higher-precision conv algorithm, while a structural bug (wrong tap /
    # mask / block-diag weight / affine) produces errors >= 0.05.
    assert max_err < 3e-2, f"max abs error vs reference: {max_err}"
    print("KERNEL_OK")
</pallas_src>

<mosaic_0001>
module attributes {stable_mosaic.version = 11 : i64} {
  func.func @_residual_block_kernel(%arg0: i32, %arg1: memref<1x256x128xf32, #tpu.memory_space<vmem>>, %arg2: memref<256x1xi32, #tpu.memory_space<vmem>>, %arg3: memref<2048x128xbf16, #tpu.memory_space<vmem>>, %arg4: memref<1152x128xbf16, #tpu.memory_space<vmem>>, %arg5: memref<5x128xf32, #tpu.memory_space<vmem>>, %arg6: memref<1x256x128xf32, #tpu.memory_space<vmem>>) attributes {dimension_semantics = [#tpu.dimension_semantics<parallel>], iteration_bounds = array<i64: 2>, scalar_prefetch = 0 : i64, scratch_operands = 0 : i64, tpu.core_type = #tpu.core_type<tc>, window_params = [{transform_indices = @transform_0, window_bounds = array<i64: 1, 256, 128>}, {pipeline_mode = #tpu.pipeline_mode<synchronous>, transform_indices = @transform_1, window_bounds = array<i64: 256, 1>}, {pipeline_mode = #tpu.pipeline_mode<synchronous>, transform_indices = @transform_2, window_bounds = array<i64: 2048, 128>}, {pipeline_mode = #tpu.pipeline_mode<synchronous>, transform_indices = @transform_3, window_bounds = array<i64: 1152, 128>}, {pipeline_mode = #tpu.pipeline_mode<synchronous>, transform_indices = @transform_4, window_bounds = array<i64: 5, 128>}, {transform_indices = @transform_5, window_bounds = array<i64: 1, 256, 128>}]} {
    %c0 = arith.constant 0 : index
    %c0_0 = arith.constant 0 : index
    %c0_1 = arith.constant 0 : index
    %0 = vector.load %arg1[%c0, %c0_0, %c0_1] : memref<1x256x128xf32, #tpu.memory_space<vmem>>, vector<1x256x128xf32>
    %1 = vector.shape_cast %0 : vector<1x256x128xf32> to vector<256x128xf32>
    %c0_2 = arith.constant 0 : index
    %c0_3 = arith.constant 0 : index
    %2 = vector.load %arg2[%c0_2, %c0_3] : memref<256x1xi32, #tpu.memory_space<vmem>>, vector<256x1xi32>
    %c0_4 = arith.constant 0 : index
    %c0_5 = arith.constant 0 : index
    %3 = vector.load %arg5[%c0_4, %c0_5] : memref<5x128xf32, #tpu.memory_space<vmem>>, vector<5x128xf32>
    %4 = vector.extract_strided_slice %3 {offsets = [0, 0], sizes = [1, 128], strides = [1, 1]} : vector<5x128xf32> to vector<1x128xf32>
    %5 = vector.extract_strided_slice %3 {offsets = [1, 0], sizes = [1, 128], strides = [1, 1]} : vector<5x128xf32> to vector<1x128xf32>
    %6 = vector.extract_strided_slice %3 {offsets = [2, 0], sizes = [1, 128], strides = [1, 1]} : vector<5x128xf32> to vector<1x128xf32>
    %7 = vector.extract_strided_slice %3 {offsets = [3, 0], sizes = [1, 128], strides = [1, 1]} : vector<5x128xf32> to vector<1x128xf32>
    %8 = vector.extract_strided_slice %3 {offsets = [4, 0], sizes = [1, 128], strides = [1, 1]} : vector<5x128xf32> to vector<1x128xf32>
    %9 = vector.shape_cast %2 : vector<256x1xi32> to vector<256x1xi32>
    %10 = vector.broadcast %9 : vector<256x1xi32> to vector<256x128xi32>
    %c1_i32 = arith.constant 1 : i32
    %11 = vector.broadcast %c1_i32 : i32 to vector<256x128xi32>
    %12 = arith.cmpi sge, %10, %11 : vector<256x128xi32>
    %c15_i32 = arith.constant 15 : i32
    %13 = vector.broadcast %c15_i32 : i32 to vector<256x128xi32>
    %14 = arith.cmpi slt, %10, %13 : vector<256x128xi32>
    %c14_i32 = arith.constant 14 : i32
    %15 = vector.broadcast %c14_i32 : i32 to vector<256x128xi32>
    %16 = arith.cmpi slt, %10, %15 : vector<256x128xi32>
    %cst = arith.constant 0.000000e+00 : f32
    %17 = vector.broadcast %cst : f32 to vector<1x128xf32>
    %18 = vector.extract_strided_slice %1 {offsets = [0, 0], sizes = [255, 128], strides = [1, 1]} : vector<256x128xf32> to vector<255x128xf32>
    %19 = tpu.concatenate %17, %18 in 0 : vector<1x128xf32>, vector<255x128xf32> -> vector<256x128xf32>
    %cst_6 = arith.constant 0.000000e+00 : f32
    %20 = vector.broadcast %cst_6 : f32 to vector<256x128xf32>
    %21 = arith.select %12, %19, %20 : vector<256x128xi1>, vector<256x128xf32>
    %22 = arith.truncf %21 : vector<256x128xf32> to vector<256x128xbf16>
    %23 = arith.truncf %1 : vector<256x128xf32> to vector<256x128xbf16>
    %24 = vector.extract_strided_slice %1 {offsets = [1, 0], sizes = [255, 128], strides = [1, 1]} : vector<256x128xf32> to vector<255x128xf32>
    %cst_7 = arith.constant 0.000000e+00 : f32
    %25 = vector.broadcast %cst_7 : f32 to vector<1x128xf32>
    %26 = tpu.concatenate %24, %25 in 0 : vector<255x128xf32>, vector<1x128xf32> -> vector<256x128xf32>
    %cst_8 = arith.constant 0.000000e+00 : f32
    %27 = vector.broadcast %cst_8 : f32 to vector<256x128xf32>
    %28 = arith.select %14, %26, %27 : vector<256x128xi1>, vector<256x128xf32>
    %29 = arith.truncf %28 : vector<256x128xf32> to vector<256x128xbf16>
    %30 = vector.extract_strided_slice %1 {offsets = [2, 0], sizes = [254, 128], strides = [1, 1]} : vector<256x128xf32> to vector<254x128xf32>
    %cst_9 = arith.constant 0.000000e+00 : f32
    %31 = vector.broadcast %cst_9 : f32 to vector<2x128xf32>
    %32 = tpu.concatenate %30, %31 in 0 : vector<254x128xf32>, vector<2x128xf32> -> vector<256x128xf32>
    %cst_10 = arith.constant 0.000000e+00 : f32
    %33 = vector.broadcast %cst_10 : f32 to vector<256x128xf32>
    %34 = arith.select %16, %32, %33 : vector<256x128xi1>, vector<256x128xf32>
    %35 = arith.truncf %34 : vector<256x128xf32> to vector<256x128xbf16>
    %cst_11 = arith.constant 0.000000e+00 : bf16
    %36 = vector.broadcast %cst_11 : bf16 to vector<16x128xbf16>
    %cst_12 = arith.constant 0.000000e+00 : bf16
    %37 = vector.broadcast %cst_12 : bf16 to vector<32x128xbf16>
    %38 = tpu.concatenate %36, %22, %37 in 0 : vector<16x128xbf16>, vector<256x128xbf16>, vector<32x128xbf16> -> vector<304x128xbf16>
    %39 = tpu.concatenate %36, %23, %37 in 0 : vector<16x128xbf16>, vector<256x128xbf16>, vector<32x128xbf16> -> vector<304x128xbf16>
    %40 = tpu.concatenate %36, %29, %37 in 0 : vector<16x128xbf16>, vector<256x128xbf16>, vector<32x128xbf16> -> vector<304x128xbf16>
    %41 = tpu.concatenate %36, %35, %37 in 0 : vector<16x128xbf16>, vector<256x128xbf16>, vector<32x128xbf16> -> vector<304x128xbf16>
    %cst_13 = arith.constant 0.000000e+00 : f32
    %42 = vector.broadcast %cst_13 : f32 to vector<256x128xf32>
    %43 = vector.extract_strided_slice %38 {offsets = [0, 0], sizes = [256, 128], strides = [1, 1]} : vector<304x128xbf16> to vector<256x128xbf16>
    %44 = vector.extract_strided_slice %39 {offsets = [0, 0], sizes = [256, 128], strides = [1, 1]} : vector<304x128xbf16> to vector<256x128xbf16>
    %45 = vector.extract_strided_slice %40 {offsets = [0, 0], sizes = [256, 128], strides = [1, 1]} : vector<304x128xbf16> to vector<256x128xbf16>
    %46 = vector.extract_strided_slice %41 {offsets = [0, 0], sizes = [256, 128], strides = [1, 1]} : vector<304x128xbf16> to vector<256x128xbf16>
    %47 = tpu.concatenate %43, %44, %45, %46 in 1 : vector<256x128xbf16>, vector<256x128xbf16>, vector<256x128xbf16>, vector<256x128xbf16> -> vector<256x512xbf16>
    %c0_14 = arith.constant 0 : index
    %c0_15 = arith.constant 0 : index
    %48 = vector.load %arg3[%c0_14, %c0_15] : memref<2048x128xbf16, #tpu.memory_space<vmem>>, vector<512x128xbf16>
    %cst_16 = arith.constant dense<0.000000e+00> : vector<256x128xf32>
    %49 = tpu.matmul %47, %48, %cst_16 {dimension_numbers = #tpu.dot_dimension_numbers<[1], [0], [0], [1], [0, 0, 1, 1], [], []>} : vector<256x512xbf16>, vector<512x128xbf16>, vector<256x128xf32> -> vector<256x128xf32>
    %50 = arith.addf %42, %49 : vector<256x128xf32>
    %51 = vector.extract_strided_slice %38 {offsets = [16, 0], sizes = [256, 128], strides = [1, 1]} : vector<304x128xbf16> to vector<256x128xbf16>
    %52 = vector.extract_strided_slice %39 {offsets = [16, 0], sizes = [256, 128], strides = [1, 1]} : vector<304x128xbf16> to vector<256x128xbf16>
    %53 = vector.extract_strided_slice %40 {offsets = [16, 0], sizes = [256, 128], strides = [1, 1]} : vector<304x128xbf16> to vector<256x128xbf16>
    %54 = vector.extract_strided_slice %41 {offsets = [16, 0], sizes = [256, 128], strides = [1, 1]} : vector<304x128xbf16> to vector<256x128xbf16>
    %55 = tpu.concatenate %51, %52, %53, %54 in 1 : vector<256x128xbf16>, vector<256x128xbf16>, vector<256x128xbf16>, vector<256x128xbf16> -> vector<256x512xbf16>
    %c512 = arith.constant 512 : index
    %c0_17 = arith.constant 0 : index
    %56 = vector.load %arg3[%c512, %c0_17] : memref<2048x128xbf16, #tpu.memory_space<vmem>>, vector<512x128xbf16>
    %cst_18 = arith.constant dense<0.000000e+00> : vector<256x128xf32>
    %57 = tpu.matmul %55, %56, %cst_18 {dimension_numbers = #tpu.dot_dimension_numbers<[1], [0], [0], [1], [0, 0, 1, 1], [], []>} : vector<256x512xbf16>, vector<512x128xbf16>, vector<256x128xf32> -> vector<256x128xf32>
    %58 = arith.addf %50, %57 : vector<256x128xf32>
    %59 = vector.extract_strided_slice %38 {offsets = [32, 0], sizes = [256, 128], strides = [1, 1]} : vector<304x128xbf16> to vector<256x128xbf16>
    %60 = vector.extract_strided_slice %39 {offsets = [32, 0], sizes = [256, 128], strides = [1, 1]} : vector<304x128xbf16> to vector<256x128xbf16>
    %61 = vector.extract_strided_slice %40 {offsets = [32, 0], sizes = [256, 128], strides = [1, 1]} : vector<304x128xbf16> to vector<256x128xbf16>
    %62 = vector.extract_strided_slice %41 {offsets = [32, 0], sizes = [256, 128], strides = [1, 1]} : vector<304x128xbf16> to vector<256x128xbf16>
    %63 = tpu.concatenate %59, %60, %61, %62 in 1 : vector<256x128xbf16>, vector<256x128xbf16>, vector<256x128xbf16>, vector<256x128xbf16> -> vector<256x512xbf16>
    %c1024 = arith.constant 1024 : index
    %c0_19 = arith.constant 0 : index
    %64 = vector.load %arg3[%c1024, %c0_19] : memref<2048x128xbf16, #tpu.memory_space<vmem>>, vector<512x128xbf16>
    %cst_20 = arith.constant dense<0.000000e+00> : vector<256x128xf32>
    %65 = tpu.matmul %63, %64, %cst_20 {dimension_numbers = #tpu.dot_dimension_numbers<[1], [0], [0], [1], [0, 0, 1, 1], [], []>} : vector<256x512xbf16>, vector<512x128xbf16>, vector<256x128xf32> -> vector<256x128xf32>
    %66 = arith.addf %58, %65 : vector<256x128xf32>
    %67 = vector.extract_strided_slice %38 {offsets = [48, 0], sizes = [256, 128], strides = [1, 1]} : vector<304x128xbf16> to vector<256x128xbf16>
    %68 = vector.extract_strided_slice %39 {offsets = [48, 0], sizes = [256, 128], strides = [1, 1]} : vector<304x128xbf16> to vector<256x128xbf16>
    %69 = vector.extract_strided_slice %40 {offsets = [48, 0], sizes = [256, 128], strides = [1, 1]} : vector<304x128xbf16> to vector<256x128xbf16>
    %70 = vector.extract_strided_slice %41 {offsets = [48, 0], sizes = [256, 128], strides = [1, 1]} : vector<304x128xbf16> to vector<256x128xbf16>
    %71 = tpu.concatenate %67, %68, %69, %70 in 1 : vector<256x128xbf16>, vector<256x128xbf16>, vector<256x128xbf16>, vector<256x128xbf16> -> vector<256x512xbf16>
    %c1536 = arith.constant 1536 : index
    %c0_21 = arith.constant 0 : index
    %72 = vector.load %arg3[%c1536, %c0_21] : memref<2048x128xbf16, #tpu.memory_space<vmem>>, vector<512x128xbf16>
    %cst_22 = arith.constant dense<0.000000e+00> : vector<256x128xf32>
    %73 = tpu.matmul %71, %72, %cst_22 {dimension_numbers = #tpu.dot_dimension_numbers<[1], [0], [0], [1], [0, 0, 1, 1], [], []>} : vector<256x512xbf16>, vector<512x128xbf16>, vector<256x128xf32> -> vector<256x128xf32>
    %74 = arith.addf %66, %73 : vector<256x128xf32>
    %cst_23 = arith.constant dense<0.000000e+00> : vector<128xf32>
    %75 = vector.multi_reduction <add>, %74, %cst_23 [0] : vector<256x128xf32> to vector<128xf32>
    %76 = vector.shape_cast %75 : vector<128xf32> to vector<1x128xf32>
    %77 = arith.mulf %74, %74 : vector<256x128xf32>
    %cst_24 = arith.constant dense<0.000000e+00> : vector<128xf32>
    %78 = vector.multi_reduction <add>, %77, %cst_24 [0] : vector<256x128xf32> to vector<128xf32>
    %79 = vector.shape_cast %78 : vector<128xf32> to vector<1x128xf32>
    %cst_25 = arith.constant 3.906250e-03 : f32
    %80 = vector.broadcast %cst_25 : f32 to vector<1x128xf32>
    %81 = arith.mulf %76, %80 : vector<1x128xf32>
    %cst_26 = arith.constant 3.906250e-03 : f32
    %82 = vector.broadcast %cst_26 : f32 to vector<1x128xf32>
    %83 = arith.mulf %79, %82 : vector<1x128xf32>
    %84 = arith.mulf %81, %81 : vector<1x128xf32>
    %85 = arith.subf %83, %84 : vector<1x128xf32>
    %cst_27 = arith.constant 0.000000e+00 : f32
    %86 = vector.broadcast %cst_27 : f32 to vector<1x128xf32>
    %87 = arith.maximumf %85, %86 : vector<1x128xf32>
    %cst_28 = arith.constant 9.99999974E-6 : f32
    %88 = vector.broadcast %cst_28 : f32 to vector<1x128xf32>
    %89 = arith.addf %87, %88 : vector<1x128xf32>
    %90 = math.rsqrt %89 : vector<1x128xf32>
    %91 = arith.mulf %90, %4 : vector<1x128xf32>
    %92 = arith.mulf %81, %91 : vector<1x128xf32>
    %93 = arith.subf %5, %92 : vector<1x128xf32>
    %94 = vector.broadcast %91 : vector<1x128xf32> to vector<256x128xf32>
    %95 = arith.mulf %74, %94 : vector<256x128xf32>
    %96 = vector.broadcast %93 : vector<1x128xf32> to vector<256x128xf32>
    %97 = arith.addf %95, %96 : vector<256x128xf32>
    %cst_29 = arith.constant 0.000000e+00 : f32
    %98 = vector.broadcast %cst_29 : f32 to vector<256x128xf32>
    %99 = arith.cmpf ogt, %97, %98 : vector<256x128xf32>
    %100 = vector.broadcast %6 : vector<1x128xf32> to vector<256x128xf32>
    %101 = arith.mulf %100, %97 : vector<256x128xf32>
    %102 = arith.select %99, %97, %101 : vector<256x128xi1>, vector<256x128xf32>
    %cst_30 = arith.constant 0.000000e+00 : f32
    %103 = vector.broadcast %cst_30 : f32 to vector<1x128xf32>
    %104 = vector.extract_strided_slice %102 {offsets = [0, 0], sizes = [255, 128], strides = [1, 1]} : vector<256x128xf32> to vector<255x128xf32>
    %105 = tpu.concatenate %103, %104 in 0 : vector<1x128xf32>, vector<255x128xf32> -> vector<256x128xf32>
    %cst_31 = arith.constant 0.000000e+00 : f32
    %106 = vector.broadcast %cst_31 : f32 to vector<256x128xf32>
    %107 = arith.select %12, %105, %106 : vector<256x128xi1>, vector<256x128xf32>
    %108 = arith.truncf %107 : vector<256x128xf32> to vector<256x128xbf16>
    %109 = arith.truncf %102 : vector<256x128xf32> to vector<256x128xbf16>
    %110 = vector.extract_strided_slice %102 {offsets = [1, 0], sizes = [255, 128], strides = [1, 1]} : vector<256x128xf32> to vector<255x128xf32>
    %cst_32 = arith.constant 0.000000e+00 : f32
    %111 = vector.broadcast %cst_32 : f32 to vector<1x128xf32>
    %112 = tpu.concatenate %110, %111 in 0 : vector<255x128xf32>, vector<1x128xf32> -> vector<256x128xf32>
    %cst_33 = arith.constant 0.000000e+00 : f32
    %113 = vector.broadcast %cst_33 : f32 to vector<256x128xf32>
    %114 = arith.select %14, %112, %113 : vector<256x128xi1>, vector<256x128xf32>
    %115 = arith.truncf %114 : vector<256x128xf32> to vector<256x128xbf16>
    %cst_34 = arith.constant 0.000000e+00 : bf16
    %116 = vector.broadcast %cst_34 : bf16 to vector<16x128xbf16>
    %cst_35 = arith.constant 0.000000e+00 : bf16
    %117 = vector.broadcast %cst_35 : bf16 to vector<16x128xbf16>
    %118 = tpu.concatenate %116, %108, %117 in 0 : vector<16x128xbf16>, vector<256x128xbf16>, vector<16x128xbf16> -> vector<288x128xbf16>
    %119 = tpu.concatenate %116, %109, %117 in 0 : vector<16x128xbf16>, vector<256x128xbf16>, vector<16x128xbf16> -> vector<288x128xbf16>
    %120 = tpu.concatenate %116, %115, %117 in 0 : vector<16x128xbf16>, vector<256x128xbf16>, vector<16x128xbf16> -> vector<288x128xbf16>
    %cst_36 = arith.constant 0.000000e+00 : f32
    %121 = vector.broadcast %cst_36 : f32 to vector<256x128xf32>
    %122 = vector.extract_strided_slice %118 {offsets = [0, 0], sizes = [256, 128], strides = [1, 1]} : vector<288x128xbf16> to vector<256x128xbf16>
    %123 = vector.extract_strided_slice %119 {offsets = [0, 0], sizes = [256, 128], strides = [1, 1]} : vector<288x128xbf16> to vector<256x128xbf16>
    %124 = vector.extract_strided_slice %120 {offsets = [0, 0], sizes = [256, 128], strides = [1, 1]} : vector<288x128xbf16> to vector<256x128xbf16>
    %125 = tpu.concatenate %122, %123, %124 in 1 : vector<256x128xbf16>, vector<256x128xbf16>, vector<256x128xbf16> -> vector<256x384xbf16>
    %c0_37 = arith.constant 0 : index
    %c0_38 = arith.constant 0 : index
    %126 = vector.load %arg4[%c0_37, %c0_38] : memref<1152x128xbf16, #tpu.memory_space<vmem>>, vector<384x128xbf16>
    %cst_39 = arith.constant dense<0.000000e+00> : vector<256x128xf32>
    %127 = tpu.matmul %125, %126, %cst_39 {dimension_numbers = #tpu.dot_dimension_numbers<[1], [0], [0], [1], [0, 0, 1, 1], [], []>} : vector<256x384xbf16>, vector<384x128xbf16>, vector<256x128xf32> -> vector<256x128xf32>
    %128 = arith.addf %121, %127 : vector<256x128xf32>
    %129 = vector.extract_strided_slice %118 {offsets = [16, 0], sizes = [256, 128], strides = [1, 1]} : vector<288x128xbf16> to vector<256x128xbf16>
    %130 = vector.extract_strided_slice %119 {offsets = [16, 0], sizes = [256, 128], strides = [1, 1]} : vector<288x128xbf16> to vector<256x128xbf16>
    %131 = vector.extract_strided_slice %120 {offsets = [16, 0], sizes = [256, 128], strides = [1, 1]} : vector<288x128xbf16> to vector<256x128xbf16>
    %132 = tpu.concatenate %129, %130, %131 in 1 : vector<256x128xbf16>, vector<256x128xbf16>, vector<256x128xbf16> -> vector<256x384xbf16>
    %c384 = arith.constant 384 : index
    %c0_40 = arith.constant 0 : index
    %133 = vector.load %arg4[%c384, %c0_40] : memref<1152x128xbf16, #tpu.memory_space<vmem>>, vector<384x128xbf16>
    %cst_41 = arith.constant dense<0.000000e+00> : vector<256x128xf32>
    %134 = tpu.matmul %132, %133, %cst_41 {dimension_numbers = #tpu.dot_dimension_numbers<[1], [0], [0], [1], [0, 0, 1, 1], [], []>} : vector<256x384xbf16>, vector<384x128xbf16>, vector<256x128xf32> -> vector<256x128xf32>
    %135 = arith.addf %128, %134 : vector<256x128xf32>
    %136 = vector.extract_strided_slice %118 {offsets = [32, 0], sizes = [256, 128], strides = [1, 1]} : vector<288x128xbf16> to vector<256x128xbf16>
    %137 = vector.extract_strided_slice %119 {offsets = [32, 0], sizes = [256, 128], strides = [1, 1]} : vector<288x128xbf16> to vector<256x128xbf16>
    %138 = vector.extract_strided_slice %120 {offsets = [32, 0], sizes = [256, 128], strides = [1, 1]} : vector<288x128xbf16> to vector<256x128xbf16>
    %139 = tpu.concatenate %136, %137, %138 in 1 : vector<256x128xbf16>, vector<256x128xbf16>, vector<256x128xbf16> -> vector<256x384xbf16>
    %c768 = arith.constant 768 : index
    %c0_42 = arith.constant 0 : index
    %140 = vector.load %arg4[%c768, %c0_42] : memref<1152x128xbf16, #tpu.memory_space<vmem>>, vector<384x128xbf16>
    %cst_43 = arith.constant dense<0.000000e+00> : vector<256x128xf32>
    %141 = tpu.matmul %139, %140, %cst_43 {dimension_numbers = #tpu.dot_dimension_numbers<[1], [0], [0], [1], [0, 0, 1, 1], [], []>} : vector<256x384xbf16>, vector<384x128xbf16>, vector<256x128xf32> -> vector<256x128xf32>
    %142 = arith.addf %135, %141 : vector<256x128xf32>
    %cst_44 = arith.constant dense<0.000000e+00> : vector<128xf32>
    %143 = vector.multi_reduction <add>, %142, %cst_44 [0] : vector<256x128xf32> to vector<128xf32>
    %144 = vector.shape_cast %143 : vector<128xf32> to vector<1x128xf32>
    %145 = arith.mulf %142, %142 : vector<256x128xf32>
    %cst_45 = arith.constant dense<0.000000e+00> : vector<128xf32>
    %146 = vector.multi_reduction <add>, %145, %cst_45 [0] : vector<256x128xf32> to vector<128xf32>
    %147 = vector.shape_cast %146 : vector<128xf32> to vector<1x128xf32>
    %cst_46 = arith.constant 3.906250e-03 : f32
    %148 = vector.broadcast %cst_46 : f32 to vector<1x128xf32>
    %149 = arith.mulf %144, %148 : vector<1x128xf32>
    %cst_47 = arith.constant 3.906250e-03 : f32
    %150 = vector.broadcast %cst_47 : f32 to vector<1x128xf32>
    %151 = arith.mulf %147, %150 : vector<1x128xf32>
    %152 = arith.mulf %149, %149 : vector<1x128xf32>
    %153 = arith.subf %151, %152 : vector<1x128xf32>
    %cst_48 = arith.constant 0.000000e+00 : f32
    %154 = vector.broadcast %cst_48 : f32 to vector<1x128xf32>
    %155 = arith.maximumf %153, %154 : vector<1x128xf32>
    %cst_49 = arith.constant 9.99999974E-6 : f32
    %156 = vector.broadcast %cst_49 : f32 to vector<1x128xf32>
    %157 = arith.addf %155, %156 : vector<1x128xf32>
    %158 = math.rsqrt %157 : vector<1x128xf32>
    %159 = arith.mulf %158, %7 : vector<1x128xf32>
    %160 = arith.mulf %149, %159 : vector<1x128xf32>
    %161 = arith.subf %8, %160 : vector<1x128xf32>
    %162 = vector.broadcast %159 : vector<1x128xf32> to vector<256x128xf32>
    %163 = arith.mulf %142, %162 : vector<256x128xf32>
    %164 = vector.broadcast %161 : vector<1x128xf32> to vector<256x128xf32>
    %165 = arith.addf %163, %164 : vector<256x128xf32>
    %166 = arith.addf %165, %1 : vector<256x128xf32>
    %c0_50 = arith.constant 0 : index
    %c0_51 = arith.constant 0 : index
    %c0_52 = arith.constant 0 : index
    %167 = vector.load %arg6[%c0_50, %c0_51, %c0_52] : memref<1x256x128xf32, #tpu.memory_space<vmem>>, vector<1x256x128xf32>
    %168 = vector.shape_cast %167 : vector<1x256x128xf32> to vector<256x128xf32>
    %169 = vector.shape_cast %166 : vector<256x128xf32> to vector<1x256x128xf32>
    tpu.vector_store %arg6[%c0_50, %c0_51, %c0_52], %169 {strides = array<i32>} : memref<1x256x128xf32, #tpu.memory_space<vmem>>, vector<1x256x128xf32>,
    return
  }
  func.func @transform_0(%arg0: i32) -> (i32, i32, i32) {
    %c0_i32 = arith.constant 0 : i32
    %c0_i32_0 = arith.constant 0 : i32
    %c0_i32_1 = arith.constant 0 : i32
    return %arg0, %c0_i32, %c0_i32_0 : i32, i32, i32
  }
  func.func @transform_1(%arg0: i32) -> (i32, i32) {
    %c0_i32 = arith.constant 0 : i32
    %c0_i32_0 = arith.constant 0 : i32
    %c0_i32_1 = arith.constant 0 : i32
    return %c0_i32, %c0_i32_0 : i32, i32
  }
  func.func @transform_2(%arg0: i32) -> (i32, i32) {
    %c0_i32 = arith.constant 0 : i32
    %c0_i32_0 = arith.constant 0 : i32
    %c0_i32_1 = arith.constant 0 : i32
    return %c0_i32, %c0_i32_0 : i32, i32
  }
  func.func @transform_3(%arg0: i32) -> (i32, i32) {
    %c0_i32 = arith.constant 0 : i32
    %c0_i32_0 = arith.constant 0 : i32
    %c0_i32_1 = arith.constant 0 : i32
    return %c0_i32, %c0_i32_0 : i32, i32
  }
  func.func @transform_4(%arg0: i32) -> (i32, i32) {
    %c0_i32 = arith.constant 0 : i32
    %c0_i32_0 = arith.constant 0 : i32
    %c0_i32_1 = arith.constant 0 : i32
    return %c0_i32, %c0_i32_0 : i32, i32
  }
  func.func @transform_5(%arg0: i32) -> (i32, i32, i32) {
    %c0_i32 = arith.constant 0 : i32
    %c0_i32_0 = arith.constant 0 : i32
    %c0_i32_1 = arith.constant 0 : i32
    return %arg0, %c0_i32, %c0_i32_0 : i32, i32, i32
  }
}

</mosaic_0001>

<llo_original>
// kernel: tpu_custom_call.1
$region0: #{tpu_custom_call.1}
  #allocation0 [shape = 'u32[]', space=smem, size = 0x4, offset = 0x4, fixed_abs, tag = 'smem constant byte address 0x4 - core index']
  #allocation1 [shape = 'u32[144,128]{1,0:T(1,128)}', space=vmem, size = 0x12000, scoped, tag = 'internal scratch']
  %s0 = inlined_call_operand.hbm [shape: f32[2,256,128], index: 0, kind: input, shape index: {}]
  %s1 = inlined_call_operand.vmem [shape: s32[256,1], index: 1, kind: input, shape index: {}]
  %s2 = inlined_call_operand.hbm [shape: bf16[2048,128], index: 2, kind: input, shape index: {}]
  %s3 = inlined_call_operand.hbm [shape: bf16[1152,128], index: 3, kind: input, shape index: {}]
  %s4 = inlined_call_operand.vmem [shape: f32[5,128], index: 4, kind: input, shape index: {}]
  %s5 = inlined_call_operand.hbm [shape: f32[2,256,128], index: 5, kind: output, shape index: {}]
  %s6 = sld [smem:[#allocation0]]
  $region65: #{tpu_custom_call.1} parent=0
    _
  %s8 = ssub.s32 1, %s6
  %s9 = scalar_select 0, %s8, %s6
  $region1: #{tpu_custom_call.1} parent=0
    #allocation2 [shape = 'u8[262144]{0}', space=vmem, size = 0x40000, scoped, tag = 'input window, operand 0']
    #allocation3 [shape = 's32[2]{0}', space=sflag, size = 0x8, scoped, tag = 'scoped memory for tpu_custom_call.1']
    #allocation4 [shape = 's32[2]{0}', space=sflag, size = 0x8, scoped, tag = 'scoped memory for tpu_custom_call.1']
    #allocation5 [shape = 'u8[524288]{0}', space=vmem, size = 0x80000, scoped, tag = 'input window, operand 2, single buffered']
    #allocation6 [shape = 's32[1]{0}', space=sflag, size = 0x4, scoped, tag = 'scoped memory for tpu_custom_call.1']
    #allocation7 [shape = 'u8[294912]{0}', space=vmem, size = 0x48000, scoped, tag = 'input window, operand 3, single buffered']
    #allocation8 [shape = 'u8[262144]{0}', space=vmem, size = 0x40000, scoped, tag = 'output window, operand 0']
    %10 = vsyncpa [#allocation3], 0
    %s11 = scalar_lea.sflag [#allocation3], 1
    %12 = vsyncpa %s11, 0
    %13 = vsyncpa [#allocation6], 0
    %14 = vsyncpa [#allocation4], 0
    %s15 = scalar_lea.sflag [#allocation4], 1
    %16 = vsyncpa %s15, 0
    loop: start=0, step=1, limit=4
    $region2: #{tpu_custom_call.1} parent=1 // loop_pre_header
      _
    $region3: #{tpu_custom_call.1} parent=1 // loop_header
      %s18 = sphi 0, %s22
      %p19 = scmp.ge.s32.totalorder %s18, 4
      %s28 = sphi 0, %s30
      %s31 = sphi 0, %s28
      %s32 = sphi 0, %s31
      %s48 = sphi 0, %s32
      %s52 = sphi 0, %s52
      %s54 = sphi 0, %s52
      %s55 = sphi 0, %s54
      %s69 = sphi 0, %s55
      %s73 = sphi 0, %s73
      %s75 = sphi 0, %s73
      %s76 = sphi 0, %s75
      %s90 = sphi 0, %s76
      %s94 = sphi 0, %s94
      %s96 = sphi 0, %s94
      %s97 = sphi 0, %s96
      %s111 = sphi 0, %s97
      %s115 = sphi 0, %s115
      %s117 = sphi 0, %s115
      %s118 = sphi 0, %s117
      %s132 = sphi 0, %s118
      %s138 = sphi 0, %s140
      %s141 = sphi 0, %s138
      %s142 = sphi 0, %s141
      %s158 = sphi 0, %s142
    $region4: #{tpu_custom_call.1} parent=1 // loop_header_branch
      %21 = sbr.rel (%p19) target = $region8
    $region5: #{tpu_custom_call.1} parent=1 // loop_body
      %s23 = ssub.s32 %s18, 1
      %s24 = ssub.s32 %s18, 2
      %s25 = sadd.s32 %s18, 1
      %s26 = ssub.s32 %s18, %s25
      %p27 = scmp.eq.s32.totalorder %s26, 0
      %s29 = sadd.s32 %s28, 1
      %s30 = scalar_select %p27, %s28, %s29
      %p33 = pneg %p27
      %p34 = scmp.eq.s32.totalorder %s18, 1
      %p35 = por %p33, %p34
      %p36 = scmp.ne.s32.totalorder %s28, %s31
      %p37 = scmp.eq.s32.totalorder %s18, 0
      %p38 = por %p36, %p37
      %p39 = scmp.ne.s32.totalorder %s28, %s31
      %p40 = scmp.eq.s32.totalorder %s23, 1
      %p41 = por %p39, %p40
      %p42 = scmp.ne.s32.totalorder %s31, %s32
      %p43 = scmp.eq.s32.totalorder %s23, 0
      %p44 = por %p42, %p43
      %p45 = scmp.ne.s32.totalorder %s31, %s32
      %p46 = scmp.eq.s32.totalorder %s24, 1
      %p47 = por %p45, %p46
      %p49 = scmp.ne.s32.totalorder %s32, %s48
      %p50 = scmp.eq.s32.totalorder %s24, 0
      %p51 = por %p49, %p50
      %s53 = sadd.s32 %s52, 1
      %p56 = scmp.eq.s32.totalorder %s18, 1
      %p57 = scmp.ne.s32.totalorder %s52, %s54
      %p58 = scmp.eq.s32.totalorder %s18, 0
      %p59 = por %p57, %p58
      %p60 = scmp.ne.s32.totalorder %s52, %s54
      %p61 = scmp.eq.s32.totalorder %s23, 1
      %p62 = por %p60, %p61
      %p63 = scmp.ne.s32.totalorder %s54, %s55
      %p64 = scmp.eq.s32.totalorder %s23, 0
      %p65 = por %p63, %p64
      %p66 = scmp.ne.s32.totalorder %s54, %s55
      %p67 = scmp.eq.s32.totalorder %s24, 1
      %p68 = por %p66, %p67
      %p70 = scmp.ne.s32.totalorder %s55, %s69
      %p71 = scmp.eq.s32.totalorder %s24, 0
      %p72 = por %p70, %p71
      %s74 = sadd.s32 %s73, 1
      %p77 = scmp.eq.s32.totalorder %s18, 1
      %p78 = scmp.ne.s32.totalorder %s73, %s75
      %p79 = scmp.eq.s32.totalorder %s18, 0
      %p80 = por %p78, %p79
      %p81 = scmp.ne.s32.totalorder %s73, %s75
      %p82 = scmp.eq.s32.totalorder %s23, 1
      %p83 = por %p81, %p82
      %p84 = scmp.ne.s32.totalorder %s75, %s76
      %p85 = scmp.eq.s32.totalorder %s23, 0
      %p86 = por %p84, %p85
      %p87 = scmp.ne.s32.totalorder %s75, %s76
      %p88 = scmp.eq.s32.totalorder %s24, 1
      %p89 = por %p87, %p88
      %p91 = scmp.ne.s32.totalorder %s76, %s90
      %p92 = scmp.eq.s32.totalorder %s24, 0
      %p93 = por %p91, %p92
      %s95 = sadd.s32 %s94, 1
      %p98 = scmp.eq.s32.totalorder %s18, 1
      %p99 = scmp.ne.s32.totalorder %s94, %s96
      %p100 = scmp.eq.s32.totalorder %s18, 0
      %p101 = por %p99, %p100
      %p102 = scmp.ne.s32.totalorder %s94, %s96
      %p103 = scmp.eq.s32.totalorder %s23, 1
      %p104 = por %p102, %p103
      %p105 = scmp.ne.s32.totalorder %s96, %s97
      %p106 = scmp.eq.s32.totalorder %s23, 0
      %p107 = por %p105, %p106
      %p108 = scmp.ne.s32.totalorder %s96, %s97
      %p109 = scmp.eq.s32.totalorder %s24, 1
      %p110 = por %p108, %p109
      %p112 = scmp.ne.s32.totalorder %s97, %s111
      %p113 = scmp.eq.s32.totalorder %s24, 0
      %p114 = por %p112, %p113
      %s116 = sadd.s32 %s115, 1
      %p119 = scmp.eq.s32.totalorder %s18, 1
      %p120 = scmp.ne.s32.totalorder %s115, %s117
      %p121 = scmp.eq.s32.totalorder %s18, 0
      %p122 = por %p120, %p121
      %p123 = scmp.ne.s32.totalorder %s115, %s117
      %p124 = scmp.eq.s32.totalorder %s23, 1
      %p125 = por %p123, %p124
      %p126 = scmp.ne.s32.totalorder %s117, %s118
      %p127 = scmp.eq.s32.totalorder %s23, 0
      %p128 = por %p126, %p127
      %p129 = scmp.ne.s32.totalorder %s117, %s118
      %p130 = scmp.eq.s32.totalorder %s24, 1
      %p131 = por %p129, %p130
      %p133 = scmp.ne.s32.totalorder %s118, %s132
      %p134 = scmp.eq.s32.totalorder %s24, 0
      %p135 = por %p133, %p134
      %s136 = ssub.s32 %s18, %s25
      %p137 = scmp.eq.s32.totalorder %s136, 0
      %s139 = sadd.s32 %s138, 1
      %s140 = scalar_select %p137, %s138, %s139
      %p143 = pneg %p137
      %p144 = scmp.eq.s32.totalorder %s18, 1
      %p145 = por %p143, %p144
      %p146 = scmp.ne.s32.totalorder %s138, %s141
      %p147 = scmp.eq.s32.totalorder %s18, 0
      %p148 = por %p146, %p147
      %p149 = scmp.ne.s32.totalorder %s138, %s141
      %p150 = scmp.eq.s32.totalorder %s23, 1
      %p151 = por %p149, %p150
      %p152 = scmp.ne.s32.totalorder %s141, %s142
      %p153 = scmp.eq.s32.totalorder %s23, 0
      %p154 = por %p152, %p153
      %p155 = scmp.ne.s32.totalorder %s141, %s142
      %p156 = scmp.eq.s32.totalorder %s24, 1
      %p157 = por %p155, %p156
      %p159 = scmp.ne.s32.totalorder %s142, %s158
      %p160 = scmp.eq.s32.totalorder %s24, 0
      %p161 = por %p159, %p160
      %p162 = scmp.le.s32.totalorder 1, %s18
      %p163 = scmp.lt.s32.totalorder %s18, 3
      %p164 = pnand %p162, %p163
      %p165 = pneg %p164
      // Predicated region
      $region9: #{tpu_custom_call.1} parent=5 // pred_check
        _
      $region10: #{tpu_custom_call.1} parent=5 // pred_check_branch
        %167 = sbr.rel (%p164) target = $region12
      $region11: #{tpu_custom_call.1} parent=5 // pred_region
        %s168 = ssub.s32 %s18, 1
        // Predicated region
        $region13: #{tpu_custom_call.1} parent=11 // pred_check
          %p169 = pneg %p65
        $region14: #{tpu_custom_call.1} parent=11 // pred_check_branch
          %171 = sbr.rel (%p169) target = $region16
        $region15: #{tpu_custom_call.1} parent=11 // pred_region
          _
        $region16: #{tpu_custom_call.1} parent=11 // pred_fallthru
          _
        // Predicated region
        $region17: #{tpu_custom_call.1} parent=11 // pred_check
          %p172 = pneg %p86
        $region18: #{tpu_custom_call.1} parent=11 // pred_check_branch
          %174 = sbr.rel (%p172) target = $region20
        $region19: #{tpu_custom_call.1} parent=11 // pred_region
          %s176 = ssub.s32 16384, 16384
          %177 = vsyncadd [#allocation6], %s176
          %s178 = sshll.u32 [#allocation5], 4
          %s179 = int_to_ptr.vmem [resolvable:$true] %s178
          %184 = dma.hbm_to_vmem [thread:$0]  %s2, 16384, %s179, [#allocation6], 64, 64, 4
        $region20: #{tpu_custom_call.1} parent=11 // pred_fallthru
          _
        // Predicated region
        $region21: #{tpu_custom_call.1} parent=11 // pred_check
          %p185 = pneg %p107
        $region22: #{tpu_custom_call.1} parent=11 // pred_check_branch
          %187 = sbr.rel (%p185) target = $region24
        $region23: #{tpu_custom_call.1} parent=11 // pred_region
          %s189 = ssub.s32 9216, 9216
          %190 = vsyncadd [#allocation6], %s189
          %s191 = sshll.u32 [#allocation7], 4
          %s192 = int_to_ptr.vmem [resolvable:$true] %s191
          %197 = dma.hbm_to_vmem [thread:$0]  %s3, 9216, %s192, [#allocation6], 64, 64, 4
        $region24: #{tpu_custom_call.1} parent=11 // pred_fallthru
          _
        // Predicated region
        $region25: #{tpu_custom_call.1} parent=11 // pred_check
          %p198 = pneg %p128
        $region26: #{tpu_custom_call.1} parent=11 // pred_check_branch
          %200 = sbr.rel (%p198) target = $region28
        $region27: #{tpu_custom_call.1} parent=11 // pred_region
          _
        $region28: #{tpu_custom_call.1} parent=11 // pred_fallthru
          _
      $region12: #{tpu_custom_call.1} parent=5 // pred_fallthru
        _
      %p201 = scmp.lt.s32.totalorder %s18, 2
      // Predicated region
      $region29: #{tpu_custom_call.1} parent=5 // pred_check
        %p202 = pneg %p201
      $region30: #{tpu_custom_call.1} parent=5 // pred_check_branch
        %204 = sbr.rel (%p202) target = $region32
      $region31: #{tpu_custom_call.1} parent=5 // pred_region
        // Predicated region
        $region33: #{tpu_custom_call.1} parent=31 // pred_check
          %p205 = pneg %p38
        $region34: #{tpu_custom_call.1} parent=31 // pred_check_branch
          %207 = sbr.rel (%p205) target = $region36
        $region35: #{tpu_custom_call.1} parent=31 // pred_region
          %s208 = sand.u32 %s28, 1
          %s209 = scalar_lea.sflag [#allocation3], %s208
          %s210 = sand.u32 %s28, 1
          %s211 = smul.addr %s210, 256
          %s212 = scalar_lea.vmem [#allocation2], %s211
          %s214 = ssub.s32 4096, 4096
          %215 = vsyncadd %s209, %s214
          %s216 = smul.addr %s18, 32
          %s217 = smul.addr %s216, 128
          %s218 = scalar_lea.hbm %s0, %s217
          %s219 = sshll.u32 %s212, 4
          %s220 = int_to_ptr.vmem [resolvable:$true] %s219
          %225 = dma.hbm_to_vmem [thread:$0]  %s218, 4096, %s220, %s209, 128, 128, 8
        $region36: #{tpu_custom_call.1} parent=31 // pred_fallthru
          _
      $region32: #{tpu_custom_call.1} parent=5 // pred_fallthru
        _
      %p226 = scmp.le.s32.totalorder 1, %s18
      %p227 = scmp.lt.s32.totalorder %s18, 3
      %p228 = pnand %p226, %p227
      %p229 = pneg %p228
      // Predicated region
      $region37: #{tpu_custom_call.1} parent=5 // pred_check
        _
      $region38: #{tpu_custom_call.1} parent=5 // pred_check_branch
        %231 = sbr.rel (%p228) target = $region40
      $region39: #{tpu_custom_call.1} parent=5 // pred_region
        %s232 = ssub.s32 %s18, 1
        %s233 = sand.u32 %s31, 1
        %s234 = scalar_lea.sflag [#allocation3], %s233
        %s235 = sand.u32 %s31, 1
        %s236 = smul.addr %s235, 256
        %s237 = scalar_lea.vmem [#allocation2], %s236
        // Predicated region
        $region41: #{tpu_custom_call.1} parent=39 // pred_check
          %p238 = pneg %p44
        $region42: #{tpu_custom_call.1} parent=39 // pred_check_branch
          %240 = sbr.rel (%p238) target = $region44
        $region43: #{tpu_custom_call.1} parent=39 // pred_region
          %241 = dma.done %s234, 4096
        $region44: #{tpu_custom_call.1} parent=39 // pred_fallthru
          _
        // Predicated region
        $region45: #{tpu_custom_call.1} parent=39 // pred_check
          %p242 = pneg %p86
        $region46: #{tpu_custom_call.1} parent=39 // pred_check_branch
          %244 = sbr.rel (%p242) target = $region48
        $region47: #{tpu_custom_call.1} parent=39 // pred_region
          %245 = dma.done [#allocation6], 16384
        $region48: #{tpu_custom_call.1} parent=39 // pred_fallthru
          _
        // Predicated region
        $region49: #{tpu_custom_call.1} parent=39 // pred_check
          %p246 = pneg %p107
        $region50: #{tpu_custom_call.1} parent=39 // pred_check_branch
          %248 = sbr.rel (%p246) target = $region52
        $region51: #{tpu_custom_call.1} parent=39 // pred_region
          %249 = dma.done [#allocation6], 9216
        $region52: #{tpu_custom_call.1} parent=39 // pred_fallthru
          _
        %s250 = sand.u32 %s31, 1
        %s251 = scalar_lea.sflag [#allocation3], %s250
        %s252 = sand.u32 %s31, 1
        %s253 = smul.addr %s252, 256
        %s254 = scalar_lea.vmem [#allocation2], %s253
        %p255 = pneg %p44
        %p256 = pneg %p41
        %p257 = pneg %p65
        %p258 = pneg %p62
        %p259 = pneg %p86
        %p260 = pneg %p83
        %p261 = pneg %p107
        %p262 = pneg %p104
        %p263 = pneg %p128
        %p264 = pneg %p125
        %p265 = pneg %p154
        %p266 = pneg %p151
        %s267 = sand.u32 %s141, 1
        %s268 = scalar_lea.sflag [#allocation4], %s267
        %s269 = sand.u32 %s141, 1
        %s270 = smul.addr %s269, 256
        %s271 = scalar_lea.vmem [#allocation8], %s270
        %v273 = vld [vmem:[%s237] sm:$0xff]
        %v274 = vld [vmem:[%s237 + $0x8] sm:$0xff]
        %v275 = vld [vmem:[%s237 + $0x10] sm:$0xff]
        %v276 = vld [vmem:[%s237 + $0x18] sm:$0xff]
        %v277 = vld [vmem:[%s237 + $0x20] sm:$0xff]
        %v278 = vld [vmem:[%s237 + $0x28] sm:$0xff]
        %v279 = vld [vmem:[%s237 + $0x30] sm:$0xff]
        %v280 = vld [vmem:[%s237 + $0x38] sm:$0xff]
        %v281 = vld [vmem:[%s237 + $0x40] sm:$0xff]
        %v282 = vld [vmem:[%s237 + $0x48] sm:$0xff]
        %v283 = vld [vmem:[%s237 + $0x50] sm:$0xff]
        %v284 = vld [vmem:[%s237 + $0x58] sm:$0xff]
        %v285 = vld [vmem:[%s237 + $0x60] sm:$0xff]
        %v286 = vld [vmem:[%s237 + $0x68] sm:$0xff]
        %v287 = vld [vmem:[%s237 + $0x70] sm:$0xff]
        %v288 = vld [vmem:[%s237 + $0x78] sm:$0xff]
        %v289 = vld [vmem:[%s237 + $0x80] sm:$0xff]
        %v290 = vld [vmem:[%s237 + $0x88] sm:$0xff]
        %v291 = vld [vmem:[%s237 + $0x90] sm:$0xff]
        %v292 = vld [vmem:[%s237 + $0x98] sm:$0xff]
        %v293 = vld [vmem:[%s237 + $0xa0] sm:$0xff]
        %v294 = vld [vmem:[%s237 + $0xa8] sm:$0xff]
        %v295 = vld [vmem:[%s237 + $0xb0] sm:$0xff]
        %v296 = vld [vmem:[%s237 + $0xb8] sm:$0xff]
        %v297 = vld [vmem:[%s237 + $0xc0] sm:$0xff]
        %v298 = vld [vmem:[%s237 + $0xc8] sm:$0xff]
        %v299 = vld [vmem:[%s237 + $0xd0] sm:$0xff]
        %v300 = vld [vmem:[%s237 + $0xd8] sm:$0xff]
        %v301 = vld [vmem:[%s237 + $0xe0] sm:$0xff]
        %v302 = vld [vmem:[%s237 + $0xe8] sm:$0xff]
        %v303 = vld [vmem:[%s237 + $0xf0] sm:$0xff]
        %v304 = vld [vmem:[%s237 + $0xf8] sm:$0xff]
        %v305 = vld [vmem:[%s1] sm:$0xff]
        %v306 = vld [vmem:[%s1 + $0x8] sm:$0xff]
        %v307 = vld [vmem:[%s1 + $0x10] sm:$0xff]
        %v308 = vld [vmem:[%s1 + $0x18] sm:$0xff]
        %v309 = vld [vmem:[%s1 + $0x20] sm:$0xff]
        %v310 = vld [vmem:[%s1 + $0x28] sm:$0xff]
        %v311 = vld [vmem:[%s1 + $0x30] sm:$0xff]
        %v312 = vld [vmem:[%s1 + $0x38] sm:$0xff]
        %v313 = vld [vmem:[%s1 + $0x40] sm:$0xff]
        %v314 = vld [vmem:[%s1 + $0x48] sm:$0xff]
        %v315 = vld [vmem:[%s1 + $0x50] sm:$0xff]
        %v316 = vld [vmem:[%s1 + $0x58] sm:$0xff]
        %v317 = vld [vmem:[%s1 + $0x60] sm:$0xff]
        %v318 = vld [vmem:[%s1 + $0x68] sm:$0xff]
        %v319 = vld [vmem:[%s1 + $0x70] sm:$0xff]
        %v320 = vld [vmem:[%s1 + $0x78] sm:$0xff]
        %v321 = vld [vmem:[%s1 + $0x80] sm:$0xff]
        %v322 = vld [vmem:[%s1 + $0x88] sm:$0xff]
        %v323 = vld [vmem:[%s1 + $0x90] sm:$0xff]
        %v324 = vld [vmem:[%s1 + $0x98] sm:$0xff]
        %v325 = vld [vmem:[%s1 + $0xa0] sm:$0xff]
        %v326 = vld [vmem:[%s1 + $0xa8] sm:$0xff]
        %v327 = vld [vmem:[%s1 + $0xb0] sm:$0xff]
        %v328 = vld [vmem:[%s1 + $0xb8] sm:$0xff]
        %v329 = vld [vmem:[%s1 + $0xc0] sm:$0xff]
        %v330 = vld [vmem:[%s1 + $0xc8] sm:$0xff]
        %v331 = vld [vmem:[%s1 + $0xd0] sm:$0xff]
        %v332 = vld [vmem:[%s1 + $0xd8] sm:$0xff]
        %v333 = vld [vmem:[%s1 + $0xe0] sm:$0xff]
        %v334 = vld [vmem:[%s1 + $0xe8] sm:$0xff]
        %v335 = vld [vmem:[%s1 + $0xf0] sm:$0xff]
        %v336 = vld [vmem:[%s1 + $0xf8] sm:$0xff]
        %v337 = vld [vmem:[%s4] sm:$0x1f]
        %338 = vset.pattern.permute.xlu0 0
        %339 = vperm.xlu0 %338, %v305
        %v340 = vpop.permute.xlu0 %339
        %341 = vset.pattern.permute.xlu0 0
        %342 = vperm.xlu0 %341, %v306
        %v343 = vpop.permute.xlu0 %342
        %344 = vset.pattern.permute.xlu0 0
        %345 = vperm.xlu0 %344, %v307
        %v346 = vpop.permute.xlu0 %345
        %347 = vset.pattern.permute.xlu0 0
        %348 = vperm.xlu0 %347, %v308
        %v349 = vpop.permute.xlu0 %348
        %350 = vset.pattern.permute.xlu0 0
        %351 = vperm.xlu0 %350, %v309
        %v352 = vpop.permute.xlu0 %351
        %353 = vset.pattern.permute.xlu0 0
        %354 = vperm.xlu0 %353, %v310
        %v355 = vpop.permute.xlu0 %354
        %356 = vset.pattern.permute.xlu0 0
        %357 = vperm.xlu0 %356, %v311
        %v358 = vpop.permute.xlu0 %357
        %359 = vset.pattern.permute.xlu0 0
        %360 = vperm.xlu0 %359, %v312
        %v361 = vpop.permute.xlu0 %360
        %362 = vset.pattern.permute.xlu0 0
        %363 = vperm.xlu0 %362, %v313
        %v364 = vpop.permute.xlu0 %363
        %365 = vset.pattern.permute.xlu0 0
        %366 = vperm.xlu0 %365, %v314
        %v367 = vpop.permute.xlu0 %366
        %368 = vset.pattern.permute.xlu0 0
        %369 = vperm.xlu0 %368, %v315
        %v370 = vpop.permute.xlu0 %369
        %371 = vset.pattern.permute.xlu0 0
        %372 = vperm.xlu0 %371, %v316
        %v373 = vpop.permute.xlu0 %372
        %374 = vset.pattern.permute.xlu0 0
        %375 = vperm.xlu0 %374, %v317
        %v376 = vpop.permute.xlu0 %375
        %377 = vset.pattern.permute.xlu0 0
        %378 = vperm.xlu0 %377, %v318
        %v379 = vpop.permute.xlu0 %378
        %380 = vset.pattern.permute.xlu0 0
        %381 = vperm.xlu0 %380, %v319
        %v382 = vpop.permute.xlu0 %381
        %383 = vset.pattern.permute.xlu0 0
        %384 = vperm.xlu0 %383, %v320
        %v385 = vpop.permute.xlu0 %384
        %386 = vset.pattern.permute.xlu0 0
        %387 = vperm.xlu0 %386, %v321
        %v388 = vpop.permute.xlu0 %387
        %389 = vset.pattern.permute.xlu0 0
        %390 = vperm.xlu0 %389, %v322
        %v391 = vpop.permute.xlu0 %390
        %392 = vset.pattern.permute.xlu0 0
        %393 = vperm.xlu0 %392, %v323
        %v394 = vpop.permute.xlu0 %393
        %395 = vset.pattern.permute.xlu0 0
        %396 = vperm.xlu0 %395, %v324
        %v397 = vpop.permute.xlu0 %396
        %398 = vset.pattern.permute.xlu0 0
        %399 = vperm.xlu0 %398, %v325
        %v400 = vpop.permute.xlu0 %399
        %401 = vset.pattern.permute.xlu0 0
        %402 = vperm.xlu0 %401, %v326
        %v403 = vpop.permute.xlu0 %402
        %404 = vset.pattern.permute.xlu0 0
        %405 = vperm.xlu0 %404, %v327
        %v406 = vpop.permute.xlu0 %405
        %407 = vset.pattern.permute.xlu0 0
        %408 = vperm.xlu0 %407, %v328
        %v409 = vpop.permute.xlu0 %408
        %410 = vset.pattern.permute.xlu0 0
        %411 = vperm.xlu0 %410, %v329
        %v412 = vpop.permute.xlu0 %411
        %413 = vset.pattern.permute.xlu0 0
        %414 = vperm.xlu0 %413, %v330
        %v415 = vpop.permute.xlu0 %414
        %416 = vset.pattern.permute.xlu0 0
        %417 = vperm.xlu0 %416, %v331
        %v418 = vpop.permute.xlu0 %417
        %419 = vset.pattern.permute.xlu0 0
        %420 = vperm.xlu0 %419, %v332
        %v421 = vpop.permute.xlu0 %420
        %422 = vset.pattern.permute.xlu0 0
        %423 = vperm.xlu0 %422, %v333
        %v424 = vpop.permute.xlu0 %423
        %425 = vset.pattern.permute.xlu0 0
        %426 = vperm.xlu0 %425, %v334
        %v427 = vpop.permute.xlu0 %426
        %428 = vset.pattern.permute.xlu0 0
        %429 = vperm.xlu0 %428, %v335
        %v430 = vpop.permute.xlu0 %429
        %431 = vset.pattern.permute.xlu0 0
        %432 = vperm.xlu0 %431, %v336
        %v433 = vpop.permute.xlu0 %432
        %vm434 = vcmp.ge.s32.totalorder %v340, 1
        %vm435 = vcmp.ge.s32.totalorder %v343, 1
        %vm436 = vcmp.ge.s32.totalorder %v346, 1
        %vm437 = vcmp.ge.s32.totalorder %v349, 1
        %vm438 = vcmp.ge.s32.totalorder %v352, 1
        %vm439 = vcmp.ge.s32.totalorder %v355, 1
        %vm440 = vcmp.ge.s32.totalorder %v358, 1
        %vm441 = vcmp.ge.s32.totalorder %v361, 1
        %vm442 = vcmp.ge.s32.totalorder %v364, 1
        %vm443 = vcmp.ge.s32.totalorder %v367, 1
        %vm444 = vcmp.ge.s32.totalorder %v370, 1
        %vm445 = vcmp.ge.s32.totalorder %v373, 1
        %vm446 = vcmp.ge.s32.totalorder %v376, 1
        %vm447 = vcmp.ge.s32.totalorder %v379, 1
        %vm448 = vcmp.ge.s32.totalorder %v382, 1
        %vm449 = vcmp.ge.s32.totalorder %v385, 1
        %vm450 = vcmp.ge.s32.totalorder %v388, 1
        %vm451 = vcmp.ge.s32.totalorder %v391, 1
        %vm452 = vcmp.ge.s32.totalorder %v394, 1
        %vm453 = vcmp.ge.s32.totalorder %v397, 1
        %vm454 = vcmp.ge.s32.totalorder %v400, 1
        %vm455 = vcmp.ge.s32.totalorder %v403, 1
        %vm456 = vcmp.ge.s32.totalorder %v406, 1
        %vm457 = vcmp.ge.s32.totalorder %v409, 1
        %vm458 = vcmp.ge.s32.totalorder %v412, 1
        %vm459 = vcmp.ge.s32.totalorder %v415, 1
        %vm460 = vcmp.ge.s32.totalorder %v418, 1
        %vm461 = vcmp.ge.s32.totalorder %v421, 1
        %vm462 = vcmp.ge.s32.totalorder %v424, 1
        %vm463 = vcmp.ge.s32.totalorder %v427, 1
        %vm464 = vcmp.ge.s32.totalorder %v430, 1
        %vm465 = vcmp.ge.s32.totalorder %v433, 1
        %vm466 = vcmp.lt.s32.totalorder %v340, 15
        %vm467 = vcmp.lt.s32.totalorder %v343, 15
        %vm468 = vcmp.lt.s32.totalorder %v346, 15
        %vm469 = vcmp.lt.s32.totalorder %v349, 15
        %vm470 = vcmp.lt.s32.totalorder %v352, 15
        %vm471 = vcmp.lt.s32.totalorder %v355, 15
        %vm472 = vcmp.lt.s32.totalorder %v358, 15
        %vm473 = vcmp.lt.s32.totalorder %v361, 15
        %vm474 = vcmp.lt.s32.totalorder %v364, 15
        %vm475 = vcmp.lt.s32.totalorder %v367, 15
        %vm476 = vcmp.lt.s32.totalorder %v370, 15
        %vm477 = vcmp.lt.s32.totalorder %v373, 15
        %vm478 = vcmp.lt.s32.totalorder %v376, 15
        %vm479 = vcmp.lt.s32.totalorder %v379, 15
        %vm480 = vcmp.lt.s32.totalorder %v382, 15
        %vm481 = vcmp.lt.s32.totalorder %v385, 15
        %vm482 = vcmp.lt.s32.totalorder %v388, 15
        %vm483 = vcmp.lt.s32.totalorder %v391, 15
        %vm484 = vcmp.lt.s32.totalorder %v394, 15
        %vm485 = vcmp.lt.s32.totalorder %v397, 15
        %vm486 = vcmp.lt.s32.totalorder %v400, 15
        %vm487 = vcmp.lt.s32.totalorder %v403, 15
        %vm488 = vcmp.lt.s32.totalorder %v406, 15
        %vm489 = vcmp.lt.s32.totalorder %v409, 15
        %vm490 = vcmp.lt.s32.totalorder %v412, 15
        %vm491 = vcmp.lt.s32.totalorder %v415, 15
        %vm492 = vcmp.lt.s32.totalorder %v418, 15
        %vm493 = vcmp.lt.s32.totalorder %v421, 15
        %vm494 = vcmp.lt.s32.totalorder %v424, 15
        %vm495 = vcmp.lt.s32.totalorder %v427, 15
        %vm496 = vcmp.lt.s32.totalorder %v430, 15
        %vm497 = vcmp.lt.s32.totalorder %v433, 15
        %vm498 = vcmp.lt.s32.totalorder %v340, 14
        %vm499 = vcmp.lt.s32.totalorder %v343, 14
        %vm500 = vcmp.lt.s32.totalorder %v346, 14
        %vm501 = vcmp.lt.s32.totalorder %v349, 14
        %vm502 = vcmp.lt.s32.totalorder %v352, 14
        %vm503 = vcmp.lt.s32.totalorder %v355, 14
        %vm504 = vcmp.lt.s32.totalorder %v358, 14
        %vm505 = vcmp.lt.s32.totalorder %v361, 14
        %vm506 = vcmp.lt.s32.totalorder %v364, 14
        %vm507 = vcmp.lt.s32.totalorder %v367, 14
        %vm508 = vcmp.lt.s32.totalorder %v370, 14
        %vm509 = vcmp.lt.s32.totalorder %v373, 14
        %vm510 = vcmp.lt.s32.totalorder %v376, 14
        %vm511 = vcmp.lt.s32.totalorder %v379, 14
        %vm512 = vcmp.lt.s32.totalorder %v382, 14
        %vm513 = vcmp.lt.s32.totalorder %v385, 14
        %vm514 = vcmp.lt.s32.totalorder %v388, 14
        %vm515 = vcmp.lt.s32.totalorder %v391, 14
        %vm516 = vcmp.lt.s32.totalorder %v394, 14
        %vm517 = vcmp.lt.s32.totalorder %v397, 14
        %vm518 = vcmp.lt.s32.totalorder %v400, 14
        %vm519 = vcmp.lt.s32.totalorder %v403, 14
        %vm520 = vcmp.lt.s32.totalorder %v406, 14
        %vm521 = vcmp.lt.s32.totalorder %v409, 14
        %vm522 = vcmp.lt.s32.totalorder %v412, 14
        %vm523 = vcmp.lt.s32.totalorder %v415, 14
        %vm524 = vcmp.lt.s32.totalorder %v418, 14
        %vm525 = vcmp.lt.s32.totalorder %v421, 14
        %vm526 = vcmp.lt.s32.totalorder %v424, 14
        %vm527 = vcmp.lt.s32.totalorder %v427, 14
        %vm528 = vcmp.lt.s32.totalorder %v430, 14
        %vm529 = vcmp.lt.s32.totalorder %v433, 14
        %vm562 = vcmask 1040384
        %v563 = vrot.slane %v273, 7
        %v564 = vrot.slane %v274, 7
        %v565 = vsel %vm562, %v563, %v564
        %v566 = vrot.slane %v275, 7
        %v567 = vsel %vm562, %v564, %v566
        %v568 = vrot.slane %v276, 7
        %v569 = vsel %vm562, %v566, %v568
        %v570 = vrot.slane %v277, 7
        %v571 = vsel %vm562, %v568, %v570
        %v572 = vrot.slane %v278, 7
        %v573 = vsel %vm562, %v570, %v572
        %v574 = vrot.slane %v279, 7
        %v575 = vsel %vm562, %v572, %v574
        %v576 = vrot.slane %v280, 7
        %v577 = vsel %vm562, %v574, %v576
        %v578 = vrot.slane %v281, 7
        %v579 = vsel %vm562, %v576, %v578
        %v580 = vrot.slane %v282, 7
        %v581 = vsel %vm562, %v578, %v580
        %v582 = vrot.slane %v283, 7
        %v583 = vsel %vm562, %v580, %v582
        %v584 = vrot.slane %v284, 7
        %v585 = vsel %vm562, %v582, %v584
        %v586 = vrot.slane %v285, 7
        %v587 = vsel %vm562, %v584, %v586
        %v588 = vrot.slane %v286, 7
        %v589 = vsel %vm562, %v586, %v588
        %v590 = vrot.slane %v287, 7
        %v591 = vsel %vm562, %v588, %v590
        %v592 = vrot.slane %v288, 7
        %v593 = vsel %vm562, %v590, %v592
        %v594 = vrot.slane %v289, 7
        %v595 = vsel %vm562, %v592, %v594
        %v596 = vrot.slane %v290, 7
        %v597 = vsel %vm562, %v594, %v596
        %v598 = vrot.slane %v291, 7
        %v599 = vsel %vm562, %v596, %v598
        %v600 = vrot.slane %v292, 7
        %v601 = vsel %vm562, %v598, %v600
        %v602 = vrot.slane %v293, 7
        %v603 = vsel %vm562, %v600, %v602
        %v604 = vrot.slane %v294, 7
        %v605 = vsel %vm562, %v602, %v604
        %v606 = vrot.slane %v295, 7
        %v607 = vsel %vm562, %v604, %v606
        %v608 = vrot.slane %v296, 7
        %v609 = vsel %vm562, %v606, %v608
        %v610 = vrot.slane %v297, 7
        %v611 = vsel %vm562, %v608, %v610
        %v612 = vrot.slane %v298, 7
        %v613 = vsel %vm562, %v610, %v612
        %v614 = vrot.slane %v299, 7
        %v615 = vsel %vm562, %v612, %v614
        %v616 = vrot.slane %v300, 7
        %v617 = vsel %vm562, %v614, %v616
        %v618 = vrot.slane %v301, 7
        %v619 = vsel %vm562, %v616, %v618
        %v620 = vrot.slane %v302, 7
        %v621 = vsel %vm562, %v618, %v620
        %v622 = vrot.slane %v303, 7
        %v623 = vsel %vm562, %v620, %v622
        %v624 = vrot.slane %v304, 7
        %v625 = vsel %vm562, %v622, %v624
        %v658 = vsel %vm562, 0.0, %v563
        %v659 = vsel %vm434, %v658, 0.0
        %v660 = vsel %vm435, %v565, 0.0
        %v661 = vsel %vm436, %v567, 0.0
        %v662 = vsel %vm437, %v569, 0.0
        %v663 = vsel %vm438, %v571, 0.0
        %v664 = vsel %vm439, %v573, 0.0
        %v665 = vsel %vm440, %v575, 0.0
        %v666 = vsel %vm441, %v577, 0.0
        %v667 = vsel %vm442, %v579, 0.0
        %v668 = vsel %vm443, %v581, 0.0
        %v669 = vsel %vm444, %v583, 0.0
        %v670 = vsel %vm445, %v585, 0.0
        %v671 = vsel %vm446, %v587, 0.0
        %v672 = vsel %vm447, %v589, 0.0
        %v673 = vsel %vm448, %v591, 0.0
        %v674 = vsel %vm449, %v593, 0.0
        %v675 = vsel %vm450, %v595, 0.0
        %v676 = vsel %vm451, %v597, 0.0
        %v677 = vsel %vm452, %v599, 0.0
        %v678 = vsel %vm453, %v601, 0.0
        %v679 = vsel %vm454, %v603, 0.0
        %v680 = vsel %vm455, %v605, 0.0
        %v681 = vsel %vm456, %v607, 0.0
        %v682 = vsel %vm457, %v609, 0.0
        %v683 = vsel %vm458, %v611, 0.0
        %v684 = vsel %vm459, %v613, 0.0
        %v685 = vsel %vm460, %v615, 0.0
        %v686 = vsel %vm461, %v617, 0.0
        %v687 = vsel %vm462, %v619, 0.0
        %v688 = vsel %vm463, %v621, 0.0
        %v689 = vsel %vm464, %v623, 0.0
        %v690 = vsel %vm465, %v625, 0.0
        %v691 = vpack.c.bf16 %v660, %v659
        %v692 = vpack.c.bf16 %v662, %v661
        %v693 = vpack.c.bf16 %v664, %v663
        %v694 = vpack.c.bf16 %v666, %v665
        %v695 = vpack.c.bf16 %v668, %v667
        %v696 = vpack.c.bf16 %v670, %v669
        %v697 = vpack.c.bf16 %v672, %v671
        %v698 = vpack.c.bf16 %v674, %v673
        %v699 = vpack.c.bf16 %v676, %v675
        %v700 = vpack.c.bf16 %v678, %v677
        %v701 = vpack.c.bf16 %v680, %v679
        %v702 = vpack.c.bf16 %v682, %v681
        %v703 = vpack.c.bf16 %v684, %v683
        %v704 = vpack.c.bf16 %v686, %v685
        %v705 = vpack.c.bf16 %v688, %v687
        %v706 = vpack.c.bf16 %v690, %v689
        %v707 = vpack.c.bf16 %v274, %v273
        %v708 = vpack.c.bf16 %v276, %v275
        %v709 = vpack.c.bf16 %v278, %v277
        %v710 = vpack.c.bf16 %v280, %v279
        %v711 = vpack.c.bf16 %v282, %v281
        %v712 = vpack.c.bf16 %v284, %v283
        %v713 = vpack.c.bf16 %v286, %v285
        %v714 = vpack.c.bf16 %v288, %v287
        %v715 = vpack.c.bf16 %v290, %v289
        %v716 = vpack.c.bf16 %v292, %v291
        %v717 = vpack.c.bf16 %v294, %v293
        %v718 = vpack.c.bf16 %v296, %v295
        %v719 = vpack.c.bf16 %v298, %v297
        %v720 = vpack.c.bf16 %v300, %v299
        %v721 = vpack.c.bf16 %v302, %v301
        %v722 = vpack.c.bf16 %v304, %v303
        %vm723 = vcmask 1046528
        %v724 = vrot.slane %v273, 1
        %v725 = vrot.slane %v274, 1
        %v726 = vsel %vm723, %v724, %v725
        %v727 = vrot.slane %v275, 1
        %v728 = vsel %vm723, %v725, %v727
        %v729 = vrot.slane %v276, 1
        %v730 = vsel %vm723, %v727, %v729
        %v731 = vrot.slane %v277, 1
        %v732 = vsel %vm723, %v729, %v731
        %v733 = vrot.slane %v278, 1
        %v734 = vsel %vm723, %v731, %v733
        %v735 = vrot.slane %v279, 1
        %v736 = vsel %vm723, %v733, %v735
        %v737 = vrot.slane %v280, 1
        %v738 = vsel %vm723, %v735, %v737
        %v739 = vrot.slane %v281, 1
        %v740 = vsel %vm723, %v737, %v739
        %v741 = vrot.slane %v282, 1
        %v742 = vsel %vm723, %v739, %v741
        %v743 = vrot.slane %v283, 1
        %v744 = vsel %vm723, %v741, %v743
        %v745 = vrot.slane %v284, 1
        %v746 = vsel %vm723, %v743, %v745
        %v747 = vrot.slane %v285, 1
        %v748 = vsel %vm723, %v745, %v747
        %v749 = vrot.slane %v286, 1
        %v750 = vsel %vm723, %v747, %v749
        %v751 = vrot.slane %v287, 1
        %v752 = vsel %vm723, %v749, %v751
        %v753 = vrot.slane %v288, 1
        %v754 = vsel %vm723, %v751, %v753
        %v755 = vrot.slane %v289, 1
        %v756 = vsel %vm723, %v753, %v755
        %v757 = vrot.slane %v290, 1
        %v758 = vsel %vm723, %v755, %v757
        %v759 = vrot.slane %v291, 1
        %v760 = vsel %vm723, %v757, %v759
        %v761 = vrot.slane %v292, 1
        %v762 = vsel %vm723, %v759, %v761
        %v763 = vrot.slane %v293, 1
        %v764 = vsel %vm723, %v761, %v763
        %v765 = vrot.slane %v294, 1
        %v766 = vsel %vm723, %v763, %v765
        %v767 = vrot.slane %v295, 1
        %v768 = vsel %vm723, %v765, %v767
        %v769 = vrot.slane %v296, 1
        %v770 = vsel %vm723, %v767, %v769
        %v771 = vrot.slane %v297, 1
        %v772 = vsel %vm723, %v769, %v771
        %v773 = vrot.slane %v298, 1
        %v774 = vsel %vm723, %v771, %v773
        %v775 = vrot.slane %v299, 1
        %v776 = vsel %vm723, %v773, %v775
        %v777 = vrot.slane %v300, 1
        %v778 = vsel %vm723, %v775, %v777
        %v779 = vrot.slane %v301, 1
        %v780 = vsel %vm723, %v777, %v779
        %v781 = vrot.slane %v302, 1
        %v782 = vsel %vm723, %v779, %v781
        %v783 = vrot.slane %v303, 1
        %v784 = vsel %vm723, %v781, %v783
        %v785 = vrot.slane %v304, 1
        %v786 = vsel %vm723, %v783, %v785
        %v819 = vsel %vm723, %v785, 0.0
        %v820 = vsel %vm466, %v726, 0.0
        %v821 = vsel %vm467, %v728, 0.0
        %v822 = vsel %vm468, %v730, 0.0
        %v823 = vsel %vm469, %v732, 0.0
        %v824 = vsel %vm470, %v734, 0.0
        %v825 = vsel %vm471, %v736, 0.0
        %v826 = vsel %vm472, %v738, 0.0
        %v827 = vsel %vm473, %v740, 0.0
        %v828 = vsel %vm474, %v742, 0.0
        %v829 = vsel %vm475, %v744, 0.0
        %v830 = vsel %vm476, %v746, 0.0
        %v831 = vsel %vm477, %v748, 0.0
        %v832 = vsel %vm478, %v750, 0.0
        %v833 = vsel %vm479, %v752, 0.0
        %v834 = vsel %vm480, %v754, 0.0
        %v835 = vsel %vm481, %v756, 0.0
        %v836 = vsel %vm482, %v758, 0.0
        %v837 = vsel %vm483, %v760, 0.0
        %v838 = vsel %vm484, %v762, 0.0
        %v839 = vsel %vm485, %v764, 0.0
        %v840 = vsel %vm486, %v766, 0.0
        %v841 = vsel %vm487, %v768, 0.0
        %v842 = vsel %vm488, %v770, 0.0
        %v843 = vsel %vm489, %v772, 0.0
        %v844 = vsel %vm490, %v774, 0.0
        %v845 = vsel %vm491, %v776, 0.0
        %v846 = vsel %vm492, %v778, 0.0
        %v847 = vsel %vm493, %v780, 0.0
        %v848 = vsel %vm494, %v782, 0.0
        %v849 = vsel %vm495, %v784, 0.0
        %v850 = vsel %vm496, %v786, 0.0
        %v851 = vsel %vm497, %v819, 0.0
        %v852 = vpack.c.bf16 %v821, %v820
        %v853 = vpack.c.bf16 %v823, %v822
        %v854 = vpack.c.bf16 %v825, %v824
        %v855 = vpack.c.bf16 %v827, %v826
        %v856 = vpack.c.bf16 %v829, %v828
        %v857 = vpack.c.bf16 %v831, %v830
        %v858 = vpack.c.bf16 %v833, %v832
        %v859 = vpack.c.bf16 %v835, %v834
        %v860 = vpack.c.bf16 %v837, %v836
        %v861 = vpack.c.bf16 %v839, %v838
        %v862 = vpack.c.bf16 %v841, %v840
        %v863 = vpack.c.bf16 %v843, %v842
        %v864 = vpack.c.bf16 %v845, %v844
        %v865 = vpack.c.bf16 %v847, %v846
        %v866 = vpack.c.bf16 %v849, %v848
        %v867 = vpack.c.bf16 %v851, %v850
        %vm868 = vcmask 1045504
        %v869 = vrot.slane %v273, 2
        %v870 = vrot.slane %v274, 2
        %v871 = vsel %vm868, %v869, %v870
        %v872 = vrot.slane %v275, 2
        %v873 = vsel %vm868, %v870, %v872
        %v874 = vrot.slane %v276, 2
        %v875 = vsel %vm868, %v872, %v874
        %v876 = vrot.slane %v277, 2
        %v877 = vsel %vm868, %v874, %v876
        %v878 = vrot.slane %v278, 2
        %v879 = vsel %vm868, %v876, %v878
        %v880 = vrot.slane %v279, 2
        %v881 = vsel %vm868, %v878, %v880
        %v882 = vrot.slane %v280, 2
        %v883 = vsel %vm868, %v880, %v882
        %v884 = vrot.slane %v281, 2
        %v885 = vsel %vm868, %v882, %v884
        %v886 = vrot.slane %v282, 2
        %v887 = vsel %vm868, %v884, %v886
        %v888 = vrot.slane %v283, 2
        %v889 = vsel %vm868, %v886, %v888
        %v890 = vrot.slane %v284, 2
        %v891 = vsel %vm868, %v888, %v890
        %v892 = vrot.slane %v285, 2
        %v893 = vsel %vm868, %v890, %v892
        %v894 = vrot.slane %v286, 2
        %v895 = vsel %vm868, %v892, %v894
        %v896 = vrot.slane %v287, 2
        %v897 = vsel %vm868, %v894, %v896
        %v898 = vrot.slane %v288, 2
        %v899 = vsel %vm868, %v896, %v898
        %v900 = vrot.slane %v289, 2
        %v901 = vsel %vm868, %v898, %v900
        %v902 = vrot.slane %v290, 2
        %v903 = vsel %vm868, %v900, %v902
        %v904 = vrot.slane %v291, 2
        %v905 = vsel %vm868, %v902, %v904
        %v906 = vrot.slane %v292, 2
        %v907 = vsel %vm868, %v904, %v906
        %v908 = vrot.slane %v293, 2
        %v909 = vsel %vm868, %v906, %v908
        %v910 = vrot.slane %v294, 2
        %v911 = vsel %vm868, %v908, %v910
        %v912 = vrot.slane %v295, 2
        %v913 = vsel %vm868, %v910, %v912
        %v914 = vrot.slane %v296, 2
        %v915 = vsel %vm868, %v912, %v914
        %v916 = vrot.slane %v297, 2
        %v917 = vsel %vm868, %v914, %v916
        %v918 = vrot.slane %v298, 2
        %v919 = vsel %vm868, %v916, %v918
        %v920 = vrot.slane %v299, 2
        %v921 = vsel %vm868, %v918, %v920
        %v922 = vrot.slane %v300, 2
        %v923 = vsel %vm868, %v920, %v922
        %v924 = vrot.slane %v301, 2
        %v925 = vsel %vm868, %v922, %v924
        %v926 = vrot.slane %v302, 2
        %v927 = vsel %vm868, %v924, %v926
        %v928 = vrot.slane %v303, 2
        %v929 = vsel %vm868, %v926, %v928
        %v930 = vrot.slane %v304, 2
        %v931 = vsel %vm868, %v928, %v930
        %v964 = vsel %vm868, %v930, 0.0
        %v965 = vsel %vm498, %v871, 0.0
        %v966 = vsel %vm499, %v873, 0.0
        %v967 = vsel %vm500, %v875, 0.0
        %v968 = vsel %vm501, %v877, 0.0
        %v969 = vsel %vm502, %v879, 0.0
        %v970 = vsel %vm503, %v881, 0.0
        %v971 = vsel %vm504, %v883, 0.0
        %v972 = vsel %vm505, %v885, 0.0
        %v973 = vsel %vm506, %v887, 0.0
        %v974 = vsel %vm507, %v889, 0.0
        %v975 = vsel %vm508, %v891, 0.0
        %v976 = vsel %vm509, %v893, 0.0
        %v977 = vsel %vm510, %v895, 0.0
        %v978 = vsel %vm511, %v897, 0.0
        %v979 = vsel %vm512, %v899, 0.0
        %v980 = vsel %vm513, %v901, 0.0
        %v981 = vsel %vm514, %v903, 0.0
        %v982 = vsel %vm515, %v905, 0.0
        %v983 = vsel %vm516, %v907, 0.0
        %v984 = vsel %vm517, %v909, 0.0
        %v985 = vsel %vm518, %v911, 0.0
        %v986 = vsel %vm519, %v913, 0.0
        %v987 = vsel %vm520, %v915, 0.0
        %v988 = vsel %vm521, %v917, 0.0
        %v989 = vsel %vm522, %v919, 0.0
        %v990 = vsel %vm523, %v921, 0.0
        %v991 = vsel %vm524, %v923, 0.0
        %v992 = vsel %vm525, %v925, 0.0
        %v993 = vsel %vm526, %v927, 0.0
        %v994 = vsel %vm527, %v929, 0.0
        %v995 = vsel %vm528, %v931, 0.0
        %v996 = vsel %vm529, %v964, 0.0
        %v997 = vpack.c.bf16 %v966, %v965
        %v998 = vpack.c.bf16 %v968, %v967
        %v999 = vpack.c.bf16 %v970, %v969
        %v1000 = vpack.c.bf16 %v972, %v971
        %v1001 = vpack.c.bf16 %v974, %v973
        %v1002 = vpack.c.bf16 %v976, %v975
        %v1003 = vpack.c.bf16 %v978, %v977
        %v1004 = vpack.c.bf16 %v980, %v979
        %v1005 = vpack.c.bf16 %v982, %v981
        %v1006 = vpack.c.bf16 %v984, %v983
        %v1007 = vpack.c.bf16 %v986, %v985
        %v1008 = vpack.c.bf16 %v988, %v987
        %v1009 = vpack.c.bf16 %v990, %v989
        %v1010 = vpack.c.bf16 %v992, %v991
        %v1011 = vpack.c.bf16 %v994, %v993
        %v1012 = vpack.c.bf16 %v996, %v995
        %v1013 = vld [vmem:[#allocation5] sm:$0xf]
        %v1014 = vld [vmem:[#allocation5 + $0x4] sm:$0xf]
        %v1015 = vld [vmem:[#allocation5 + $0x8] sm:$0xf]
        %v1016 = vld [vmem:[#allocation5 + $0xc] sm:$0xf]
        %v1017 = vld [vmem:[#allocation5 + $0x10] sm:$0xf]
        %v1018 = vld [vmem:[#allocation5 + $0x14] sm:$0xf]
        %v1019 = vld [vmem:[#allocation5 + $0x18] sm:$0xf]
        %v1020 = vld [vmem:[#allocation5 + $0x1c] sm:$0xf]
        %v1021 = vld [vmem:[#allocation5 + $0x20] sm:$0xf]
        %v1022 = vld [vmem:[#allocation5 + $0x24] sm:$0xf]
        %v1023 = vld [vmem:[#allocation5 + $0x28] sm:$0xf]
        %v1024 = vld [vmem:[#allocation5 + $0x2c] sm:$0xf]
        %v1025 = vld [vmem:[#allocation5 + $0x30] sm:$0xf]
        %v1026 = vld [vmem:[#allocation5 + $0x34] sm:$0xf]
        %v1027 = vld [vmem:[#allocation5 + $0x38] sm:$0xf]
        %v1028 = vld [vmem:[#allocation5 + $0x3c] sm:$0xf]
        %v1029 = vld [vmem:[#allocation5 + $0x40] sm:$0xf]
        %v1030 = vld [vmem:[#allocation5 + $0x44] sm:$0xf]
        %v1031 = vld [vmem:[#allocation5 + $0x48] sm:$0xf]
        %v1032 = vld [vmem:[#allocation5 + $0x4c] sm:$0xf]
        %v1033 = vld [vmem:[#allocation5 + $0x50] sm:$0xf]
        %v1034 = vld [vmem:[#allocation5 + $0x54] sm:$0xf]
        %v1035 = vld [vmem:[#allocation5 + $0x58] sm:$0xf]
        %v1036 = vld [vmem:[#allocation5 + $0x5c] sm:$0xf]
        %v1037 = vld [vmem:[#allocation5 + $0x60] sm:$0xf]
        %v1038 = vld [vmem:[#allocation5 + $0x64] sm:$0xf]
        %v1039 = vld [vmem:[#allocation5 + $0x68] sm:$0xf]
        %v1040 = vld [vmem:[#allocation5 + $0x6c] sm:$0xf]
        %v1041 = vld [vmem:[#allocation5 + $0x70] sm:$0xf]
        %v1042 = vld [vmem:[#allocation5 + $0x74] sm:$0xf]
        %v1043 = vld [vmem:[#allocation5 + $0x78] sm:$0xf]
        %v1044 = vld [vmem:[#allocation5 + $0x7c] sm:$0xf]
        %v1045 = vld [vmem:[#allocation5 + $0x80] sm:$0xf]
        %v1046 = vld [vmem:[#allocation5 + $0x84] sm:$0xf]
        %v1047 = vld [vmem:[#allocation5 + $0x88] sm:$0xf]
        %v1048 = vld [vmem:[#allocation5 + $0x8c] sm:$0xf]
        %v1049 = vld [vmem:[#allocation5 + $0x90] sm:$0xf]
        %v1050 = vld [vmem:[#allocation5 + $0x94] sm:$0xf]
        %v1051 = vld [vmem:[#allocation5 + $0x98] sm:$0xf]
        %v1052 = vld [vmem:[#allocation5 + $0x9c] sm:$0xf]
        %v1053 = vld [vmem:[#allocation5 + $0xa0] sm:$0xf]
        %v1054 = vld [vmem:[#allocation5 + $0xa4] sm:$0xf]
        %v1055 = vld [vmem:[#allocation5 + $0xa8] sm:$0xf]
        %v1056 = vld [vmem:[#allocation5 + $0xac] sm:$0xf]
        %v1057 = vld [vmem:[#allocation5 + $0xb0] sm:$0xf]
        %v1058 = vld [vmem:[#allocation5 + $0xb4] sm:$0xf]
        %v1059 = vld [vmem:[#allocation5 + $0xb8] sm:$0xf]
        %v1060 = vld [vmem:[#allocation5 + $0xbc] sm:$0xf]
        %v1061 = vld [vmem:[#allocation5 + $0xc0] sm:$0xf]
        %v1062 = vld [vmem:[#allocation5 + $0xc4] sm:$0xf]
        %v1063 = vld [vmem:[#allocation5 + $0xc8] sm:$0xf]
        %v1064 = vld [vmem:[#allocation5 + $0xcc] sm:$0xf]
        %v1065 = vld [vmem:[#allocation5 + $0xd0] sm:$0xf]
        %v1066 = vld [vmem:[#allocation5 + $0xd4] sm:$0xf]
        %v1067 = vld [vmem:[#allocation5 + $0xd8] sm:$0xf]
        %v1068 = vld [vmem:[#allocation5 + $0xdc] sm:$0xf]
        %v1069 = vld [vmem:[#allocation5 + $0xe0] sm:$0xf]
        %v1070 = vld [vmem:[#allocation5 + $0xe4] sm:$0xf]
        %v1071 = vld [vmem:[#allocation5 + $0xe8] sm:$0xf]
        %v1072 = vld [vmem:[#allocation5 + $0xec] sm:$0xf]
        %v1073 = vld [vmem:[#allocation5 + $0xf0] sm:$0xf]
        %v1074 = vld [vmem:[#allocation5 + $0xf4] sm:$0xf]
        %v1075 = vld [vmem:[#allocation5 + $0xf8] sm:$0xf]
        %v1076 = vld [vmem:[#allocation5 + $0xfc] sm:$0xf]
        %v1077 = vld [vmem:[#allocation5 + $0x100] sm:$0xf]
        %v1078 = vld [vmem:[#allocation5 + $0x104] sm:$0xf]
        %v1079 = vld [vmem:[#allocation5 + $0x108] sm:$0xf]
        %v1080 = vld [vmem:[#allocation5 + $0x10c] sm:$0xf]
        %v1081 = vld [vmem:[#allocation5 + $0x110] sm:$0xf]
        %v1082 = vld [vmem:[#allocation5 + $0x114] sm:$0xf]
        %v1083 = vld [vmem:[#allocation5 + $0x118] sm:$0xf]
        %v1084 = vld [vmem:[#allocation5 + $0x11c] sm:$0xf]
        %v1085 = vld [vmem:[#allocation5 + $0x120] sm:$0xf]
        %v1086 = vld [vmem:[#allocation5 + $0x124] sm:$0xf]
        %v1087 = vld [vmem:[#allocation5 + $0x128] sm:$0xf]
        %v1088 = vld [vmem:[#allocation5 + $0x12c] sm:$0xf]
        %v1089 = vld [vmem:[#allocation5 + $0x130] sm:$0xf]
        %v1090 = vld [vmem:[#allocation5 + $0x134] sm:$0xf]
        %v1091 = vld [vmem:[#allocation5 + $0x138] sm:$0xf]
        %v1092 = vld [vmem:[#allocation5 + $0x13c] sm:$0xf]
        %v1093 = vld [vmem:[#allocation5 + $0x140] sm:$0xf]
        %v1094 = vld [vmem:[#allocation5 + $0x144] sm:$0xf]
        %v1095 = vld [vmem:[#allocation5 + $0x148] sm:$0xf]
        %v1096 = vld [vmem:[#allocation5 + $0x14c] sm:$0xf]
        %v1097 = vld [vmem:[#allocation5 + $0x150] sm:$0xf]
        %v1098 = vld [vmem:[#allocation5 + $0x154] sm:$0xf]
        %v1099 = vld [vmem:[#allocation5 + $0x158] sm:$0xf]
        %v1100 = vld [vmem:[#allocation5 + $0x15c] sm:$0xf]
        %v1101 = vld [vmem:[#allocation5 + $0x160] sm:$0xf]
        %v1102 = vld [vmem:[#allocation5 + $0x164] sm:$0xf]
        %v1103 = vld [vmem:[#allocation5 + $0x168] sm:$0xf]
        %v1104 = vld [vmem:[#allocation5 + $0x16c] sm:$0xf]
        %v1105 = vld [vmem:[#allocation5 + $0x170] sm:$0xf]
        %v1106 = vld [vmem:[#allocation5 + $0x174] sm:$0xf]
        %v1107 = vld [vmem:[#allocation5 + $0x178] sm:$0xf]
        %v1108 = vld [vmem:[#allocation5 + $0x17c] sm:$0xf]
        %v1109 = vld [vmem:[#allocation5 + $0x180] sm:$0xf]
        %v1110 = vld [vmem:[#allocation5 + $0x184] sm:$0xf]
        %v1111 = vld [vmem:[#allocation5 + $0x188] sm:$0xf]
        %v1112 = vld [vmem:[#allocation5 + $0x18c] sm:$0xf]
        %v1113 = vld [vmem:[#allocation5 + $0x190] sm:$0xf]
        %v1114 = vld [vmem:[#allocation5 + $0x194] sm:$0xf]
        %v1115 = vld [vmem:[#allocation5 + $0x198] sm:$0xf]
        %v1116 = vld [vmem:[#allocation5 + $0x19c] sm:$0xf]
        %v1117 = vld [vmem:[#allocation5 + $0x1a0] sm:$0xf]
        %v1118 = vld [vmem:[#allocation5 + $0x1a4] sm:$0xf]
        %v1119 = vld [vmem:[#allocation5 + $0x1a8] sm:$0xf]
        %v1120 = vld [vmem:[#allocation5 + $0x1ac] sm:$0xf]
        %v1121 = vld [vmem:[#allocation5 + $0x1b0] sm:$0xf]
        %v1122 = vld [vmem:[#allocation5 + $0x1b4] sm:$0xf]
        %v1123 = vld [vmem:[#allocation5 + $0x1b8] sm:$0xf]
        %v1124 = vld [vmem:[#allocation5 + $0x1bc] sm:$0xf]
        %v1125 = vld [vmem:[#allocation5 + $0x1c0] sm:$0xf]
        %v1126 = vld [vmem:[#allocation5 + $0x1c4] sm:$0xf]
        %v1127 = vld [vmem:[#allocation5 + $0x1c8] sm:$0xf]
        %v1128 = vld [vmem:[#allocation5 + $0x1cc] sm:$0xf]
        %v1129 = vld [vmem:[#allocation5 + $0x1d0] sm:$0xf]
        %v1130 = vld [vmem:[#allocation5 + $0x1d4] sm:$0xf]
        %v1131 = vld [vmem:[#allocation5 + $0x1d8] sm:$0xf]
        %v1132 = vld [vmem:[#allocation5 + $0x1dc] sm:$0xf]
        %v1133 = vld [vmem:[#allocation5 + $0x1e0] sm:$0xf]
        %v1134 = vld [vmem:[#allocation5 + $0x1e4] sm:$0xf]
        %v1135 = vld [vmem:[#allocation5 + $0x1e8] sm:$0xf]
        %v1136 = vld [vmem:[#allocation5 + $0x1ec] sm:$0xf]
        %v1137 = vld [vmem:[#allocation5 + $0x1f0] sm:$0xf]
        %v1138 = vld [vmem:[#allocation5 + $0x1f4] sm:$0xf]
        %v1139 = vld [vmem:[#allocation5 + $0x1f8] sm:$0xf]
        %v1140 = vld [vmem:[#allocation5 + $0x1fc] sm:$0xf]
        %v1205 = vunpack.c.l.b16 %v1077
        %v1206 = vunpack.c.l.b16 %v1078
        %v1207 = vunpack.c.l.b16 %v1079
        %v1208 = vunpack.c.l.b16 %v1080
        %v1209 = vunpack.c.l.b16 %v1081
        %v1210 = vunpack.c.l.b16 %v1082
        %v1211 = vunpack.c.l.b16 %v1083
        %v1212 = vunpack.c.l.b16 %v1084
        %v1213 = vunpack.c.l.b16 %v1085
        %v1214 = vunpack.c.l.b16 %v1086
        %v1215 = vunpack.c.l.b16 %v1087
        %v1216 = vunpack.c.l.b16 %v1088
        %v1217 = vunpack.c.l.b16 %v1089
        %v1218 = vunpack.c.l.b16 %v1090
        %v1219 = vunpack.c.l.b16 %v1091
        %v1220 = vunpack.c.l.b16 %v1092
        %v1221 = vunpack.c.l.b16 %v1093
        %v1222 = vunpack.c.l.b16 %v1094
        %v1223 = vunpack.c.l.b16 %v1095
        %v1224 = vunpack.c.l.b16 %v1096
        %v1225 = vunpack.c.l.b16 %v1097
        %v1226 = vunpack.c.l.b16 %v1098
        %v1227 = vunpack.c.l.b16 %v1099
        %v1228 = vunpack.c.l.b16 %v1100
        %v1229 = vunpack.c.l.b16 %v1101
        %v1230 = vunpack.c.l.b16 %v1102
        %v1231 = vunpack.c.l.b16 %v1103
        %v1232 = vunpack.c.l.b16 %v1104
        %v1233 = vunpack.c.l.b16 %v1105
        %v1234 = vunpack.c.l.b16 %v1106
        %v1235 = vunpack.c.l.b16 %v1107
        %v1236 = vunpack.c.l.b16 %v1108
        %v1237 = vunpack.c.l.b16 %v1109
        %v1238 = vunpack.c.l.b16 %v1110
        %v1239 = vunpack.c.l.b16 %v1111
        %v1240 = vunpack.c.l.b16 %v1112
        %v1241 = vunpack.c.l.b16 %v1113
        %v1242 = vunpack.c.l.b16 %v1114
        %v1243 = vunpack.c.l.b16 %v1115
        %v1244 = vunpack.c.l.b16 %v1116
        %v1245 = vunpack.c.l.b16 %v1117
        %v1246 = vunpack.c.l.b16 %v1118
        %v1247 = vunpack.c.l.b16 %v1119
        %v1248 = vunpack.c.l.b16 %v1120
        %v1249 = vunpack.c.l.b16 %v1121
        %v1250 = vunpack.c.l.b16 %v1122
        %v1251 = vunpack.c.l.b16 %v1123
        %v1252 = vunpack.c.l.b16 %v1124
        %v1253 = vunpack.c.l.b16 %v1125
        %v1254 = vunpack.c.l.b16 %v1126
        %v1255 = vunpack.c.l.b16 %v1127
        %v1256 = vunpack.c.l.b16 %v1128
        %v1257 = vunpack.c.l.b16 %v1129
        %v1258 = vunpack.c.l.b16 %v1130
        %v1259 = vunpack.c.l.b16 %v1131
        %v1260 = vunpack.c.l.b16 %v1132
        %v1261 = vunpack.c.l.b16 %v1133
        %v1262 = vunpack.c.l.b16 %v1134
        %v1263 = vunpack.c.l.b16 %v1135
        %v1264 = vunpack.c.l.b16 %v1136
        %v1265 = vunpack.c.l.b16 %v1137
        %v1266 = vunpack.c.l.b16 %v1138
        %v1267 = vunpack.c.l.b16 %v1139
        %v1268 = vunpack.c.l.b16 %v1140
        %v1269 = vpack.c.b16 %v1206, %v1205
        %v1270 = vpack.c.b16 %v1208, %v1207
        %v1271 = vpack.c.b16 %v1210, %v1209
        %v1272 = vpack.c.b16 %v1212, %v1211
        %v1273 = vpack.c.b16 %v1214, %v1213
        %v1274 = vpack.c.b16 %v1216, %v1215
        %v1275 = vpack.c.b16 %v1218, %v1217
        %v1276 = vpack.c.b16 %v1220, %v1219
        %v1277 = vpack.c.b16 %v1222, %v1221
        %v1278 = vpack.c.b16 %v1224, %v1223
        %v1279 = vpack.c.b16 %v1226, %v1225
        %v1280 = vpack.c.b16 %v1228, %v1227
        %v1281 = vpack.c.b16 %v1230, %v1229
        %v1282 = vpack.c.b16 %v1232, %v1231
        %v1283 = vpack.c.b16 %v1234, %v1233
        %v1284 = vpack.c.b16 %v1236, %v1235
        %v1285 = vpack.c.b16 %v1238, %v1237
        %v1286 = vpack.c.b16 %v1240, %v1239
        %v1287 = vpack.c.b16 %v1242, %v1241
        %v1288 = vpack.c.b16 %v1244, %v1243
        %v1289 = vpack.c.b16 %v1246, %v1245
        %v1290 = vpack.c.b16 %v1248, %v1247
        %v1291 = vpack.c.b16 %v1250, %v1249
        %v1292 = vpack.c.b16 %v1252, %v1251
        %v1293 = vpack.c.b16 %v1254, %v1253
        %v1294 = vpack.c.b16 %v1256, %v1255
        %v1295 = vpack.c.b16 %v1258, %v1257
        %v1296 = vpack.c.b16 %v1260, %v1259
        %v1297 = vpack.c.b16 %v1262, %v1261
        %v1298 = vpack.c.b16 %v1264, %v1263
        %v1299 = vpack.c.b16 %v1266, %v1265
        %v1300 = vpack.c.b16 %v1268, %v1267
        %1333 = vmatprep.subr.bf16.mxu0 0
        %1334 = vmatpush1.bf16.msra.mxu0 %v1276
        %1335 = vmatprep.subr.bf16.mxu0 0
        %1336 = vmatpush1.bf16.msra.mxu0 %v1275
        %1337 = vmatprep.subr.bf16.mxu0 0
        %1338 = vmatpush1.bf16.msra.mxu0 %v1274
        %1339 = vmatprep.subr.bf16.mxu0 0
        %1340 = vmatpush1.bf16.msra.mxu0 %v1273
        %1341 = vmatprep.subr.bf16.mxu0 0
        %1342 = vmatpush1.bf16.msra.mxu0 %v1272
        %1343 = vmatprep.subr.bf16.mxu0 0
        %1344 = vmatpush1.bf16.msra.mxu0 %v1271
        %1345 = vmatprep.subr.bf16.mxu0 0
        %1346 = vmatpush1.bf16.msra.mxu0 %v1270
        %1347 = vmatprep.subr.bf16.mxu0 0
        %1348 = vmatpush1.bf16.msra.mxu0 %v1269
        %1349 = vmatprep.subr.bf16.mxu0 0
        %1350 = vmatpush2.bf16.msra.mxu0 %v1284
        %1351 = vmatprep.subr.bf16.mxu0 0
        %1352 = vmatpush2.bf16.msra.mxu0 %v1283
        %1353 = vmatprep.subr.bf16.mxu0 0
        %1354 = vmatpush2.bf16.msra.mxu0 %v1282
        %1355 = vmatprep.subr.bf16.mxu0 0
        %1356 = vmatpush2.bf16.msra.mxu0 %v1281
        %1357 = vmatprep.subr.bf16.mxu0 0
        %1358 = vmatpush2.bf16.msra.mxu0 %v1280
        %1359 = vmatprep.subr.bf16.mxu0 0
        %1360 = vmatpush2.bf16.msra.mxu0 %v1279
        %1361 = vmatprep.subr.bf16.mxu0 0
        %1362 = vmatpush2.bf16.msra.mxu0 %v1278
        %1363 = vmatprep.subr.bf16.mxu0 0
        %1364 = vmatpush2.bf16.msra.mxu0 %v1277
        %1365 = vmatprep.mubr.bf16.mxu0 %v707
        %1366 = vmatmul.mubr.bf16.gmra.mxu0 %v691
        %v1367 = vpop.f32.mrf.mxu0
        %v1368 = vadd.f32 0.0, %v1367
        %v1369 = vpop.f32.mrf.mxu0
        %v1370 = vpop.f32.mrf.mxu0
        %v1371 = vadd.f32 0.0, %v1370
        %v1372 = vpop.f32.mrf.mxu0
        %1373 = vmatprep.mubr.bf16.mxu0 %v708
        %1374 = vmatmul.mubr.bf16.gmra.mxu0 %v692
        %v1375 = vpop.f32.mrf.mxu0
        %v1376 = vadd.f32 0.0, %v1375
        %v1377 = vpop.f32.mrf.mxu0
        %v1378 = vpop.f32.mrf.mxu0
        %v1379 = vadd.f32 0.0, %v1378
        %v1380 = vpop.f32.mrf.mxu0
        %1381 = vmatprep.mubr.bf16.mxu0 %v709
        %1382 = vmatmul.mubr.bf16.gmra.mxu0 %v693
        %v1383 = vpop.f32.mrf.mxu0
        %v1384 = vadd.f32 0.0, %v1383
        %v1385 = vpop.f32.mrf.mxu0
        %v1386 = vpop.f32.mrf.mxu0
        %v1387 = vadd.f32 0.0, %v1386
        %v1388 = vpop.f32.mrf.mxu0
        %1389 = vmatprep.mubr.bf16.mxu0 %v710
        %1390 = vmatmul.mubr.bf16.gmra.mxu0 %v694
        %v1391 = vpop.f32.mrf.mxu0
        %v1392 = vadd.f32 0.0, %v1391
        %v1393 = vpop.f32.mrf.mxu0
        %v1394 = vpop.f32.mrf.mxu0
        %v1395 = vadd.f32 0.0, %v1394
        %v1396 = vpop.f32.mrf.mxu0
        %1397 = vmatprep.mubr.bf16.mxu0 %v711
        %1398 = vmatmul.mubr.bf16.gmra.mxu0 %v695
        %v1399 = vpop.f32.mrf.mxu0
        %v1400 = vadd.f32 0.0, %v1399
        %v1401 = vpop.f32.mrf.mxu0
        %v1402 = vpop.f32.mrf.mxu0
        %v1403 = vadd.f32 0.0, %v1402
        %v1404 = vpop.f32.mrf.mxu0
        %1405 = vmatprep.mubr.bf16.mxu0 %v712
        %1406 = vmatmul.mubr.bf16.gmra.mxu0 %v696
        %v1407 = vpop.f32.mrf.mxu0
        %v1408 = vadd.f32 0.0, %v1407
        %v1409 = vpop.f32.mrf.mxu0
        %v1410 = vpop.f32.mrf.mxu0
        %v1411 = vadd.f32 0.0, %v1410
        %v1412 = vpop.f32.mrf.mxu0
        %1413 = vmatprep.mubr.bf16.mxu0 %v713
        %1414 = vmatmul.mubr.bf16.gmra.mxu0 %v697
        %v1415 = vpop.f32.mrf.mxu0
        %v1416 = vadd.f32 0.0, %v1415
        %v1417 = vpop.f32.mrf.mxu0
        %v1418 = vpop.f32.mrf.mxu0
        %v1419 = vadd.f32 0.0, %v1418
        %v1420 = vpop.f32.mrf.mxu0
        %1421 = vmatprep.mubr.bf16.mxu0 %v714
        %1422 = vmatmul.mubr.bf16.gmra.mxu0 %v698
        %v1423 = vpop.f32.mrf.mxu0
        %v1424 = vadd.f32 0.0, %v1423
        %v1425 = vpop.f32.mrf.mxu0
        %v1426 = vpop.f32.mrf.mxu0
        %v1427 = vadd.f32 0.0, %v1426
        %v1428 = vpop.f32.mrf.mxu0
        %1429 = vmatprep.mubr.bf16.mxu0 %v715
        %1430 = vmatmul.mubr.bf16.gmra.mxu0 %v699
        %v1431 = vpop.f32.mrf.mxu0
        %v1432 = vadd.f32 0.0, %v1431
        %v1433 = vpop.f32.mrf.mxu0
        %v1434 = vpop.f32.mrf.mxu0
        %v1435 = vadd.f32 0.0, %v1434
        %v1436 = vpop.f32.mrf.mxu0
        %1437 = vmatprep.mubr.bf16.mxu0 %v716
        %1438 = vmatmul.mubr.bf16.gmra.mxu0 %v700
        %v1439 = vpop.f32.mrf.mxu0
        %v1440 = vadd.f32 0.0, %v1439
        %v1441 = vpop.f32.mrf.mxu0
        %v1442 = vpop.f32.mrf.mxu0
        %v1443 = vadd.f32 0.0, %v1442
        %v1444 = vpop.f32.mrf.mxu0
        %1445 = vmatprep.mubr.bf16.mxu0 %v717
        %1446 = vmatmul.mubr.bf16.gmra.mxu0 %v701
        %v1447 = vpop.f32.mrf.mxu0
        %v1448 = vadd.f32 0.0, %v1447
        %v1449 = vpop.f32.mrf.mxu0
        %v1450 = vpop.f32.mrf.mxu0
        %v1451 = vadd.f32 0.0, %v1450
        %v1452 = vpop.f32.mrf.mxu0
        %1453 = vmatprep.mubr.bf16.mxu0 %v718
        %1454 = vmatmul.mubr.bf16.gmra.mxu0 %v702
        %v1455 = vpop.f32.mrf.mxu0
        %v1456 = vadd.f32 0.0, %v1455
        %v1457 = vpop.f32.mrf.mxu0
        %v1458 = vpop.f32.mrf.mxu0
        %v1459 = vadd.f32 0.0, %v1458
        %v1460 = vpop.f32.mrf.mxu0
        %1461 = vmatprep.mubr.bf16.mxu0 %v719
        %1462 = vmatmul.mubr.bf16.gmra.mxu0 %v703
        %v1463 = vpop.f32.mrf.mxu0
        %v1464 = vadd.f32 0.0, %v1463
        %v1465 = vpop.f32.mrf.mxu0
        %v1466 = vpop.f32.mrf.mxu0
        %v1467 = vadd.f32 0.0, %v1466
        %v1468 = vpop.f32.mrf.mxu0
        %1469 = vmatprep.mubr.bf16.mxu0 %v720
        %1470 = vmatmul.mubr.bf16.gmra.mxu0 %v704
        %v1471 = vpop.f32.mrf.mxu0
        %v1472 = vadd.f32 0.0, %v1471
        %v1473 = vpop.f32.mrf.mxu0
        %v1474 = vpop.f32.mrf.mxu0
        %v1475 = vadd.f32 0.0, %v1474
        %v1476 = vpop.f32.mrf.mxu0
        %1477 = vmatprep.mubr.bf16.mxu0 %v721
        %1478 = vmatmul.mubr.bf16.gmra.mxu0 %v705
        %v1479 = vpop.f32.mrf.mxu0
        %v1480 = vadd.f32 0.0, %v1479
        %v1481 = vpop.f32.mrf.mxu0
        %v1482 = vpop.f32.mrf.mxu0
        %v1483 = vadd.f32 0.0, %v1482
        %v1484 = vpop.f32.mrf.mxu0
        %1485 = vmatprep.mubr.bf16.mxu0 %v722
        %1486 = vmatmul.mubr.bf16.gmra.mxu0 %v706
        %v1487 = vpop.f32.mrf.mxu0
        %v1488 = vadd.f32 0.0, %v1487
        %v1489 = vpop.f32.mrf.mxu0
        %v1490 = vpop.f32.mrf.mxu0
        %v1491 = vadd.f32 0.0, %v1490
        %v1492 = vpop.f32.mrf.mxu0
        %1493 = vdwg.mxu0
        %1494 = vmatprep.subr.bf16.mxu0 0
        %1495 = vmatpush1.bf16.msra.mxu0 %v1292
        %1496 = vmatprep.subr.bf16.mxu0 0
        %1497 = vmatpush1.bf16.msra.mxu0 %v1291
        %1498 = vmatprep.subr.bf16.mxu0 0
        %1499 = vmatpush1.bf16.msra.mxu0 %v1290
        %1500 = vmatprep.subr.bf16.mxu0 0
        %1501 = vmatpush1.bf16.msra.mxu0 %v1289
        %1502 = vmatprep.subr.bf16.mxu0 0
        %1503 = vmatpush1.bf16.msra.mxu0 %v1288
        %1504 = vmatprep.subr.bf16.mxu0 0
        %1505 = vmatpush1.bf16.msra.mxu0 %v1287
        %1506 = vmatprep.subr.bf16.mxu0 0
        %1507 = vmatpush1.bf16.msra.mxu0 %v1286
        %1508 = vmatprep.subr.bf16.mxu0 0
        %1509 = vmatpush1.bf16.msra.mxu0 %v1285
        %1510 = vmatprep.subr.bf16.mxu0 0
        %1511 = vmatpush2.bf16.msra.mxu0 %v1300
        %1512 = vmatprep.subr.bf16.mxu0 0
        %1513 = vmatpush2.bf16.msra.mxu0 %v1299
        %1514 = vmatprep.subr.bf16.mxu0 0
        %1515 = vmatpush2.bf16.msra.mxu0 %v1298
        %1516 = vmatprep.subr.bf16.mxu0 0
        %1517 = vmatpush2.bf16.msra.mxu0 %v1297
        %1518 = vmatprep.subr.bf16.mxu0 0
        %1519 = vmatpush2.bf16.msra.mxu0 %v1296
        %1520 = vmatprep.subr.bf16.mxu0 0
        %1521 = vmatpush2.bf16.msra.mxu0 %v1295
        %1522 = vmatprep.subr.bf16.mxu0 0
        %1523 = vmatpush2.bf16.msra.mxu0 %v1294
        %1524 = vmatprep.subr.bf16.mxu0 0
        %1525 = vmatpush2.bf16.msra.mxu0 %v1293
        %1526 = vmatprep.mubr.bf16.mxu0 %v997
        %1527 = vmatmul.mubr.bf16.gmra.mxu0 %v852
        %v1528 = vpop.f32.mrf.mxu0
        %v1529 = vadd.f32 %v1368, %v1528
        %v1530 = vpop.f32.mrf.mxu0
        %v1531 = vpop.f32.mrf.mxu0
        %v1532 = vadd.f32 %v1371, %v1531
        %v1533 = vpop.f32.mrf.mxu0
        %1534 = vmatprep.mubr.bf16.mxu0 %v998
        %1535 = vmatmul.mubr.bf16.gmra.mxu0 %v853
        %v1536 = vpop.f32.mrf.mxu0
        %v1537 = vadd.f32 %v1376, %v1536
        %v1538 = vpop.f32.mrf.mxu0
        %v1539 = vpop.f32.mrf.mxu0
        %v1540 = vadd.f32 %v1379, %v1539
        %v1541 = vpop.f32.mrf.mxu0
        %1542 = vmatprep.mubr.bf16.mxu0 %v999
        %1543 = vmatmul.mubr.bf16.gmra.mxu0 %v854
        %v1544 = vpop.f32.mrf.mxu0
        %v1545 = vadd.f32 %v1384, %v1544
        %v1546 = vpop.f32.mrf.mxu0
        %v1547 = vpop.f32.mrf.mxu0
        %v1548 = vadd.f32 %v1387, %v1547
        %v1549 = vpop.f32.mrf.mxu0
        %1550 = vmatprep.mubr.bf16.mxu0 %v1000
        %1551 = vmatmul.mubr.bf16.gmra.mxu0 %v855
        %v1552 = vpop.f32.mrf.mxu0
        %v1553 = vadd.f32 %v1392, %v1552
        %v1554 = vpop.f32.mrf.mxu0
        %v1555 = vpop.f32.mrf.mxu0
        %v1556 = vadd.f32 %v1395, %v1555
        %v1557 = vpop.f32.mrf.mxu0
        %1558 = vmatprep.mubr.bf16.mxu0 %v1001
        %1559 = vmatmul.mubr.bf16.gmra.mxu0 %v856
        %v1560 = vpop.f32.mrf.mxu0
        %v1561 = vadd.f32 %v1400, %v1560
        %v1562 = vpop.f32.mrf.mxu0
        %v1563 = vpop.f32.mrf.mxu0
        %v1564 = vadd.f32 %v1403, %v1563
        %v1565 = vpop.f32.mrf.mxu0
        %1566 = vmatprep.mubr.bf16.mxu0 %v1002
        %1567 = vmatmul.mubr.bf16.gmra.mxu0 %v857
        %v1568 = vpop.f32.mrf.mxu0
        %v1569 = vadd.f32 %v1408, %v1568
        %v1570 = vpop.f32.mrf.mxu0
        %v1571 = vpop.f32.mrf.mxu0
        %v1572 = vadd.f32 %v1411, %v1571
        %v1573 = vpop.f32.mrf.mxu0
        %1574 = vmatprep.mubr.bf16.mxu0 %v1003
        %1575 = vmatmul.mubr.bf16.gmra.mxu0 %v858
        %v1576 = vpop.f32.mrf.mxu0
        %v1577 = vadd.f32 %v1416, %v1576
        %v1578 = vpop.f32.mrf.mxu0
        %v1579 = vpop.f32.mrf.mxu0
        %v1580 = vadd.f32 %v1419, %v1579
        %v1581 = vpop.f32.mrf.mxu0
        %1582 = vmatprep.mubr.bf16.mxu0 %v1004
        %1583 = vmatmul.mubr.bf16.gmra.mxu0 %v859
        %v1584 = vpop.f32.mrf.mxu0
        %v1585 = vadd.f32 %v1424, %v1584
        %v1586 = vpop.f32.mrf.mxu0
        %v1587 = vpop.f32.mrf.mxu0
        %v1588 = vadd.f32 %v1427, %v1587
        %v1589 = vpop.f32.mrf.mxu0
        %1590 = vmatprep.mubr.bf16.mxu0 %v1005
        %1591 = vmatmul.mubr.bf16.gmra.mxu0 %v860
        %v1592 = vpop.f32.mrf.mxu0
        %v1593 = vadd.f32 %v1432, %v1592
        %v1594 = vpop.f32.mrf.mxu0
        %v1595 = vpop.f32.mrf.mxu0
        %v1596 = vadd.f32 %v1435, %v1595
        %v1597 = vpop.f32.mrf.mxu0
        %1598 = vmatprep.mubr.bf16.mxu0 %v1006
        %1599 = vmatmul.mubr.bf16.gmra.mxu0 %v861
        %v1600 = vpop.f32.mrf.mxu0
        %v1601 = vadd.f32 %v1440, %v1600
        %v1602 = vpop.f32.mrf.mxu0
        %v1603 = vpop.f32.mrf.mxu0
        %v1604 = vadd.f32 %v1443, %v1603
        %v1605 = vpop.f32.mrf.mxu0
        %1606 = vmatprep.mubr.bf16.mxu0 %v1007
        %1607 = vmatmul.mubr.bf16.gmra.mxu0 %v862
        %v1608 = vpop.f32.mrf.mxu0
        %v1609 = vadd.f32 %v1448, %v1608
        %v1610 = vpop.f32.mrf.mxu0
        %v1611 = vpop.f32.mrf.mxu0
        %v1612 = vadd.f32 %v1451, %v1611
        %v1613 = vpop.f32.mrf.mxu0
        %1614 = vmatprep.mubr.bf16.mxu0 %v1008
        %1615 = vmatmul.mubr.bf16.gmra.mxu0 %v863
        %v1616 = vpop.f32.mrf.mxu0
        %v1617 = vadd.f32 %v1456, %v1616
        %v1618 = vpop.f32.mrf.mxu0
        %v1619 = vpop.f32.mrf.mxu0
        %v1620 = vadd.f32 %v1459, %v1619
        %v1621 = vpop.f32.mrf.mxu0
        %1622 = vmatprep.mubr.bf16.mxu0 %v1009
        %1623 = vmatmul.mubr.bf16.gmra.mxu0 %v864
        %v1624 = vpop.f32.mrf.mxu0
        %v1625 = vadd.f32 %v1464, %v1624
        %v1626 = vpop.f32.mrf.mxu0
        %v1627 = vpop.f32.mrf.mxu0
        %v1628 = vadd.f32 %v1467, %v1627
        %v1629 = vpop.f32.mrf.mxu0
        %1630 = vmatprep.mubr.bf16.mxu0 %v1010
        %1631 = vmatmul.mubr.bf16.gmra.mxu0 %v865
        %v1632 = vpop.f32.mrf.mxu0
        %v1633 = vadd.f32 %v1472, %v1632
        %v1634 = vpop.f32.mrf.mxu0
        %v1635 = vpop.f32.mrf.mxu0
        %v1636 = vadd.f32 %v1475, %v1635
        %v1637 = vpop.f32.mrf.mxu0
        %1638 = vmatprep.mubr.bf16.mxu0 %v1011
        %1639 = vmatmul.mubr.bf16.gmra.mxu0 %v866
        %v1640 = vpop.f32.mrf.mxu0
        %v1641 = vadd.f32 %v1480, %v1640
        %v1642 = vpop.f32.mrf.mxu0
        %v1643 = vpop.f32.mrf.mxu0
        %v1644 = vadd.f32 %v1483, %v1643
        %v1645 = vpop.f32.mrf.mxu0
        %1646 = vmatprep.mubr.bf16.mxu0 %v1012
        %1647 = vmatmul.mubr.bf16.gmra.mxu0 %v867
        %v1648 = vpop.f32.mrf.mxu0
        %v1649 = vadd.f32 %v1488, %v1648
        %v1650 = vpop.f32.mrf.mxu0
        %v1651 = vpop.f32.mrf.mxu0
        %v1652 = vadd.f32 %v1491, %v1651
        %v1653 = vpop.f32.mrf.mxu0
        %1654 = vdwg.mxu0
        %v1719 = vunpack.c.l.b16 %v1013
        %v1720 = vunpack.c.l.b16 %v1014
        %v1721 = vunpack.c.l.b16 %v1015
        %v1722 = vunpack.c.l.b16 %v1016
        %v1723 = vunpack.c.l.b16 %v1017
        %v1724 = vunpack.c.l.b16 %v1018
        %v1725 = vunpack.c.l.b16 %v1019
        %v1726 = vunpack.c.l.b16 %v1020
        %v1727 = vunpack.c.l.b16 %v1021
        %v1728 = vunpack.c.l.b16 %v1022
        %v1729 = vunpack.c.l.b16 %v1023
        %v1730 = vunpack.c.l.b16 %v1024
        %v1731 = vunpack.c.l.b16 %v1025
        %v1732 = vunpack.c.l.b16 %v1026
        %v1733 = vunpack.c.l.b16 %v1027
        %v1734 = vunpack.c.l.b16 %v1028
        %v1735 = vunpack.c.l.b16 %v1029
        %v1736 = vunpack.c.l.b16 %v1030
        %v1737 = vunpack.c.l.b16 %v1031
        %v1738 = vunpack.c.l.b16 %v1032
        %v1739 = vunpack.c.l.b16 %v1033
        %v1740 = vunpack.c.l.b16 %v1034
        %v1741 = vunpack.c.l.b16 %v1035
        %v1742 = vunpack.c.l.b16 %v1036
        %v1743 = vunpack.c.l.b16 %v1037
        %v1744 = vunpack.c.l.b16 %v1038
        %v1745 = vunpack.c.l.b16 %v1039
        %v1746 = vunpack.c.l.b16 %v1040
        %v1747 = vunpack.c.l.b16 %v1041
        %v1748 = vunpack.c.l.b16 %v1042
        %v1749 = vunpack.c.l.b16 %v1043
        %v1750 = vunpack.c.l.b16 %v1044
        %v1751 = vunpack.c.l.b16 %v1045
        %v1752 = vunpack.c.l.b16 %v1046
        %v1753 = vunpack.c.l.b16 %v1047
        %v1754 = vunpack.c.l.b16 %v1048
        %v1755 = vunpack.c.l.b16 %v1049
        %v1756 = vunpack.c.l.b16 %v1050
        %v1757 = vunpack.c.l.b16 %v1051
        %v1758 = vunpack.c.l.b16 %v1052
        %v1759 = vunpack.c.l.b16 %v1053
        %v1760 = vunpack.c.l.b16 %v1054
        %v1761 = vunpack.c.l.b16 %v1055
        %v1762 = vunpack.c.l.b16 %v1056
        %v1763 = vunpack.c.l.b16 %v1057
        %v1764 = vunpack.c.l.b16 %v1058
        %v1765 = vunpack.c.l.b16 %v1059
        %v1766 = vunpack.c.l.b16 %v1060
        %v1767 = vunpack.c.l.b16 %v1061
        %v1768 = vunpack.c.l.b16 %v1062
        %v1769 = vunpack.c.l.b16 %v1063
        %v1770 = vunpack.c.l.b16 %v1064
        %v1771 = vunpack.c.l.b16 %v1065
        %v1772 = vunpack.c.l.b16 %v1066
        %v1773 = vunpack.c.l.b16 %v1067
        %v1774 = vunpack.c.l.b16 %v1068
        %v1775 = vunpack.c.l.b16 %v1069
        %v1776 = vunpack.c.l.b16 %v1070
        %v1777 = vunpack.c.l.b16 %v1071
        %v1778 = vunpack.c.l.b16 %v1072
        %v1779 = vunpack.c.l.b16 %v1073
        %v1780 = vunpack.c.l.b16 %v1074
        %v1781 = vunpack.c.l.b16 %v1075
        %v1782 = vunpack.c.l.b16 %v1076
        %v1783 = vpack.c.b16 %v1720, %v1719
        %v1784 = vpack.c.b16 %v1722, %v1721
        %v1785 = vpack.c.b16 %v1724, %v1723
        %v1786 = vpack.c.b16 %v1726, %v1725
        %v1787 = vpack.c.b16 %v1728, %v1727
        %v1788 = vpack.c.b16 %v1730, %v1729
        %v1789 = vpack.c.b16 %v1732, %v1731
        %v1790 = vpack.c.b16 %v1734, %v1733
        %v1791 = vpack.c.b16 %v1736, %v1735
        %v1792 = vpack.c.b16 %v1738, %v1737
        %v1793 = vpack.c.b16 %v1740, %v1739
        %v1794 = vpack.c.b16 %v1742, %v1741
        %v1795 = vpack.c.b16 %v1744, %v1743
        %v1796 = vpack.c.b16 %v1746, %v1745
        %v1797 = vpack.c.b16 %v1748, %v1747
        %v1798 = vpack.c.b16 %v1750, %v1749
        %v1799 = vpack.c.b16 %v1752, %v1751
        %v1800 = vpack.c.b16 %v1754, %v1753
        %v1801 = vpack.c.b16 %v1756, %v1755
        %v1802 = vpack.c.b16 %v1758, %v1757
        %v1803 = vpack.c.b16 %v1760, %v1759
        %v1804 = vpack.c.b16 %v1762, %v1761
        %v1805 = vpack.c.b16 %v1764, %v1763
        %v1806 = vpack.c.b16 %v1766, %v1765
        %v1807 = vpack.c.b16 %v1768, %v1767
        %v1808 = vpack.c.b16 %v1770, %v1769
        %v1809 = vpack.c.b16 %v1772, %v1771
        %v1810 = vpack.c.b16 %v1774, %v1773
        %v1811 = vpack.c.b16 %v1776, %v1775
        %v1812 = vpack.c.b16 %v1778, %v1777
        %v1813 = vpack.c.b16 %v1780, %v1779
        %v1814 = vpack.c.b16 %v1782, %v1781
        %1847 = vmatprep.subr.bf16.mxu0 0
        %1848 = vmatpush1.bf16.msra.mxu0 %v1790
        %1849 = vmatprep.subr.bf16.mxu0 0
        %1850 = vmatpush1.bf16.msra.mxu0 %v1789
        %1851 = vmatprep.subr.bf16.mxu0 0
        %1852 = vmatpush1.bf16.msra.mxu0 %v1788
        %1853 = vmatprep.subr.bf16.mxu0 0
        %1854 = vmatpush1.bf16.msra.mxu0 %v1787
        %1855 = vmatprep.subr.bf16.mxu0 0
        %1856 = vmatpush1.bf16.msra.mxu0 %v1786
        %1857 = vmatprep.subr.bf16.mxu0 0
        %1858 = vmatpush1.bf16.msra.mxu0 %v1785
        %1859 = vmatprep.subr.bf16.mxu0 0
        %1860 = vmatpush1.bf16.msra.mxu0 %v1784
        %1861 = vmatprep.subr.bf16.mxu0 0
        %1862 = vmatpush1.bf16.msra.mxu0 %v1783
        %1863 = vmatprep.subr.bf16.mxu0 0
        %1864 = vmatpush2.bf16.msra.mxu0 %v1798
        %1865 = vmatprep.subr.bf16.mxu0 0
        %1866 = vmatpush2.bf16.msra.mxu0 %v1797
        %1867 = vmatprep.subr.bf16.mxu0 0
        %1868 = vmatpush2.bf16.msra.mxu0 %v1796
        %1869 = vmatprep.subr.bf16.mxu0 0
        %1870 = vmatpush2.bf16.msra.mxu0 %v1795
        %1871 = vmatprep.subr.bf16.mxu0 0
        %1872 = vmatpush2.bf16.msra.mxu0 %v1794
        %1873 = vmatprep.subr.bf16.mxu0 0
        %1874 = vmatpush2.bf16.msra.mxu0 %v1793
        %1875 = vmatprep.subr.bf16.mxu0 0
        %1876 = vmatpush2.bf16.msra.mxu0 %v1792
        %1877 = vmatprep.subr.bf16.mxu0 0
        %1878 = vmatpush2.bf16.msra.mxu0 %v1791
        %1879 = vmatprep.mubr.bf16.mxu0 0
        %1880 = vmatmul.mubr.bf16.gmra.mxu0 0
        %v1881 = vpop.f32.mrf.mxu0
        %v1882 = vadd.f32 %v1529, %v1881
        %v1883 = vpop.f32.mrf.mxu0
        %v1884 = vpop.f32.mrf.mxu0
        %v1885 = vadd.f32 %v1532, %v1884
        %v1886 = vpop.f32.mrf.mxu0
        %1887 = vmatprep.mubr.bf16.mxu0 %v707
        %1888 = vmatmul.mubr.bf16.gmra.mxu0 %v691
        %v1889 = vpop.f32.mrf.mxu0
        %v1890 = vadd.f32 %v1537, %v1889
        %v1891 = vpop.f32.mrf.mxu0
        %v1892 = vpop.f32.mrf.mxu0
        %v1893 = vadd.f32 %v1540, %v1892
        %v1894 = vpop.f32.mrf.mxu0
        %1895 = vmatprep.mubr.bf16.mxu0 %v708
        %1896 = vmatmul.mubr.bf16.gmra.mxu0 %v692
        %v1897 = vpop.f32.mrf.mxu0
        %v1898 = vadd.f32 %v1545, %v1897
        %v1899 = vpop.f32.mrf.mxu0
        %v1900 = vpop.f32.mrf.mxu0
        %v1901 = vadd.f32 %v1548, %v1900
        %v1902 = vpop.f32.mrf.mxu0
        %1903 = vmatprep.mubr.bf16.mxu0 %v709
        %1904 = vmatmul.mubr.bf16.gmra.mxu0 %v693
        %v1905 = vpop.f32.mrf.mxu0
        %v1906 = vadd.f32 %v1553, %v1905
        %v1907 = vpop.f32.mrf.mxu0
        %v1908 = vpop.f32.mrf.mxu0
        %v1909 = vadd.f32 %v1556, %v1908
        %v1910 = vpop.f32.mrf.mxu0
        %1911 = vmatprep.mubr.bf16.mxu0 %v710
        %1912 = vmatmul.mubr.bf16.gmra.mxu0 %v694
        %v1913 = vpop.f32.mrf.mxu0
        %v1914 = vadd.f32 %v1561, %v1913
        %v1915 = vpop.f32.mrf.mxu0
        %v1916 = vpop.f32.mrf.mxu0
        %v1917 = vadd.f32 %v1564, %v1916
        %v1918 = vpop.f32.mrf.mxu0
        %1919 = vmatprep.mubr.bf16.mxu0 %v711
        %1920 = vmatmul.mubr.bf16.gmra.mxu0 %v695
        %v1921 = vpop.f32.mrf.mxu0
        %v1922 = vadd.f32 %v1569, %v1921
        %v1923 = vpop.f32.mrf.mxu0
        %v1924 = vpop.f32.mrf.mxu0
        %v1925 = vadd.f32 %v1572, %v1924
        %v1926 = vpop.f32.mrf.mxu0
        %1927 = vmatprep.mubr.bf16.mxu0 %v712
        %1928 = vmatmul.mubr.bf16.gmra.mxu0 %v696
        %v1929 = vpop.f32.mrf.mxu0
        %v1930 = vadd.f32 %v1577, %v1929
        %v1931 = vpop.f32.mrf.mxu0
        %v1932 = vpop.f32.mrf.mxu0
        %v1933 = vadd.f32 %v1580, %v1932
        %v1934 = vpop.f32.mrf.mxu0
        %1935 = vmatprep.mubr.bf16.mxu0 %v713
        %1936 = vmatmul.mubr.bf16.gmra.mxu0 %v697
        %v1937 = vpop.f32.mrf.mxu0
        %v1938 = vadd.f32 %v1585, %v1937
        %v1939 = vpop.f32.mrf.mxu0
        %v1940 = vpop.f32.mrf.mxu0
        %v1941 = vadd.f32 %v1588, %v1940
        %v1942 = vpop.f32.mrf.mxu0
        %1943 = vmatprep.mubr.bf16.mxu0 %v714
        %1944 = vmatmul.mubr.bf16.gmra.mxu0 %v698
        %v1945 = vpop.f32.mrf.mxu0
        %v1946 = vadd.f32 %v1593, %v1945
        %v1947 = vpop.f32.mrf.mxu0
        %v1948 = vpop.f32.mrf.mxu0
        %v1949 = vadd.f32 %v1596, %v1948
        %v1950 = vpop.f32.mrf.mxu0
        %1951 = vmatprep.mubr.bf16.mxu0 %v715
        %1952 = vmatmul.mubr.bf16.gmra.mxu0 %v699
        %v1953 = vpop.f32.mrf.mxu0
        %v1954 = vadd.f32 %v1601, %v1953
        %v1955 = vpop.f32.mrf.mxu0
        %v1956 = vpop.f32.mrf.mxu0
        %v1957 = vadd.f32 %v1604, %v1956
        %v1958 = vpop.f32.mrf.mxu0
        %1959 = vmatprep.mubr.bf16.mxu0 %v716
        %1960 = vmatmul.mubr.bf16.gmra.mxu0 %v700
        %v1961 = vpop.f32.mrf.mxu0
        %v1962 = vadd.f32 %v1609, %v1961
        %v1963 = vpop.f32.mrf.mxu0
        %v1964 = vpop.f32.mrf.mxu0
        %v1965 = vadd.f32 %v1612, %v1964
        %v1966 = vpop.f32.mrf.mxu0
        %1967 = vmatprep.mubr.bf16.mxu0 %v717
        %1968 = vmatmul.mubr.bf16.gmra.mxu0 %v701
        %v1969 = vpop.f32.mrf.mxu0
        %v1970 = vadd.f32 %v1617, %v1969
        %v1971 = vpop.f32.mrf.mxu0
        %v1972 = vpop.f32.mrf.mxu0
        %v1973 = vadd.f32 %v1620, %v1972
        %v1974 = vpop.f32.mrf.mxu0
        %1975 = vmatprep.mubr.bf16.mxu0 %v718
        %1976 = vmatmul.mubr.bf16.gmra.mxu0 %v702
        %v1977 = vpop.f32.mrf.mxu0
        %v1978 = vadd.f32 %v1625, %v1977
        %v1979 = vpop.f32.mrf.mxu0
        %v1980 = vpop.f32.mrf.mxu0
        %v1981 = vadd.f32 %v1628, %v1980
        %v1982 = vpop.f32.mrf.mxu0
        %1983 = vmatprep.mubr.bf16.mxu0 %v719
        %1984 = vmatmul.mubr.bf16.gmra.mxu0 %v703
        %v1985 = vpop.f32.mrf.mxu0
        %v1986 = vadd.f32 %v1633, %v1985
        %v1987 = vpop.f32.mrf.mxu0
        %v1988 = vpop.f32.mrf.mxu0
        %v1989 = vadd.f32 %v1636, %v1988
        %v1990 = vpop.f32.mrf.mxu0
        %1991 = vmatprep.mubr.bf16.mxu0 %v720
        %1992 = vmatmul.mubr.bf16.gmra.mxu0 %v704
        %v1993 = vpop.f32.mrf.mxu0
        %v1994 = vadd.f32 %v1641, %v1993
        %v1995 = vpop.f32.mrf.mxu0
        %v1996 = vpop.f32.mrf.mxu0
        %v1997 = vadd.f32 %v1644, %v1996
        %v1998 = vpop.f32.mrf.mxu0
        %1999 = vmatprep.mubr.bf16.mxu0 %v721
        %2000 = vmatmul.mubr.bf16.gmra.mxu0 %v705
        %v2001 = vpop.f32.mrf.mxu0
        %v2002 = vadd.f32 %v1649, %v2001
        %v2003 = vpop.f32.mrf.mxu0
        %v2004 = vpop.f32.mrf.mxu0
        %v2005 = vadd.f32 %v1652, %v2004
        %v2006 = vpop.f32.mrf.mxu0
        %2007 = vdwg.mxu0
        %2008 = vmatprep.subr.bf16.mxu0 0
        %2009 = vmatpush1.bf16.msra.mxu0 %v1806
        %2010 = vmatprep.subr.bf16.mxu0 0
        %2011 = vmatpush1.bf16.msra.mxu0 %v1805
        %2012 = vmatprep.subr.bf16.mxu0 0
        %2013 = vmatpush1.bf16.msra.mxu0 %v1804
        %2014 = vmatprep.subr.bf16.mxu0 0
        %2015 = vmatpush1.bf16.msra.mxu0 %v1803
        %2016 = vmatprep.subr.bf16.mxu0 0
        %2017 = vmatpush1.bf16.msra.mxu0 %v1802
        %2018 = vmatprep.subr.bf16.mxu0 0
        %2019 = vmatpush1.bf16.msra.mxu0 %v1801
        %2020 = vmatprep.subr.bf16.mxu0 0
        %2021 = vmatpush1.bf16.msra.mxu0 %v1800
        %2022 = vmatprep.subr.bf16.mxu0 0
        %2023 = vmatpush1.bf16.msra.mxu0 %v1799
        %2024 = vmatprep.subr.bf16.mxu0 0
        %2025 = vmatpush2.bf16.msra.mxu0 %v1814
        %2026 = vmatprep.subr.bf16.mxu0 0
        %2027 = vmatpush2.bf16.msra.mxu0 %v1813
        %2028 = vmatprep.subr.bf16.mxu0 0
        %2029 = vmatpush2.bf16.msra.mxu0 %v1812
        %2030 = vmatprep.subr.bf16.mxu0 0
        %2031 = vmatpush2.bf16.msra.mxu0 %v1811
        %2032 = vmatprep.subr.bf16.mxu0 0
        %2033 = vmatpush2.bf16.msra.mxu0 %v1810
        %2034 = vmatprep.subr.bf16.mxu0 0
        %2035 = vmatpush2.bf16.msra.mxu0 %v1809
        %2036 = vmatprep.subr.bf16.mxu0 0
        %2037 = vmatpush2.bf16.msra.mxu0 %v1808
        %2038 = vmatprep.subr.bf16.mxu0 0
        %2039 = vmatpush2.bf16.msra.mxu0 %v1807
        %2040 = vmatprep.mubr.bf16.mxu0 0
        %2041 = vmatmul.mubr.bf16.gmra.mxu0 0
        %v2042 = vpop.f32.mrf.mxu0
        %v2043 = vadd.f32 %v1882, %v2042
        %v2044 = vpop.f32.mrf.mxu0
        %v2045 = vpop.f32.mrf.mxu0
        %v2046 = vadd.f32 %v1885, %v2045
        %v2047 = vpop.f32.mrf.mxu0
        %2048 = vmatprep.mubr.bf16.mxu0 %v997
        %2049 = vmatmul.mubr.bf16.gmra.mxu0 %v852
        %v2050 = vpop.f32.mrf.mxu0
        %v2051 = vadd.f32 %v1890, %v2050
        %v2052 = vpop.f32.mrf.mxu0
        %v2053 = vpop.f32.mrf.mxu0
        %v2054 = vadd.f32 %v1893, %v2053
        %v2055 = vpop.f32.mrf.mxu0
        %2056 = vmatprep.mubr.bf16.mxu0 %v998
        %2057 = vmatmul.mubr.bf16.gmra.mxu0 %v853
        %v2058 = vpop.f32.mrf.mxu0
        %v2059 = vadd.f32 %v1898, %v2058
        %v2060 = vpop.f32.mrf.mxu0
        %v2061 = vpop.f32.mrf.mxu0
        %v2062 = vadd.f32 %v1901, %v2061
        %v2063 = vpop.f32.mrf.mxu0
        %2064 = vmatprep.mubr.bf16.mxu0 %v999
        %2065 = vmatmul.mubr.bf16.gmra.mxu0 %v854
        %v2066 = vpop.f32.mrf.mxu0
        %v2067 = vadd.f32 %v1906, %v2066
        %v2068 = vpop.f32.mrf.mxu0
        %v2069 = vpop.f32.mrf.mxu0
        %v2070 = vadd.f32 %v1909, %v2069
        %v2071 = vpop.f32.mrf.mxu0
        %2072 = vmatprep.mubr.bf16.mxu0 %v1000
        %2073 = vmatmul.mubr.bf16.gmra.mxu0 %v855
        %v2074 = vpop.f32.mrf.mxu0
        %v2075 = vadd.f32 %v1914, %v2074
        %v2076 = vpop.f32.mrf.mxu0
        %v2077 = vpop.f32.mrf.mxu0
        %v2078 = vadd.f32 %v1917, %v2077
        %v2079 = vpop.f32.mrf.mxu0
        %2080 = vmatprep.mubr.bf16.mxu0 %v1001
        %2081 = vmatmul.mubr.bf16.gmra.mxu0 %v856
        %v2082 = vpop.f32.mrf.mxu0
        %v2083 = vadd.f32 %v1922, %v2082
        %v2084 = vpop.f32.mrf.mxu0
        %v2085 = vpop.f32.mrf.mxu0
        %v2086 = vadd.f32 %v1925, %v2085
        %v2087 = vpop.f32.mrf.mxu0
        %2088 = vmatprep.mubr.bf16.mxu0 %v1002
        %2089 = vmatmul.mubr.bf16.gmra.mxu0 %v857
        %v2090 = vpop.f32.mrf.mxu0
        %v2091 = vadd.f32 %v1930, %v2090
        %v2092 = vpop.f32.mrf.mxu0
        %v2093 = vpop.f32.mrf.mxu0
        %v2094 = vadd.f32 %v1933, %v2093
        %v2095 = vpop.f32.mrf.mxu0
        %2096 = vmatprep.mubr.bf16.mxu0 %v1003
        %2097 = vmatmul.mubr.bf16.gmra.mxu0 %v858
        %v2098 = vpop.f32.mrf.mxu0
        %v2099 = vadd.f32 %v1938, %v2098
        %v2100 = vpop.f32.mrf.mxu0
        %v2101 = vpop.f32.mrf.mxu0
        %v2102 = vadd.f32 %v1941, %v2101
        %v2103 = vpop.f32.mrf.mxu0
        %2104 = vmatprep.mubr.bf16.mxu0 %v1004
        %2105 = vmatmul.mubr.bf16.gmra.mxu0 %v859
        %v2106 = vpop.f32.mrf.mxu0
        %v2107 = vadd.f32 %v1946, %v2106
        %v2108 = vpop.f32.mrf.mxu0
        %v2109 = vpop.f32.mrf.mxu0
        %v2110 = vadd.f32 %v1949, %v2109
        %v2111 = vpop.f32.mrf.mxu0
        %2112 = vmatprep.mubr.bf16.mxu0 %v1005
        %2113 = vmatmul.mubr.bf16.gmra.mxu0 %v860
        %v2114 = vpop.f32.mrf.mxu0
        %v2115 = vadd.f32 %v1954, %v2114
        %v2116 = vpop.f32.mrf.mxu0
        %v2117 = vpop.f32.mrf.mxu0
        %v2118 = vadd.f32 %v1957, %v2117
        %v2119 = vpop.f32.mrf.mxu0
        %2120 = vmatprep.mubr.bf16.mxu0 %v1006
        %2121 = vmatmul.mubr.bf16.gmra.mxu0 %v861
        %v2122 = vpop.f32.mrf.mxu0
        %v2123 = vadd.f32 %v1962, %v2122
        %v2124 = vpop.f32.mrf.mxu0
        %v2125 = vpop.f32.mrf.mxu0
        %v2126 = vadd.f32 %v1965, %v2125
        %v2127 = vpop.f32.mrf.mxu0
        %2128 = vmatprep.mubr.bf16.mxu0 %v1007
        %2129 = vmatmul.mubr.bf16.gmra.mxu0 %v862
        %v2130 = vpop.f32.mrf.mxu0
        %v2131 = vadd.f32 %v1970, %v2130
        %v2132 = vpop.f32.mrf.mxu0
        %v2133 = vpop.f32.mrf.mxu0
        %v2134 = vadd.f32 %v1973, %v2133
        %v2135 = vpop.f32.mrf.mxu0
        %2136 = vmatprep.mubr.bf16.mxu0 %v1008
        %2137 = vmatmul.mubr.bf16.gmra.mxu0 %v863
        %v2138 = vpop.f32.mrf.mxu0
        %v2139 = vadd.f32 %v1978, %v2138
        %v2140 = vpop.f32.mrf.mxu0
        %v2141 = vpop.f32.mrf.mxu0
        %v2142 = vadd.f32 %v1981, %v2141
        %v2143 = vpop.f32.mrf.mxu0
        %2144 = vmatprep.mubr.bf16.mxu0 %v1009
        %2145 = vmatmul.mubr.bf16.gmra.mxu0 %v864
        %v2146 = vpop.f32.mrf.mxu0
        %v2147 = vadd.f32 %v1986, %v2146
        %v2148 = vpop.f32.mrf.mxu0
        %v2149 = vpop.f32.mrf.mxu0
        %v2150 = vadd.f32 %v1989, %v2149
        %v2151 = vpop.f32.mrf.mxu0
        %2152 = vmatprep.mubr.bf16.mxu0 %v1010
        %2153 = vmatmul.mubr.bf16.gmra.mxu0 %v865
        %v2154 = vpop.f32.mrf.mxu0
        %v2155 = vadd.f32 %v1994, %v2154
        %v2156 = vpop.f32.mrf.mxu0
        %v2157 = vpop.f32.mrf.mxu0
        %v2158 = vadd.f32 %v1997, %v2157
        %v2159 = vpop.f32.mrf.mxu0
        %2160 = vmatprep.mubr.bf16.mxu0 %v1011
        %2161 = vmatmul.mubr.bf16.gmra.mxu0 %v866
        %v2162 = vpop.f32.mrf.mxu0
        %v2163 = vadd.f32 %v2002, %v2162
        %v2164 = vpop.f32.mrf.mxu0
        %v2165 = vpop.f32.mrf.mxu0
        %v2166 = vadd.f32 %v2005, %v2165
        %v2167 = vpop.f32.mrf.mxu0
        %2168 = vdwg.mxu0
        %v2169 = vld [vmem:[#allocation5 + $0x200] sm:$0xf]
        %v2170 = vld [vmem:[#allocation5 + $0x204] sm:$0xf]
        %v2171 = vld [vmem:[#allocation5 + $0x208] sm:$0xf]
        %v2172 = vld [vmem:[#allocation5 + $0x20c] sm:$0xf]
        %v2173 = vld [vmem:[#allocation5 + $0x210] sm:$0xf]
        %v2174 = vld [vmem:[#allocation5 + $0x214] sm:$0xf]
        %v2175 = vld [vmem:[#allocation5 + $0x218] sm:$0xf]
        %v2176 = vld [vmem:[#allocation5 + $0x21c] sm:$0xf]
        %v2177 = vld [vmem:[#allocation5 + $0x220] sm:$0xf]
        %v2178 = vld [vmem:[#allocation5 + $0x224] sm:$0xf]
        %v2179 = vld [vmem:[#allocation5 + $0x228] sm:$0xf]
        %v2180 = vld [vmem:[#allocation5 + $0x22c] sm:$0xf]
        %v2181 = vld [vmem:[#allocation5 + $0x230] sm:$0xf]
        %v2182 = vld [vmem:[#allocation5 + $0x234] sm:$0xf]
        %v2183 = vld [vmem:[#allocation5 + $0x238] sm:$0xf]
        %v2184 = vld [vmem:[#allocation5 + $0x23c] sm:$0xf]
        %v2185 = vld [vmem:[#allocation5 + $0x240] sm:$0xf]
        %v2186 = vld [vmem:[#allocation5 + $0x244] sm:$0xf]
        %v2187 = vld [vmem:[#allocation5 + $0x248] sm:$0xf]
        %v2188 = vld [vmem:[#allocation5 + $0x24c] sm:$0xf]
        %v2189 = vld [vmem:[#allocation5 + $0x250] sm:$0xf]
        %v2190 = vld [vmem:[#allocation5 + $0x254] sm:$0xf]
        %v2191 = vld [vmem:[#allocation5 + $0x258] sm:$0xf]
        %v2192 = vld [vmem:[#allocation5 + $0x25c] sm:$0xf]
        %v2193 = vld [vmem:[#allocation5 + $0x260] sm:$0xf]
        %v2194 = vld [vmem:[#allocation5 + $0x264] sm:$0xf]
        %v2195 = vld [vmem:[#allocation5 + $0x268] sm:$0xf]
        %v2196 = vld [vmem:[#allocation5 + $0x26c] sm:$0xf]
        %v2197 = vld [vmem:[#allocation5 + $0x270] sm:$0xf]
        %v2198 = vld [vmem:[#allocation5 + $0x274] sm:$0xf]
        %v2199 = vld [vmem:[#allocation5 + $0x278] sm:$0xf]
        %v2200 = vld [vmem:[#allocation5 + $0x27c] sm:$0xf]
        %v2201 = vld [vmem:[#allocation5 + $0x280] sm:$0xf]
        %v2202 = vld [vmem:[#allocation5 + $0x284] sm:$0xf]
        %v2203 = vld [vmem:[#allocation5 + $0x288] sm:$0xf]
        %v2204 = vld [vmem:[#allocation5 + $0x28c] sm:$0xf]
        %v2205 = vld [vmem:[#allocation5 + $0x290] sm:$0xf]
        %v2206 = vld [vmem:[#allocation5 + $0x294] sm:$0xf]
        %v2207 = vld [vmem:[#allocation5 + $0x298] sm:$0xf]
        %v2208 = vld [vmem:[#allocation5 + $0x29c] sm:$0xf]
        %v2209 = vld [vmem:[#allocation5 + $0x2a0] sm:$0xf]
        %v2210 = vld [vmem:[#allocation5 + $0x2a4] sm:$0xf]
        %v2211 = vld [vmem:[#allocation5 + $0x2a8] sm:$0xf]
        %v2212 = vld [vmem:[#allocation5 + $0x2ac] sm:$0xf]
        %v2213 = vld [vmem:[#allocation5 + $0x2b0] sm:$0xf]
        %v2214 = vld [vmem:[#allocation5 + $0x2b4] sm:$0xf]
        %v2215 = vld [vmem:[#allocation5 + $0x2b8] sm:$0xf]
        %v2216 = vld [vmem:[#allocation5 + $0x2bc] sm:$0xf]
        %v2217 = vld [vmem:[#allocation5 + $0x2c0] sm:$0xf]
        %v2218 = vld [vmem:[#allocation5 + $0x2c4] sm:$0xf]
        %v2219 = vld [vmem:[#allocation5 + $0x2c8] sm:$0xf]
        %v2220 = vld [vmem:[#allocation5 + $0x2cc] sm:$0xf]
        %v2221 = vld [vmem:[#allocation5 + $0x2d0] sm:$0xf]
        %v2222 = vld [vmem:[#allocation5 + $0x2d4] sm:$0xf]
        %v2223 = vld [vmem:[#allocation5 + $0x2d8] sm:$0xf]
        %v2224 = vld [vmem:[#allocation5 + $0x2dc] sm:$0xf]
        %v2225 = vld [vmem:[#allocation5 + $0x2e0] sm:$0xf]
        %v2226 = vld [vmem:[#allocation5 + $0x2e4] sm:$0xf]
        %v2227 = vld [vmem:[#allocation5 + $0x2e8] sm:$0xf]
        %v2228 = vld [vmem:[#allocation5 + $0x2ec] sm:$0xf]
        %v2229 = vld [vmem:[#allocation5 + $0x2f0] sm:$0xf]
        %v2230 = vld [vmem:[#allocation5 + $0x2f4] sm:$0xf]
        %v2231 = vld [vmem:[#allocation5 + $0x2f8] sm:$0xf]
        %v2232 = vld [vmem:[#allocation5 + $0x2fc] sm:$0xf]
        %v2297 = vunpack.c.l.b16 %v2169
        %v2298 = vunpack.c.l.b16 %v2170
        %v2299 = vunpack.c.l.b16 %v2171
        %v2300 = vunpack.c.l.b16 %v2172
        %v2301 = vunpack.c.l.b16 %v2173
        %v2302 = vunpack.c.l.b16 %v2174
        %v2303 = vunpack.c.l.b16 %v2175
        %v2304 = vunpack.c.l.b16 %v2176
        %v2305 = vunpack.c.l.b16 %v2177
        %v2306 = vunpack.c.l.b16 %v2178
        %v2307 = vunpack.c.l.b16 %v2179
        %v2308 = vunpack.c.l.b16 %v2180
        %v2309 = vunpack.c.l.b16 %v2181
        %v2310 = vunpack.c.l.b16 %v2182
        %v2311 = vunpack.c.l.b16 %v2183
        %v2312 = vunpack.c.l.b16 %v2184
        %v2313 = vunpack.c.l.b16 %v2185
        %v2314 = vunpack.c.l.b16 %v2186
        %v2315 = vunpack.c.l.b16 %v2187
        %v2316 = vunpack.c.l.b16 %v2188
        %v2317 = vunpack.c.l.b16 %v2189
        %v2318 = vunpack.c.l.b16 %v2190
        %v2319 = vunpack.c.l.b16 %v2191
        %v2320 = vunpack.c.l.b16 %v2192
        %v2321 = vunpack.c.l.b16 %v2193
        %v2322 = vunpack.c.l.b16 %v2194
        %v2323 = vunpack.c.l.b16 %v2195
        %v2324 = vunpack.c.l.b16 %v2196
        %v2325 = vunpack.c.l.b16 %v2197
        %v2326 = vunpack.c.l.b16 %v2198
        %v2327 = vunpack.c.l.b16 %v2199
        %v2328 = vunpack.c.l.b16 %v2200
        %v2329 = vunpack.c.l.b16 %v2201
        %v2330 = vunpack.c.l.b16 %v2202
        %v2331 = vunpack.c.l.b16 %v2203
        %v2332 = vunpack.c.l.b16 %v2204
        %v2333 = vunpack.c.l.b16 %v2205
        %v2334 = vunpack.c.l.b16 %v2206
        %v2335 = vunpack.c.l.b16 %v2207
        %v2336 = vunpack.c.l.b16 %v2208
        %v2337 = vunpack.c.l.b16 %v2209
        %v2338 = vunpack.c.l.b16 %v2210
        %v2339 = vunpack.c.l.b16 %v2211
        %v2340 = vunpack.c.l.b16 %v2212
        %v2341 = vunpack.c.l.b16 %v2213
        %v2342 = vunpack.c.l.b16 %v2214
        %v2343 = vunpack.c.l.b16 %v2215
        %v2344 = vunpack.c.l.b16 %v2216
        %v2345 = vunpack.c.l.b16 %v2217
        %v2346 = vunpack.c.l.b16 %v2218
        %v2347 = vunpack.c.l.b16 %v2219
        %v2348 = vunpack.c.l.b16 %v2220
        %v2349 = vunpack.c.l.b16 %v2221
        %v2350 = vunpack.c.l.b16 %v2222
        %v2351 = vunpack.c.l.b16 %v2223
        %v2352 = vunpack.c.l.b16 %v2224
        %v2353 = vunpack.c.l.b16 %v2225
        %v2354 = vunpack.c.l.b16 %v2226
        %v2355 = vunpack.c.l.b16 %v2227
        %v2356 = vunpack.c.l.b16 %v2228
        %v2357 = vunpack.c.l.b16 %v2229
        %v2358 = vunpack.c.l.b16 %v2230
        %v2359 = vunpack.c.l.b16 %v2231
        %v2360 = vunpack.c.l.b16 %v2232
        %v2361 = vpack.c.b16 %v2298, %v2297
        %v2362 = vpack.c.b16 %v2300, %v2299
        %v2363 = vpack.c.b16 %v2302, %v2301
        %v2364 = vpack.c.b16 %v2304, %v2303
        %v2365 = vpack.c.b16 %v2306, %v2305
        %v2366 = vpack.c.b16 %v2308, %v2307
        %v2367 = vpack.c.b16 %v2310, %v2309
        %v2368 = vpack.c.b16 %v2312, %v2311
        %v2369 = vpack.c.b16 %v2314, %v2313
        %v2370 = vpack.c.b16 %v2316, %v2315
        %v2371 = vpack.c.b16 %v2318, %v2317
        %v2372 = vpack.c.b16 %v2320, %v2319
        %v2373 = vpack.c.b16 %v2322, %v2321
        %v2374 = vpack.c.b16 %v2324, %v2323
        %v2375 = vpack.c.b16 %v2326, %v2325
        %v2376 = vpack.c.b16 %v2328, %v2327
        %v2377 = vpack.c.b16 %v2330, %v2329
        %v2378 = vpack.c.b16 %v2332, %v2331
        %v2379 = vpack.c.b16 %v2334, %v2333
        %v2380 = vpack.c.b16 %v2336, %v2335
        %v2381 = vpack.c.b16 %v2338, %v2337
        %v2382 = vpack.c.b16 %v2340, %v2339
        %v2383 = vpack.c.b16 %v2342, %v2341
        %v2384 = vpack.c.b16 %v2344, %v2343
        %v2385 = vpack.c.b16 %v2346, %v2345
        %v2386 = vpack.c.b16 %v2348, %v2347
        %v2387 = vpack.c.b16 %v2350, %v2349
        %v2388 = vpack.c.b16 %v2352, %v2351
        %v2389 = vpack.c.b16 %v2354, %v2353
        %v2390 = vpack.c.b16 %v2356, %v2355
        %v2391 = vpack.c.b16 %v2358, %v2357
        %v2392 = vpack.c.b16 %v2360, %v2359
        %2425 = vmatprep.subr.bf16.mxu0 0
        %2426 = vmatpush1.bf16.msra.mxu0 %v2368
        %2427 = vmatprep.subr.bf16.mxu0 0
        %2428 = vmatpush1.bf16.msra.mxu0 %v2367
        %2429 = vmatprep.subr.bf16.mxu0 0
        %2430 = vmatpush1.bf16.msra.mxu0 %v2366
        %2431 = vmatprep.subr.bf16.mxu0 0
        %2432 = vmatpush1.bf16.msra.mxu0 %v2365
        %2433 = vmatprep.subr.bf16.mxu0 0
        %2434 = vmatpush1.bf16.msra.mxu0 %v2364
        %2435 = vmatprep.subr.bf16.mxu0 0
        %2436 = vmatpush1.bf16.msra.mxu0 %v2363
        %2437 = vmatprep.subr.bf16.mxu0 0
        %2438 = vmatpush1.bf16.msra.mxu0 %v2362
        %2439 = vmatprep.subr.bf16.mxu0 0
        %2440 = vmatpush1.bf16.msra.mxu0 %v2361
        %2441 = vmatprep.subr.bf16.mxu0 0
        %2442 = vmatpush2.bf16.msra.mxu0 %v2376
        %2443 = vmatprep.subr.bf16.mxu0 0
        %2444 = vmatpush2.bf16.msra.mxu0 %v2375
        %2445 = vmatprep.subr.bf16.mxu0 0
        %2446 = vmatpush2.bf16.msra.mxu0 %v2374
        %2447 = vmatprep.subr.bf16.mxu0 0
        %2448 = vmatpush2.bf16.msra.mxu0 %v2373
        %2449 = vmatprep.subr.bf16.mxu0 0
        %2450 = vmatpush2.bf16.msra.mxu0 %v2372
        %2451 = vmatprep.subr.bf16.mxu0 0
        %2452 = vmatpush2.bf16.msra.mxu0 %v2371
        %2453 = vmatprep.subr.bf16.mxu0 0
        %2454 = vmatpush2.bf16.msra.mxu0 %v2370
        %2455 = vmatprep.subr.bf16.mxu0 0
        %2456 = vmatpush2.bf16.msra.mxu0 %v2369
        %2457 = vmatprep.mubr.bf16.mxu0 %v708
        %2458 = vmatmul.mubr.bf16.gmra.mxu0 %v692
        %v2459 = vpop.f32.mrf.mxu0
        %v2460 = vadd.f32 0.0, %v2459
        %v2461 = vpop.f32.mrf.mxu0
        %v2462 = vpop.f32.mrf.mxu0
        %v2463 = vadd.f32 0.0, %v2462
        %v2464 = vpop.f32.mrf.mxu0
        %2465 = vmatprep.mubr.bf16.mxu0 %v709
        %2466 = vmatmul.mubr.bf16.gmra.mxu0 %v693
        %v2467 = vpop.f32.mrf.mxu0
        %v2468 = vadd.f32 0.0, %v2467
        %v2469 = vpop.f32.mrf.mxu0
        %v2470 = vpop.f32.mrf.mxu0
        %v2471 = vadd.f32 0.0, %v2470
        %v2472 = vpop.f32.mrf.mxu0
        %2473 = vmatprep.mubr.bf16.mxu0 %v710
        %2474 = vmatmul.mubr.bf16.gmra.mxu0 %v694
        %v2475 = vpop.f32.mrf.mxu0
        %v2476 = vadd.f32 0.0, %v2475
        %v2477 = vpop.f32.mrf.mxu0
        %v2478 = vpop.f32.mrf.mxu0
        %v2479 = vadd.f32 0.0, %v2478
        %v2480 = vpop.f32.mrf.mxu0
        %2481 = vmatprep.mubr.bf16.mxu0 %v711
        %2482 = vmatmul.mubr.bf16.gmra.mxu0 %v695
        %v2483 = vpop.f32.mrf.mxu0
        %v2484 = vadd.f32 0.0, %v2483
        %v2485 = vpop.f32.mrf.mxu0
        %v2486 = vpop.f32.mrf.mxu0
        %v2487 = vadd.f32 0.0, %v2486
        %v2488 = vpop.f32.mrf.mxu0
        %2489 = vmatprep.mubr.bf16.mxu0 %v712
        %2490 = vmatmul.mubr.bf16.gmra.mxu0 %v696
        %v2491 = vpop.f32.mrf.mxu0
        %v2492 = vadd.f32 0.0, %v2491
        %v2493 = vpop.f32.mrf.mxu0
        %v2494 = vpop.f32.mrf.mxu0
        %v2495 = vadd.f32 0.0, %v2494
        %v2496 = vpop.f32.mrf.mxu0
        %2497 = vmatprep.mubr.bf16.mxu0 %v713
        %2498 = vmatmul.mubr.bf16.gmra.mxu0 %v697
        %v2499 = vpop.f32.mrf.mxu0
        %v2500 = vadd.f32 0.0, %v2499
        %v2501 = vpop.f32.mrf.mxu0
        %v2502 = vpop.f32.mrf.mxu0
        %v2503 = vadd.f32 0.0, %v2502
        %v2504 = vpop.f32.mrf.mxu0
        %2505 = vmatprep.mubr.bf16.mxu0 %v714
        %2506 = vmatmul.mubr.bf16.gmra.mxu0 %v698
        %v2507 = vpop.f32.mrf.mxu0
        %v2508 = vadd.f32 0.0, %v2507
        %v2509 = vpop.f32.mrf.mxu0
        %v2510 = vpop.f32.mrf.mxu0
        %v2511 = vadd.f32 0.0, %v2510
        %v2512 = vpop.f32.mrf.mxu0
        %2513 = vmatprep.mubr.bf16.mxu0 %v715
        %2514 = vmatmul.mubr.bf16.gmra.mxu0 %v699
        %v2515 = vpop.f32.mrf.mxu0
        %v2516 = vadd.f32 0.0, %v2515
        %v2517 = vpop.f32.mrf.mxu0
        %v2518 = vpop.f32.mrf.mxu0
        %v2519 = vadd.f32 0.0, %v2518
        %v2520 = vpop.f32.mrf.mxu0
        %2521 = vmatprep.mubr.bf16.mxu0 %v716
        %2522 = vmatmul.mubr.bf16.gmra.mxu0 %v700
        %v2523 = vpop.f32.mrf.mxu0
        %v2524 = vadd.f32 0.0, %v2523
        %v2525 = vpop.f32.mrf.mxu0
        %v2526 = vpop.f32.mrf.mxu0
        %v2527 = vadd.f32 0.0, %v2526
        %v2528 = vpop.f32.mrf.mxu0
        %2529 = vmatprep.mubr.bf16.mxu0 %v717
        %2530 = vmatmul.mubr.bf16.gmra.mxu0 %v701
        %v2531 = vpop.f32.mrf.mxu0
        %v2532 = vadd.f32 0.0, %v2531
        %v2533 = vpop.f32.mrf.mxu0
        %v2534 = vpop.f32.mrf.mxu0
        %v2535 = vadd.f32 0.0, %v2534
        %v2536 = vpop.f32.mrf.mxu0
        %2537 = vmatprep.mubr.bf16.mxu0 %v718
        %2538 = vmatmul.mubr.bf16.gmra.mxu0 %v702
        %v2539 = vpop.f32.mrf.mxu0
        %v2540 = vadd.f32 0.0, %v2539
        %v2541 = vpop.f32.mrf.mxu0
        %v2542 = vpop.f32.mrf.mxu0
        %v2543 = vadd.f32 0.0, %v2542
        %v2544 = vpop.f32.mrf.mxu0
        %2545 = vmatprep.mubr.bf16.mxu0 %v719
        %2546 = vmatmul.mubr.bf16.gmra.mxu0 %v703
        %v2547 = vpop.f32.mrf.mxu0
        %v2548 = vadd.f32 0.0, %v2547
        %v2549 = vpop.f32.mrf.mxu0
        %v2550 = vpop.f32.mrf.mxu0
        %v2551 = vadd.f32 0.0, %v2550
        %v2552 = vpop.f32.mrf.mxu0
        %2553 = vmatprep.mubr.bf16.mxu0 %v720
        %2554 = vmatmul.mubr.bf16.gmra.mxu0 %v704
        %v2555 = vpop.f32.mrf.mxu0
        %v2556 = vadd.f32 0.0, %v2555
        %v2557 = vpop.f32.mrf.mxu0
        %v2558 = vpop.f32.mrf.mxu0
        %v2559 = vadd.f32 0.0, %v2558
        %v2560 = vpop.f32.mrf.mxu0
        %2561 = vmatprep.mubr.bf16.mxu0 %v721
        %2562 = vmatmul.mubr.bf16.gmra.mxu0 %v705
        %v2563 = vpop.f32.mrf.mxu0
        %v2564 = vadd.f32 0.0, %v2563
        %v2565 = vpop.f32.mrf.mxu0
        %v2566 = vpop.f32.mrf.mxu0
        %v2567 = vadd.f32 0.0, %v2566
        %v2568 = vpop.f32.mrf.mxu0
        %2569 = vmatprep.mubr.bf16.mxu0 %v722
        %2570 = vmatmul.mubr.bf16.gmra.mxu0 %v706
        %v2571 = vpop.f32.mrf.mxu0
        %v2572 = vadd.f32 0.0, %v2571
        %v2573 = vpop.f32.mrf.mxu0
        %v2574 = vpop.f32.mrf.mxu0
        %v2575 = vadd.f32 0.0, %v2574
        %v2576 = vpop.f32.mrf.mxu0
        %2577 = vmatprep.mubr.bf16.mxu0 0
        %2578 = vmatmul.mubr.bf16.gmra.mxu0 0
        %v2579 = vpop.f32.mrf.mxu0
        %v2580 = vadd.f32 0.0, %v2579
        %v2581 = vpop.f32.mrf.mxu0
        %v2582 = vpop.f32.mrf.mxu0
        %v2583 = vadd.f32 0.0, %v2582
        %v2584 = vpop.f32.mrf.mxu0
        %2585 = vdwg.mxu0
        %2586 = vmatprep.subr.bf16.mxu0 0
        %2587 = vmatpush1.bf16.msra.mxu0 %v2384
        %2588 = vmatprep.subr.bf16.mxu0 0
        %2589 = vmatpush1.bf16.msra.mxu0 %v2383
        %2590 = vmatprep.subr.bf16.mxu0 0
        %2591 = vmatpush1.bf16.msra.mxu0 %v2382
        %2592 = vmatprep.subr.bf16.mxu0 0
        %2593 = vmatpush1.bf16.msra.mxu0 %v2381
        %2594 = vmatprep.subr.bf16.mxu0 0
        %2595 = vmatpush1.bf16.msra.mxu0 %v2380
        %2596 = vmatprep.subr.bf16.mxu0 0
        %2597 = vmatpush1.bf16.msra.mxu0 %v2379
        %2598 = vmatprep.subr.bf16.mxu0 0
        %2599 = vmatpush1.bf16.msra.mxu0 %v2378
        %2600 = vmatprep.subr.bf16.mxu0 0
        %2601 = vmatpush1.bf16.msra.mxu0 %v2377
        %2602 = vmatprep.subr.bf16.mxu0 0
        %2603 = vmatpush2.bf16.msra.mxu0 %v2392
        %2604 = vmatprep.subr.bf16.mxu0 0
        %2605 = vmatpush2.bf16.msra.mxu0 %v2391
        %2606 = vmatprep.subr.bf16.mxu0 0
        %2607 = vmatpush2.bf16.msra.mxu0 %v2390
        %2608 = vmatprep.subr.bf16.mxu0 0
        %2609 = vmatpush2.bf16.msra.mxu0 %v2389
        %2610 = vmatprep.subr.bf16.mxu0 0
        %2611 = vmatpush2.bf16.msra.mxu0 %v2388
        %2612 = vmatprep.subr.bf16.mxu0 0
        %2613 = vmatpush2.bf16.msra.mxu0 %v2387
        %2614 = vmatprep.subr.bf16.mxu0 0
        %2615 = vmatpush2.bf16.msra.mxu0 %v2386
        %2616 = vmatprep.subr.bf16.mxu0 0
        %2617 = vmatpush2.bf16.msra.mxu0 %v2385
        %2618 = vmatprep.mubr.bf16.mxu0 %v998
        %2619 = vmatmul.mubr.bf16.gmra.mxu0 %v853
        %v2620 = vpop.f32.mrf.mxu0
        %v2621 = vadd.f32 %v2460, %v2620
        %v2622 = vpop.f32.mrf.mxu0
        %v2623 = vpop.f32.mrf.mxu0
        %v2624 = vadd.f32 %v2463, %v2623
        %v2625 = vpop.f32.mrf.mxu0
        %2626 = vmatprep.mubr.bf16.mxu0 %v999
        %2627 = vmatmul.mubr.bf16.gmra.mxu0 %v854
        %v2628 = vpop.f32.mrf.mxu0
        %v2629 = vadd.f32 %v2468, %v2628
        %v2630 = vpop.f32.mrf.mxu0
        %v2631 = vpop.f32.mrf.mxu0
        %v2632 = vadd.f32 %v2471, %v2631
        %v2633 = vpop.f32.mrf.mxu0
        %2634 = vmatprep.mubr.bf16.mxu0 %v1000
        %2635 = vmatmul.mubr.bf16.gmra.mxu0 %v855
        %v2636 = vpop.f32.mrf.mxu0
        %v2637 = vadd.f32 %v2476, %v2636
        %v2638 = vpop.f32.mrf.mxu0
        %v2639 = vpop.f32.mrf.mxu0
        %v2640 = vadd.f32 %v2479, %v2639
        %v2641 = vpop.f32.mrf.mxu0
        %2642 = vmatprep.mubr.bf16.mxu0 %v1001
        %2643 = vmatmul.mubr.bf16.gmra.mxu0 %v856
        %v2644 = vpop.f32.mrf.mxu0
        %v2645 = vadd.f32 %v2484, %v2644
        %v2646 = vpop.f32.mrf.mxu0
        %v2647 = vpop.f32.mrf.mxu0
        %v2648 = vadd.f32 %v2487, %v2647
        %v2649 = vpop.f32.mrf.mxu0
        %2650 = vmatprep.mubr.bf16.mxu0 %v1002
        %2651 = vmatmul.mubr.bf16.gmra.mxu0 %v857
        %v2652 = vpop.f32.mrf.mxu0
        %v2653 = vadd.f32 %v2492, %v2652
        %v2654 = vpop.f32.mrf.mxu0
        %v2655 = vpop.f32.mrf.mxu0
        %v2656 = vadd.f32 %v2495, %v2655
        %v2657 = vpop.f32.mrf.mxu0
        %2658 = vmatprep.mubr.bf16.mxu0 %v1003
        %2659 = vmatmul.mubr.bf16.gmra.mxu0 %v858
        %v2660 = vpop.f32.mrf.mxu0
        %v2661 = vadd.f32 %v2500, %v2660
        %v2662 = vpop.f32.mrf.mxu0
        %v2663 = vpop.f32.mrf.mxu0
        %v2664 = vadd.f32 %v2503, %v2663
        %v2665 = vpop.f32.mrf.mxu0
        %2666 = vmatprep.mubr.bf16.mxu0 %v1004
        %2667 = vmatmul.mubr.bf16.gmra.mxu0 %v859
        %v2668 = vpop.f32.mrf.mxu0
        %v2669 = vadd.f32 %v2508, %v2668
        %v2670 = vpop.f32.mrf.mxu0
        %v2671 = vpop.f32.mrf.mxu0
        %v2672 = vadd.f32 %v2511, %v2671
        %v2673 = vpop.f32.mrf.mxu0
        %2674 = vmatprep.mubr.bf16.mxu0 %v1005
        %2675 = vmatmul.mubr.bf16.gmra.mxu0 %v860
        %v2676 = vpop.f32.mrf.mxu0
        %v2677 = vadd.f32 %v2516, %v2676
        %v2678 = vpop.f32.mrf.mxu0
        %v2679 = vpop.f32.mrf.mxu0
        %v2680 = vadd.f32 %v2519, %v2679
        %v2681 = vpop.f32.mrf.mxu0
        %2682 = vmatprep.mubr.bf16.mxu0 %v1006
        %2683 = vmatmul.mubr.bf16.gmra.mxu0 %v861
        %v2684 = vpop.f32.mrf.mxu0
        %v2685 = vadd.f32 %v2524, %v2684
        %v2686 = vpop.f32.mrf.mxu0
        %v2687 = vpop.f32.mrf.mxu0
        %v2688 = vadd.f32 %v2527, %v2687
        %v2689 = vpop.f32.mrf.mxu0
        %2690 = vmatprep.mubr.bf16.mxu0 %v1007
        %2691 = vmatmul.mubr.bf16.gmra.mxu0 %v862
        %v2692 = vpop.f32.mrf.mxu0
        %v2693 = vadd.f32 %v2532, %v2692
        %v2694 = vpop.f32.mrf.mxu0
        %v2695 = vpop.f32.mrf.mxu0
        %v2696 = vadd.f32 %v2535, %v2695
        %v2697 = vpop.f32.mrf.mxu0
        %2698 = vmatprep.mubr.bf16.mxu0 %v1008
        %2699 = vmatmul.mubr.bf16.gmra.mxu0 %v863
        %v2700 = vpop.f32.mrf.mxu0
        %v2701 = vadd.f32 %v2540, %v2700
        %v2702 = vpop.f32.mrf.mxu0
        %v2703 = vpop.f32.mrf.mxu0
        %v2704 = vadd.f32 %v2543, %v2703
        %v2705 = vpop.f32.mrf.mxu0
        %2706 = vmatprep.mubr.bf16.mxu0 %v1009
        %2707 = vmatmul.mubr.bf16.gmra.mxu0 %v864
        %v2708 = vpop.f32.mrf.mxu0
        %v2709 = vadd.f32 %v2548, %v2708
        %v2710 = vpop.f32.mrf.mxu0
        %v2711 = vpop.f32.mrf.mxu0
        %v2712 = vadd.f32 %v2551, %v2711
        %v2713 = vpop.f32.mrf.mxu0
        %2714 = vmatprep.mubr.bf16.mxu0 %v1010
        %2715 = vmatmul.mubr.bf16.gmra.mxu0 %v865
        %v2716 = vpop.f32.mrf.mxu0
        %v2717 = vadd.f32 %v2556, %v2716
        %v2718 = vpop.f32.mrf.mxu0
        %v2719 = vpop.f32.mrf.mxu0
        %v2720 = vadd.f32 %v2559, %v2719
        %v2721 = vpop.f32.mrf.mxu0
        %2722 = vmatprep.mubr.bf16.mxu0 %v1011
        %2723 = vmatmul.mubr.bf16.gmra.mxu0 %v866
        %v2724 = vpop.f32.mrf.mxu0
        %v2725 = vadd.f32 %v2564, %v2724
        %v2726 = vpop.f32.mrf.mxu0
        %v2727 = vpop.f32.mrf.mxu0
        %v2728 = vadd.f32 %v2567, %v2727
        %v2729 = vpop.f32.mrf.mxu0
        %2730 = vmatprep.mubr.bf16.mxu0 %v1012
        %2731 = vmatmul.mubr.bf16.gmra.mxu0 %v867
        %v2732 = vpop.f32.mrf.mxu0
        %v2733 = vadd.f32 %v2572, %v2732
        %v2734 = vpop.f32.mrf.mxu0
        %v2735 = vpop.f32.mrf.mxu0
        %v2736 = vadd.f32 %v2575, %v2735
        %v2737 = vpop.f32.mrf.mxu0
        %2738 = vmatprep.mubr.bf16.mxu0 0
        %2739 = vmatmul.mubr.bf16.gmra.mxu0 0
        %v2740 = vpop.f32.mrf.mxu0
        %v2741 = vadd.f32 %v2580, %v2740
        %v2742 = vpop.f32.mrf.mxu0
        %v2743 = vpop.f32.mrf.mxu0
        %v2744 = vadd.f32 %v2583, %v2743
        %v2745 = vpop.f32.mrf.mxu0
        %2746 = vdwg.mxu0
        %v2747 = vadd.f32 %v2043, %v2621
        %v2748 = vadd.f32 %v2046, %v2624
        %v2749 = vadd.f32 %v2051, %v2629
        %v2750 = vadd.f32 %v2054, %v2632
        %v2751 = vadd.f32 %v2059, %v2637
        %v2752 = vadd.f32 %v2062, %v2640
        %v2753 = vadd.f32 %v2067, %v2645
        %v2754 = vadd.f32 %v2070, %v2648
        %v2755 = vadd.f32 %v2075, %v2653
        %v2756 = vadd.f32 %v2078, %v2656
        %v2757 = vadd.f32 %v2083, %v2661
        %v2758 = vadd.f32 %v2086, %v2664
        %v2759 = vadd.f32 %v2091, %v2669
        %v2760 = vadd.f32 %v2094, %v2672
        %v2761 = vadd.f32 %v2099, %v2677
        %v2762 = vadd.f32 %v2102, %v2680
        %v2763 = vadd.f32 %v2107, %v2685
        %v2764 = vadd.f32 %v2110, %v2688
        %v2765 = vadd.f32 %v2115, %v2693
        %v2766 = vadd.f32 %v2118, %v2696
        %v2767 = vadd.f32 %v2123, %v2701
        %v2768 = vadd.f32 %v2126, %v2704
        %v2769 = vadd.f32 %v2131, %v2709
        %v2770 = vadd.f32 %v2134, %v2712
        %v2771 = vadd.f32 %v2139, %v2717
        %v2772 = vadd.f32 %v2142, %v2720
        %v2773 = vadd.f32 %v2147, %v2725
        %v2774 = vadd.f32 %v2150, %v2728
        %v2775 = vadd.f32 %v2155, %v2733
        %v2776 = vadd.f32 %v2158, %v2736
        %v2777 = vadd.f32 %v2163, %v2741
        %v2778 = vadd.f32 %v2166, %v2744
        %v2779 = vld [vmem:[#allocation5 + $0x300] sm:$0xf]
        %v2780 = vld [vmem:[#allocation5 + $0x304] sm:$0xf]
        %v2781 = vld [vmem:[#allocation5 + $0x308] sm:$0xf]
        %v2782 = vld [vmem:[#allocation5 + $0x30c] sm:$0xf]
        %v2783 = vld [vmem:[#allocation5 + $0x310] sm:$0xf]
        %v2784 = vld [vmem:[#allocation5 + $0x314] sm:$0xf]
        %v2785 = vld [vmem:[#allocation5 + $0x318] sm:$0xf]
        %v2786 = vld [vmem:[#allocation5 + $0x31c] sm:$0xf]
        %v2787 = vld [vmem:[#allocation5 + $0x320] sm:$0xf]
        %v2788 = vld [vmem:[#allocation5 + $0x324] sm:$0xf]
        %v2789 = vld [vmem:[#allocation5 + $0x328] sm:$0xf]
        %v2790 = vld [vmem:[#allocation5 + $0x32c] sm:$0xf]
        %v2791 = vld [vmem:[#allocation5 + $0x330] sm:$0xf]
        %v2792 = vld [vmem:[#allocation5 + $0x334] sm:$0xf]
        %v2793 = vld [vmem:[#allocation5 + $0x338] sm:$0xf]
        %v2794 = vld [vmem:[#allocation5 + $0x33c] sm:$0xf]
        %v2795 = vld [vmem:[#allocation5 + $0x340] sm:$0xf]
        %v2796 = vld [vmem:[#allocation5 + $0x344] sm:$0xf]
        %v2797 = vld [vmem:[#allocation5 + $0x348] sm:$0xf]
        %v2798 = vld [vmem:[#allocation5 + $0x34c] sm:$0xf]
        %v2799 = vld [vmem:[#allocation5 + $0x350] sm:$0xf]
        %v2800 = vld [vmem:[#allocation5 + $0x354] sm:$0xf]
        %v2801 = vld [vmem:[#allocation5 + $0x358] sm:$0xf]
        %v2802 = vld [vmem:[#allocation5 + $0x35c] sm:$0xf]
        %v2803 = vld [vmem:[#allocation5 + $0x360] sm:$0xf]
        %v2804 = vld [vmem:[#allocation5 + $0x364] sm:$0xf]
        %v2805 = vld [vmem:[#allocation5 + $0x368] sm:$0xf]
        %v2806 = vld [vmem:[#allocation5 + $0x36c] sm:$0xf]
        %v2807 = vld [vmem:[#allocation5 + $0x370] sm:$0xf]
        %v2808 = vld [vmem:[#allocation5 + $0x374] sm:$0xf]
        %v2809 = vld [vmem:[#allocation5 + $0x378] sm:$0xf]
        %v2810 = vld [vmem:[#allocation5 + $0x37c] sm:$0xf]
        %v2811 = vld [vmem:[#allocation5 + $0x380] sm:$0xf]
        %v2812 = vld [vmem:[#allocation5 + $0x384] sm:$0xf]
        %v2813 = vld [vmem:[#allocation5 + $0x388] sm:$0xf]
        %v2814 = vld [vmem:[#allocation5 + $0x38c] sm:$0xf]
        %v2815 = vld [vmem:[#allocation5 + $0x390] sm:$0xf]
        %v2816 = vld [vmem:[#allocation5 + $0x394] sm:$0xf]
        %v2817 = vld [vmem:[#allocation5 + $0x398] sm:$0xf]
        %v2818 = vld [vmem:[#allocation5 + $0x39c] sm:$0xf]
        %v2819 = vld [vmem:[#allocation5 + $0x3a0] sm:$0xf]
        %v2820 = vld [vmem:[#allocation5 + $0x3a4] sm:$0xf]
        %v2821 = vld [vmem:[#allocation5 + $0x3a8] sm:$0xf]
        %v2822 = vld [vmem:[#allocation5 + $0x3ac] sm:$0xf]
        %v2823 = vld [vmem:[#allocation5 + $0x3b0] sm:$0xf]
        %v2824 = vld [vmem:[#allocation5 + $0x3b4] sm:$0xf]
        %v2825 = vld [vmem:[#allocation5 + $0x3b8] sm:$0xf]
        %v2826 = vld [vmem:[#allocation5 + $0x3bc] sm:$0xf]
        %v2827 = vld [vmem:[#allocation5 + $0x3c0] sm:$0xf]
        %v2828 = vld [vmem:[#allocation5 + $0x3c4] sm:$0xf]
        %v2829 = vld [vmem:[#allocation5 + $0x3c8] sm:$0xf]
        %v2830 = vld [vmem:[#allocation5 + $0x3cc] sm:$0xf]
        %v2831 = vld [vmem:[#allocation5 + $0x3d0] sm:$0xf]
        %v2832 = vld [vmem:[#allocation5 + $0x3d4] sm:$0xf]
        %v2833 = vld [vmem:[#allocation5 + $0x3d8] sm:$0xf]
        %v2834 = vld [vmem:[#allocation5 + $0x3dc] sm:$0xf]
        %v2835 = vld [vmem:[#allocation5 + $0x3e0] sm:$0xf]
        %v2836 = vld [vmem:[#allocation5 + $0x3e4] sm:$0xf]
        %v2837 = vld [vmem:[#allocation5 + $0x3e8] sm:$0xf]
        %v2838 = vld [vmem:[#allocation5 + $0x3ec] sm:$0xf]
        %v2839 = vld [vmem:[#allocation5 + $0x3f0] sm:$0xf]
        %v2840 = vld [vmem:[#allocation5 + $0x3f4] sm:$0xf]
        %v2841 = vld [vmem:[#allocation5 + $0x3f8] sm:$0xf]
        %v2842 = vld [vmem:[#allocation5 + $0x3fc] sm:$0xf]
        %v2907 = vunpack.c.l.b16 %v2779
        %v2908 = vunpack.c.l.b16 %v2780
        %v2909 = vunpack.c.l.b16 %v2781
        %v2910 = vunpack.c.l.b16 %v2782
        %v2911 = vunpack.c.l.b16 %v2783
        %v2912 = vunpack.c.l.b16 %v2784
        %v2913 = vunpack.c.l.b16 %v2785
        %v2914 = vunpack.c.l.b16 %v2786
        %v2915 = vunpack.c.l.b16 %v2787
        %v2916 = vunpack.c.l.b16 %v2788
        %v2917 = vunpack.c.l.b16 %v2789
        %v2918 = vunpack.c.l.b16 %v2790
        %v2919 = vunpack.c.l.b16 %v2791
        %v2920 = vunpack.c.l.b16 %v2792
        %v2921 = vunpack.c.l.b16 %v2793
        %v2922 = vunpack.c.l.b16 %v2794
        %v2923 = vunpack.c.l.b16 %v2795
        %v2924 = vunpack.c.l.b16 %v2796
        %v2925 = vunpack.c.l.b16 %v2797
        %v2926 = vunpack.c.l.b16 %v2798
        %v2927 = vunpack.c.l.b16 %v2799
        %v2928 = vunpack.c.l.b16 %v2800
        %v2929 = vunpack.c.l.b16 %v2801
        %v2930 = vunpack.c.l.b16 %v2802
        %v2931 = vunpack.c.l.b16 %v2803
        %v2932 = vunpack.c.l.b16 %v2804
        %v2933 = vunpack.c.l.b16 %v2805
        %v2934 = vunpack.c.l.b16 %v2806
        %v2935 = vunpack.c.l.b16 %v2807
        %v2936 = vunpack.c.l.b16 %v2808
        %v2937 = vunpack.c.l.b16 %v2809
        %v2938 = vunpack.c.l.b16 %v2810
        %v2939 = vunpack.c.l.b16 %v2811
        %v2940 = vunpack.c.l.b16 %v2812
        %v2941 = vunpack.c.l.b16 %v2813
        %v2942 = vunpack.c.l.b16 %v2814
        %v2943 = vunpack.c.l.b16 %v2815
        %v2944 = vunpack.c.l.b16 %v2816
        %v2945 = vunpack.c.l.b16 %v2817
        %v2946 = vunpack.c.l.b16 %v2818
        %v2947 = vunpack.c.l.b16 %v2819
        %v2948 = vunpack.c.l.b16 %v2820
        %v2949 = vunpack.c.l.b16 %v2821
        %v2950 = vunpack.c.l.b16 %v2822
        %v2951 = vunpack.c.l.b16 %v2823
        %v2952 = vunpack.c.l.b16 %v2824
        %v2953 = vunpack.c.l.b16 %v2825
        %v2954 = vunpack.c.l.b16 %v2826
        %v2955 = vunpack.c.l.b16 %v2827
        %v2956 = vunpack.c.l.b16 %v2828
        %v2957 = vunpack.c.l.b16 %v2829
        %v2958 = vunpack.c.l.b16 %v2830
        %v2959 = vunpack.c.l.b16 %v2831
        %v2960 = vunpack.c.l.b16 %v2832
        %v2961 = vunpack.c.l.b16 %v2833
        %v2962 = vunpack.c.l.b16 %v2834
        %v2963 = vunpack.c.l.b16 %v2835
        %v2964 = vunpack.c.l.b16 %v2836
        %v2965 = vunpack.c.l.b16 %v2837
        %v2966 = vunpack.c.l.b16 %v2838
        %v2967 = vunpack.c.l.b16 %v2839
        %v2968 = vunpack.c.l.b16 %v2840
        %v2969 = vunpack.c.l.b16 %v2841
        %v2970 = vunpack.c.l.b16 %v2842
        %v2971 = vpack.c.b16 %v2908, %v2907
        %v2972 = vpack.c.b16 %v2910, %v2909
        %v2973 = vpack.c.b16 %v2912, %v2911
        %v2974 = vpack.c.b16 %v2914, %v2913
        %v2975 = vpack.c.b16 %v2916, %v2915
        %v2976 = vpack.c.b16 %v2918, %v2917
        %v2977 = vpack.c.b16 %v2920, %v2919
        %v2978 = vpack.c.b16 %v2922, %v2921
        %v2979 = vpack.c.b16 %v2924, %v2923
        %v2980 = vpack.c.b16 %v2926, %v2925
        %v2981 = vpack.c.b16 %v2928, %v2927
        %v2982 = vpack.c.b16 %v2930, %v2929
        %v2983 = vpack.c.b16 %v2932, %v2931
        %v2984 = vpack.c.b16 %v2934, %v2933
        %v2985 = vpack.c.b16 %v2936, %v2935
        %v2986 = vpack.c.b16 %v2938, %v2937
        %v2987 = vpack.c.b16 %v2940, %v2939
        %v2988 = vpack.c.b16 %v2942, %v2941
        %v2989 = vpack.c.b16 %v2944, %v2943
        %v2990 = vpack.c.b16 %v2946, %v2945
        %v2991 = vpack.c.b16 %v2948, %v2947
        %v2992 = vpack.c.b16 %v2950, %v2949
        %v2993 = vpack.c.b16 %v2952, %v2951
        %v2994 = vpack.c.b16 %v2954, %v2953
        %v2995 = vpack.c.b16 %v2956, %v2955
        %v2996 = vpack.c.b16 %v2958, %v2957
        %v2997 = vpack.c.b16 %v2960, %v2959
        %v2998 = vpack.c.b16 %v2962, %v2961
        %v2999 = vpack.c.b16 %v2964, %v2963
        %v3000 = vpack.c.b16 %v2966, %v2965
        %v3001 = vpack.c.b16 %v2968, %v2967
        %v3002 = vpack.c.b16 %v2970, %v2969
        %3035 = vmatprep.subr.bf16.mxu0 0
        %3036 = vmatpush1.bf16.msra.mxu0 %v2978
        %3037 = vmatprep.subr.bf16.mxu0 0
        %3038 = vmatpush1.bf16.msra.mxu0 %v2977
        %3039 = vmatprep.subr.bf16.mxu0 0
        %3040 = vmatpush1.bf16.msra.mxu0 %v2976
        %3041 = vmatprep.subr.bf16.mxu0 0
        %3042 = vmatpush1.bf16.msra.mxu0 %v2975
        %3043 = vmatprep.subr.bf16.mxu0 0
        %3044 = vmatpush1.bf16.msra.mxu0 %v2974
        %3045 = vmatprep.subr.bf16.mxu0 0
        %3046 = vmatpush1.bf16.msra.mxu0 %v2973
        %3047 = vmatprep.subr.bf16.mxu0 0
        %3048 = vmatpush1.bf16.msra.mxu0 %v2972
        %3049 = vmatprep.subr.bf16.mxu0 0
        %3050 = vmatpush1.bf16.msra.mxu0 %v2971
        %3051 = vmatprep.subr.bf16.mxu0 0
        %3052 = vmatpush2.bf16.msra.mxu0 %v2986
        %3053 = vmatprep.subr.bf16.mxu0 0
        %3054 = vmatpush2.bf16.msra.mxu0 %v2985
        %3055 = vmatprep.subr.bf16.mxu0 0
        %3056 = vmatpush2.bf16.msra.mxu0 %v2984
        %3057 = vmatprep.subr.bf16.mxu0 0
        %3058 = vmatpush2.bf16.msra.mxu0 %v2983
        %3059 = vmatprep.subr.bf16.mxu0 0
        %3060 = vmatpush2.bf16.msra.mxu0 %v2982
        %3061 = vmatprep.subr.bf16.mxu0 0
        %3062 = vmatpush2.bf16.msra.mxu0 %v2981
        %3063 = vmatprep.subr.bf16.mxu0 0
        %3064 = vmatpush2.bf16.msra.mxu0 %v2980
        %3065 = vmatprep.subr.bf16.mxu0 0
        %3066 = vmatpush2.bf16.msra.mxu0 %v2979
        %3067 = vmatprep.mubr.bf16.mxu0 %v709
        %3068 = vmatmul.mubr.bf16.gmra.mxu0 %v693
        %v3069 = vpop.f32.mrf.mxu0
        %v3070 = vadd.f32 0.0, %v3069
        %v3071 = vpop.f32.mrf.mxu0
        %v3072 = vpop.f32.mrf.mxu0
        %v3073 = vadd.f32 0.0, %v3072
        %v3074 = vpop.f32.mrf.mxu0
        %3075 = vmatprep.mubr.bf16.mxu0 %v710
        %3076 = vmatmul.mubr.bf16.gmra.mxu0 %v694
        %v3077 = vpop.f32.mrf.mxu0
        %v3078 = vadd.f32 0.0, %v3077
        %v3079 = vpop.f32.mrf.mxu0
        %v3080 = vpop.f32.mrf.mxu0
        %v3081 = vadd.f32 0.0, %v3080
        %v3082 = vpop.f32.mrf.mxu0
        %3083 = vmatprep.mubr.bf16.mxu0 %v711
        %3084 = vmatmul.mubr.bf16.gmra.mxu0 %v695
        %v3085 = vpop.f32.mrf.mxu0
        %v3086 = vadd.f32 0.0, %v3085
        %v3087 = vpop.f32.mrf.mxu0
        %v3088 = vpop.f32.mrf.mxu0
        %v3089 = vadd.f32 0.0, %v3088
        %v3090 = vpop.f32.mrf.mxu0
        %3091 = vmatprep.mubr.bf16.mxu0 %v712
        %3092 = vmatmul.mubr.bf16.gmra.mxu0 %v696
        %v3093 = vpop.f32.mrf.mxu0
        %v3094 = vadd.f32 0.0, %v3093
        %v3095 = vpop.f32.mrf.mxu0
        %v3096 = vpop.f32.mrf.mxu0
        %v3097 = vadd.f32 0.0, %v3096
        %v3098 = vpop.f32.mrf.mxu0
        %3099 = vmatprep.mubr.bf16.mxu0 %v713
        %3100 = vmatmul.mubr.bf16.gmra.mxu0 %v697
        %v3101 = vpop.f32.mrf.mxu0
        %v3102 = vadd.f32 0.0, %v3101
        %v3103 = vpop.f32.mrf.mxu0
        %v3104 = vpop.f32.mrf.mxu0
        %v3105 = vadd.f32 0.0, %v3104
        %v3106 = vpop.f32.mrf.mxu0
        %3107 = vmatprep.mubr.bf16.mxu0 %v714
        %3108 = vmatmul.mubr.bf16.gmra.mxu0 %v698
        %v3109 = vpop.f32.mrf.mxu0
        %v3110 = vadd.f32 0.0, %v3109
        %v3111 = vpop.f32.mrf.mxu0
        %v3112 = vpop.f32.mrf.mxu0
        %v3113 = vadd.f32 0.0, %v3112
        %v3114 = vpop.f32.mrf.mxu0
        %3115 = vmatprep.mubr.bf16.mxu0 %v715
        %3116 = vmatmul.mubr.bf16.gmra.mxu0 %v699
        %v3117 = vpop.f32.mrf.mxu0
        %v3118 = vadd.f32 0.0, %v3117
        %v3119 = vpop.f32.mrf.mxu0
        %v3120 = vpop.f32.mrf.mxu0
        %v3121 = vadd.f32 0.0, %v3120
        %v3122 = vpop.f32.mrf.mxu0
        %3123 = vmatprep.mubr.bf16.mxu0 %v716
        %3124 = vmatmul.mubr.bf16.gmra.mxu0 %v700
        %v3125 = vpop.f32.mrf.mxu0
        %v3126 = vadd.f32 0.0, %v3125
        %v3127 = vpop.f32.mrf.mxu0
        %v3128 = vpop.f32.mrf.mxu0
        %v3129 = vadd.f32 0.0, %v3128
        %v3130 = vpop.f32.mrf.mxu0
        %3131 = vmatprep.mubr.bf16.mxu0 %v717
        %3132 = vmatmul.mubr.bf16.gmra.mxu0 %v701
        %v3133 = vpop.f32.mrf.mxu0
        %v3134 = vadd.f32 0.0, %v3133
        %v3135 = vpop.f32.mrf.mxu0
        %v3136 = vpop.f32.mrf.mxu0
        %v3137 = vadd.f32 0.0, %v3136
        %v3138 = vpop.f32.mrf.mxu0
        %3139 = vmatprep.mubr.bf16.mxu0 %v718
        %3140 = vmatmul.mubr.bf16.gmra.mxu0 %v702
        %v3141 = vpop.f32.mrf.mxu0
        %v3142 = vadd.f32 0.0, %v3141
        %v3143 = vpop.f32.mrf.mxu0
        %v3144 = vpop.f32.mrf.mxu0
        %v3145 = vadd.f32 0.0, %v3144
        %v3146 = vpop.f32.mrf.mxu0
        %3147 = vmatprep.mubr.bf16.mxu0 %v719
        %3148 = vmatmul.mubr.bf16.gmra.mxu0 %v703
        %v3149 = vpop.f32.mrf.mxu0
        %v3150 = vadd.f32 0.0, %v3149
        %v3151 = vpop.f32.mrf.mxu0
        %v3152 = vpop.f32.mrf.mxu0
        %v3153 = vadd.f32 0.0, %v3152
        %v3154 = vpop.f32.mrf.mxu0
        %3155 = vmatprep.mubr.bf16.mxu0 %v720
        %3156 = vmatmul.mubr.bf16.gmra.mxu0 %v704
        %v3157 = vpop.f32.mrf.mxu0
        %v3158 = vadd.f32 0.0, %v3157
        %v3159 = vpop.f32.mrf.mxu0
        %v3160 = vpop.f32.mrf.mxu0
        %v3161 = vadd.f32 0.0, %v3160
        %v3162 = vpop.f32.mrf.mxu0
        %3163 = vmatprep.mubr.bf16.mxu0 %v721
        %3164 = vmatmul.mubr.bf16.gmra.mxu0 %v705
        %v3165 = vpop.f32.mrf.mxu0
        %v3166 = vadd.f32 0.0, %v3165
        %v3167 = vpop.f32.mrf.mxu0
        %v3168 = vpop.f32.mrf.mxu0
        %v3169 = vadd.f32 0.0, %v3168
        %v3170 = vpop.f32.mrf.mxu0
        %3171 = vmatprep.mubr.bf16.mxu0 %v722
        %3172 = vmatmul.mubr.bf16.gmra.mxu0 %v706
        %v3173 = vpop.f32.mrf.mxu0
        %v3174 = vadd.f32 0.0, %v3173
        %v3175 = vpop.f32.mrf.mxu0
        %v3176 = vpop.f32.mrf.mxu0
        %v3177 = vadd.f32 0.0, %v3176
        %v3178 = vpop.f32.mrf.mxu0
        %3179 = vmatprep.mubr.bf16.mxu0 0
        %3180 = vmatmul.mubr.bf16.gmra.mxu0 0
        %v3181 = vpop.f32.mrf.mxu0
        %v3182 = vadd.f32 0.0, %v3181
        %v3183 = vpop.f32.mrf.mxu0
        %v3184 = vpop.f32.mrf.mxu0
        %v3185 = vadd.f32 0.0, %v3184
        %v3186 = vpop.f32.mrf.mxu0
        %3187 = vmatprep.mubr.bf16.mxu0 0
        %3188 = vmatmul.mubr.bf16.gmra.mxu0 0
        %v3189 = vpop.f32.mrf.mxu0
        %v3190 = vadd.f32 0.0, %v3189
        %v3191 = vpop.f32.mrf.mxu0
        %v3192 = vpop.f32.mrf.mxu0
        %v3193 = vadd.f32 0.0, %v3192
        %v3194 = vpop.f32.mrf.mxu0
        %3195 = vdwg.mxu0
        %3196 = vmatprep.subr.bf16.mxu0 0
        %3197 = vmatpush1.bf16.msra.mxu0 %v2994
        %3198 = vmatprep.subr.bf16.mxu0 0
        %3199 = vmatpush1.bf16.msra.mxu0 %v2993
        %3200 = vmatprep.subr.bf16.mxu0 0
        %3201 = vmatpush1.bf16.msra.mxu0 %v2992
        %3202 = vmatprep.subr.bf16.mxu0 0
        %3203 = vmatpush1.bf16.msra.mxu0 %v2991
        %3204 = vmatprep.subr.bf16.mxu0 0
        %3205 = vmatpush1.bf16.msra.mxu0 %v2990
        %3206 = vmatprep.subr.bf16.mxu0 0
        %3207 = vmatpush1.bf16.msra.mxu0 %v2989
        %3208 = vmatprep.subr.bf16.mxu0 0
        %3209 = vmatpush1.bf16.msra.mxu0 %v2988
        %3210 = vmatprep.subr.bf16.mxu0 0
        %3211 = vmatpush1.bf16.msra.mxu0 %v2987
        %3212 = vmatprep.subr.bf16.mxu0 0
        %3213 = vmatpush2.bf16.msra.mxu0 %v3002
        %3214 = vmatprep.subr.bf16.mxu0 0
        %3215 = vmatpush2.bf16.msra.mxu0 %v3001
        %3216 = vmatprep.subr.bf16.mxu0 0
        %3217 = vmatpush2.bf16.msra.mxu0 %v3000
        %3218 = vmatprep.subr.bf16.mxu0 0
        %3219 = vmatpush2.bf16.msra.mxu0 %v2999
        %3220 = vmatprep.subr.bf16.mxu0 0
        %3221 = vmatpush2.bf16.msra.mxu0 %v2998
        %3222 = vmatprep.subr.bf16.mxu0 0
        %3223 = vmatpush2.bf16.msra.mxu0 %v2997
        %3224 = vmatprep.subr.bf16.mxu0 0
        %3225 = vmatpush2.bf16.msra.mxu0 %v2996
        %3226 = vmatprep.subr.bf16.mxu0 0
        %3227 = vmatpush2.bf16.msra.mxu0 %v2995
        %3228 = vmatprep.mubr.bf16.mxu0 %v999
        %3229 = vmatmul.mubr.bf16.gmra.mxu0 %v854
        %v3230 = vpop.f32.mrf.mxu0
        %v3231 = vadd.f32 %v3070, %v3230
        %v3232 = vpop.f32.mrf.mxu0
        %v3233 = vpop.f32.mrf.mxu0
        %v3234 = vadd.f32 %v3073, %v3233
        %v3235 = vpop.f32.mrf.mxu0
        %3236 = vmatprep.mubr.bf16.mxu0 %v1000
        %3237 = vmatmul.mubr.bf16.gmra.mxu0 %v855
        %v3238 = vpop.f32.mrf.mxu0
        %v3239 = vadd.f32 %v3078, %v3238
        %v3240 = vpop.f32.mrf.mxu0
        %v3241 = vpop.f32.mrf.mxu0
        %v3242 = vadd.f32 %v3081, %v3241
        %v3243 = vpop.f32.mrf.mxu0
        %3244 = vmatprep.mubr.bf16.mxu0 %v1001
        %3245 = vmatmul.mubr.bf16.gmra.mxu0 %v856
        %v3246 = vpop.f32.mrf.mxu0
        %v3247 = vadd.f32 %v3086, %v3246
        %v3248 = vpop.f32.mrf.mxu0
        %v3249 = vpop.f32.mrf.mxu0
        %v3250 = vadd.f32 %v3089, %v3249
        %v3251 = vpop.f32.mrf.mxu0
        %3252 = vmatprep.mubr.bf16.mxu0 %v1002
        %3253 = vmatmul.mubr.bf16.gmra.mxu0 %v857
        %v3254 = vpop.f32.mrf.mxu0
        %v3255 = vadd.f32 %v3094, %v3254
        %v3256 = vpop.f32.mrf.mxu0
        %v3257 = vpop.f32.mrf.mxu0
        %v3258 = vadd.f32 %v3097, %v3257
        %v3259 = vpop.f32.mrf.mxu0
        %3260 = vmatprep.mubr.bf16.mxu0 %v1003
        %3261 = vmatmul.mubr.bf16.gmra.mxu0 %v858
        %v3262 = vpop.f32.mrf.mxu0
        %v3263 = vadd.f32 %v3102, %v3262
        %v3264 = vpop.f32.mrf.mxu0
        %v3265 = vpop.f32.mrf.mxu0
        %v3266 = vadd.f32 %v3105, %v3265
        %v3267 = vpop.f32.mrf.mxu0
        %3268 = vmatprep.mubr.bf16.mxu0 %v1004
        %3269 = vmatmul.mubr.bf16.gmra.mxu0 %v859
        %v3270 = vpop.f32.mrf.mxu0
        %v3271 = vadd.f32 %v3110, %v3270
        %v3272 = vpop.f32.mrf.mxu0
        %v3273 = vpop.f32.mrf.mxu0
        %v3274 = vadd.f32 %v3113, %v3273
        %v3275 = vpop.f32.mrf.mxu0
        %3276 = vmatprep.mubr.bf16.mxu0 %v1005
        %3277 = vmatmul.mubr.bf16.gmra.mxu0 %v860
        %v3278 = vpop.f32.mrf.mxu0
        %v3279 = vadd.f32 %v3118, %v3278
        %v3280 = vpop.f32.mrf.mxu0
        %v3281 = vpop.f32.mrf.mxu0
        %v3282 = vadd.f32 %v3121, %v3281
        %v3283 = vpop.f32.mrf.mxu0
        %3284 = vmatprep.mubr.bf16.mxu0 %v1006
        %3285 = vmatmul.mubr.bf16.gmra.mxu0 %v861
        %v3286 = vpop.f32.mrf.mxu0
        %v3287 = vadd.f32 %v3126, %v3286
        %v3288 = vpop.f32.mrf.mxu0
        %v3289 = vpop.f32.mrf.mxu0
        %v3290 = vadd.f32 %v3129, %v3289
        %v3291 = vpop.f32.mrf.mxu0
        %3292 = vmatprep.mubr.bf16.mxu0 %v1007
        %3293 = vmatmul.mubr.bf16.gmra.mxu0 %v862
        %v3294 = vpop.f32.mrf.mxu0
        %v3295 = vadd.f32 %v3134, %v3294
        %v3296 = vpop.f32.mrf.mxu0
        %v3297 = vpop.f32.mrf.mxu0
        %v3298 = vadd.f32 %v3137, %v3297
        %v3299 = vpop.f32.mrf.mxu0
        %3300 = vmatprep.mubr.bf16.mxu0 %v1008
        %3301 = vmatmul.mubr.bf16.gmra.mxu0 %v863
        %v3302 = vpop.f32.mrf.mxu0
        %v3303 = vadd.f32 %v3142, %v3302
        %v3304 = vpop.f32.mrf.mxu0
        %v3305 = vpop.f32.mrf.mxu0
        %v3306 = vadd.f32 %v3145, %v3305
        %v3307 = vpop.f32.mrf.mxu0
        %3308 = vmatprep.mubr.bf16.mxu0 %v1009
        %3309 = vmatmul.mubr.bf16.gmra.mxu0 %v864
        %v3310 = vpop.f32.mrf.mxu0
        %v3311 = vadd.f32 %v3150, %v3310
        %v3312 = vpop.f32.mrf.mxu0
        %v3313 = vpop.f32.mrf.mxu0
        %v3314 = vadd.f32 %v3153, %v3313
        %v3315 = vpop.f32.mrf.mxu0
        %3316 = vmatprep.mubr.bf16.mxu0 %v1010
        %3317 = vmatmul.mubr.bf16.gmra.mxu0 %v865
        %v3318 = vpop.f32.mrf.mxu0
        %v3319 = vadd.f32 %v3158, %v3318
        %v3320 = vpop.f32.mrf.mxu0
        %v3321 = vpop.f32.mrf.mxu0
        %v3322 = vadd.f32 %v3161, %v3321
        %v3323 = vpop.f32.mrf.mxu0
        %3324 = vmatprep.mubr.bf16.mxu0 %v1011
        %3325 = vmatmul.mubr.bf16.gmra.mxu0 %v866
        %v3326 = vpop.f32.mrf.mxu0
        %v3327 = vadd.f32 %v3166, %v3326
        %v3328 = vpop.f32.mrf.mxu0
        %v3329 = vpop.f32.mrf.mxu0
        %v3330 = vadd.f32 %v3169, %v3329
        %v3331 = vpop.f32.mrf.mxu0
        %3332 = vmatprep.mubr.bf16.mxu0 %v1012
        %3333 = vmatmul.mubr.bf16.gmra.mxu0 %v867
        %v3334 = vpop.f32.mrf.mxu0
        %v3335 = vadd.f32 %v3174, %v3334
        %v3336 = vpop.f32.mrf.mxu0
        %v3337 = vpop.f32.mrf.mxu0
        %v3338 = vadd.f32 %v3177, %v3337
        %v3339 = vpop.f32.mrf.mxu0
        %3340 = vmatprep.mubr.bf16.mxu0 0
        %3341 = vmatmul.mubr.bf16.gmra.mxu0 0
        %v3342 = vpop.f32.mrf.mxu0
        %v3343 = vadd.f32 %v3182, %v3342
        %v3344 = vpop.f32.mrf.mxu0
        %v3345 = vpop.f32.mrf.mxu0
        %v3346 = vadd.f32 %v3185, %v3345
        %v3347 = vpop.f32.mrf.mxu0
        %3348 = vmatprep.mubr.bf16.mxu0 0
        %3349 = vmatmul.mubr.bf16.gmra.mxu0 0
        %v3350 = vpop.f32.mrf.mxu0
        %v3351 = vadd.f32 %v3190, %v3350
        %v3352 = vpop.f32.mrf.mxu0
        %v3353 = vpop.f32.mrf.mxu0
        %v3354 = vadd.f32 %v3193, %v3353
        %v3355 = vpop.f32.mrf.mxu0
        %3356 = vdwg.mxu0
        %v3357 = vadd.f32 %v2747, %v3231
        %v3358 = vadd.f32 %v2748, %v3234
        %v3359 = vadd.f32 %v2749, %v3239
        %v3360 = vadd.f32 %v2750, %v3242
        %v3361 = vadd.f32 %v2751, %v3247
        %v3362 = vadd.f32 %v2752, %v3250
        %v3363 = vadd.f32 %v2753, %v3255
        %v3364 = vadd.f32 %v2754, %v3258
        %v3365 = vadd.f32 %v2755, %v3263
        %v3366 = vadd.f32 %v2756, %v3266
        %v3367 = vadd.f32 %v2757, %v3271
        %v3368 = vadd.f32 %v2758, %v3274
        %v3369 = vadd.f32 %v2759, %v3279
        %v3370 = vadd.f32 %v2760, %v3282
        %v3371 = vadd.f32 %v2761, %v3287
        %v3372 = vadd.f32 %v2762, %v3290
        %v3373 = vadd.f32 %v2763, %v3295
        %v3374 = vadd.f32 %v2764, %v3298
        %v3375 = vadd.f32 %v2765, %v3303
        %v3376 = vadd.f32 %v2766, %v3306
        %v3377 = vadd.f32 %v2767, %v3311
        %v3378 = vadd.f32 %v2768, %v3314
        %v3379 = vadd.f32 %v2769, %v3319
        %v3380 = vadd.f32 %v2770, %v3322
        %v3381 = vadd.f32 %v2771, %v3327
        %v3382 = vadd.f32 %v2772, %v3330
        %v3383 = vadd.f32 %v2773, %v3335
        %v3384 = vadd.f32 %v2774, %v3338
        %v3385 = vadd.f32 %v2775, %v3343
        %v3386 = vadd.f32 %v2776, %v3346
        %v3387 = vadd.f32 %v2777, %v3351
        %v3388 = vadd.f32 %v2778, %v3354
        %v3389 = vadd.f32 %v3357, %v3358
        %v3390 = vadd.f32 %v3389, %v3359
        %v3391 = vadd.f32 %v3390, %v3360
        %v3392 = vadd.f32 %v3391, %v3361
        %v3393 = vadd.f32 %v3392, %v3362
        %v3394 = vadd.f32 %v3393, %v3363
        %v3395 = vadd.f32 %v3394, %v3364
        %v3396 = vadd.f32 %v3395, %v3365
        %v3397 = vadd.f32 %v3396, %v3366
        %v3398 = vadd.f32 %v3397, %v3367
        %v3399 = vadd.f32 %v3398, %v3368
        %v3400 = vadd.f32 %v3399, %v3369
        %v3401 = vadd.f32 %v3400, %v3370
        %v3402 = vadd.f32 %v3401, %v3371
        %v3403 = vadd.f32 %v3402, %v3372
        %v3404 = vadd.f32 %v3403, %v3373
        %v3405 = vadd.f32 %v3404, %v3374
        %v3406 = vadd.f32 %v3405, %v3375
        %v3407 = vadd.f32 %v3406, %v3376
        %v3408 = vadd.f32 %v3407, %v3377
        %v3409 = vadd.f32 %v3408, %v3378
        %v3410 = vadd.f32 %v3409, %v3379
        %v3411 = vadd.f32 %v3410, %v3380
        %v3412 = vadd.f32 %v3411, %v3381
        %v3413 = vadd.f32 %v3412, %v3382
        %v3414 = vadd.f32 %v3413, %v3383
        %v3415 = vadd.f32 %v3414, %v3384
        %v3416 = vadd.f32 %v3415, %v3385
        %v3417 = vadd.f32 %v3416, %v3386
        %v3418 = vadd.f32 %v3417, %v3387
        %v3419 = vadd.f32 %v3418, %v3388
        %v3420 = vrot.slane %v3419, 4
        %v3421 = vadd.f32 %v3419, %v3420
        %v3422 = vrot.slane %v3421, 2
        %v3423 = vadd.f32 %v3421, %v3422
        %v3424 = vrot.slane %v3423, 1
        %v3425 = vadd.f32 %v3423, %v3424
        %v3426 = vmul.f32 %v3357, %v3357
        %v3427 = vmul.f32 %v3358, %v3358
        %v3428 = vmul.f32 %v3359, %v3359
        %v3429 = vmul.f32 %v3360, %v3360
        %v3430 = vmul.f32 %v3361, %v3361
        %v3431 = vmul.f32 %v3362, %v3362
        %v3432 = vmul.f32 %v3363, %v3363
        %v3433 = vmul.f32 %v3364, %v3364
        %v3434 = vmul.f32 %v3365, %v3365
        %v3435 = vmul.f32 %v3366, %v3366
        %v3436 = vmul.f32 %v3367, %v3367
        %v3437 = vmul.f32 %v3368, %v3368
        %v3438 = vmul.f32 %v3369, %v3369
        %v3439 = vmul.f32 %v3370, %v3370
        %v3440 = vmul.f32 %v3371, %v3371
        %v3441 = vmul.f32 %v3372, %v3372
        %v3442 = vmul.f32 %v3373, %v3373
        %v3443 = vmul.f32 %v3374, %v3374
        %v3444 = vmul.f32 %v3375, %v3375
        %v3445 = vmul.f32 %v3376, %v3376
        %v3446 = vmul.f32 %v3377, %v3377
        %v3447 = vmul.f32 %v3378, %v3378
        %v3448 = vmul.f32 %v3379, %v3379
        %v3449 = vmul.f32 %v3380, %v3380
        %v3450 = vmul.f32 %v3381, %v3381
        %v3451 = vmul.f32 %v3382, %v3382
        %v3452 = vmul.f32 %v3383, %v3383
        %v3453 = vmul.f32 %v3384, %v3384
        %v3454 = vmul.f32 %v3385, %v3385
        %v3455 = vmul.f32 %v3386, %v3386
        %v3456 = vmul.f32 %v3387, %v3387
        %v3457 = vmul.f32 %v3388, %v3388
        %v3458 = vadd.f32 %v3426, %v3427
        %v3459 = vadd.f32 %v3458, %v3428
        %v3460 = vadd.f32 %v3459, %v3429
        %v3461 = vadd.f32 %v3460, %v3430
        %v3462 = vadd.f32 %v3461, %v3431
        %v3463 = vadd.f32 %v3462, %v3432
        %v3464 = vadd.f32 %v3463, %v3433
        %v3465 = vadd.f32 %v3464, %v3434
        %v3466 = vadd.f32 %v3465, %v3435
        %v3467 = vadd.f32 %v3466, %v3436
        %v3468 = vadd.f32 %v3467, %v3437
        %v3469 = vadd.f32 %v3468, %v3438
        %v3470 = vadd.f32 %v3469, %v3439
        %v3471 = vadd.f32 %v3470, %v3440
        %v3472 = vadd.f32 %v3471, %v3441
        %v3473 = vadd.f32 %v3472, %v3442
        %v3474 = vadd.f32 %v3473, %v3443
        %v3475 = vadd.f32 %v3474, %v3444
        %v3476 = vadd.f32 %v3475, %v3445
        %v3477 = vadd.f32 %v3476, %v3446
        %v3478 = vadd.f32 %v3477, %v3447
        %v3479 = vadd.f32 %v3478, %v3448
        %v3480 = vadd.f32 %v3479, %v3449
        %v3481 = vadd.f32 %v3480, %v3450
        %v3482 = vadd.f32 %v3481, %v3451
        %v3483 = vadd.f32 %v3482, %v3452
        %v3484 = vadd.f32 %v3483, %v3453
        %v3485 = vadd.f32 %v3484, %v3454
        %v3486 = vadd.f32 %v3485, %v3455
        %v3487 = vadd.f32 %v3486, %v3456
        %v3488 = vadd.f32 %v3487, %v3457
        %v3489 = vrot.slane %v3488, 4
        %v3490 = vadd.f32 %v3488, %v3489
        %v3491 = vrot.slane %v3490, 2
        %v3492 = vadd.f32 %v3490, %v3491
        %v3493 = vrot.slane %v3492, 1
        %v3494 = vadd.f32 %v3492, %v3493
        %v3495 = vmul.f32 %v3425, 0.00390625
        %v3496 = vmul.f32 %v3494, 0.00390625
        %v3497 = vmul.f32 %v3495, %v3495
        %v3498 = vsub.f32 %v3496, %v3497
        %v3499 = vmax.f32 %v3498, 0.0
        %v3500 = vadd.f32 %v3499, 1e-05
        %v3501 = vrsqrt.pop %v3500
        %v3502 = vmul.f32 %v3501, %v337
        %v3503 = vmul.f32 %v3495, %v3502
        %v3505 = vrot.slane %v3503, 7
        %v3507 = vsub.f32 %v337, %v3505
        %v3508 = vlaneseq
        %v3509 = vshrl.u32 %v3508, 7
        %v3510 = vsub.s32 0, %v3509
        %v3511 = vrot.slane %v3502, %v3510
        %v3512 = vmul.f32 %v3357, %v3511
        %v3513 = vmul.f32 %v3358, %v3511
        %v3514 = vmul.f32 %v3359, %v3511
        %v3515 = vmul.f32 %v3360, %v3511
        %v3516 = vmul.f32 %v3361, %v3511
        %v3517 = vmul.f32 %v3362, %v3511
        %v3518 = vmul.f32 %v3363, %v3511
        %v3519 = vmul.f32 %v3364, %v3511
        %v3520 = vmul.f32 %v3365, %v3511
        %v3521 = vmul.f32 %v3366, %v3511
        %v3522 = vmul.f32 %v3367, %v3511
        %v3523 = vmul.f32 %v3368, %v3511
        %v3524 = vmul.f32 %v3369, %v3511
        %v3525 = vmul.f32 %v3370, %v3511
        %v3526 = vmul.f32 %v3371, %v3511
        %v3527 = vmul.f32 %v3372, %v3511
        %v3528 = vmul.f32 %v3373, %v3511
        %v3529 = vmul.f32 %v3374, %v3511
        %v3530 = vmul.f32 %v3375, %v3511
        %v3531 = vmul.f32 %v3376, %v3511
        %v3532 = vmul.f32 %v3377, %v3511
        %v3533 = vmul.f32 %v3378, %v3511
        %v3534 = vmul.f32 %v3379, %v3511
        %v3535 = vmul.f32 %v3380, %v3511
        %v3536 = vmul.f32 %v3381, %v3511
        %v3537 = vmul.f32 %v3382, %v3511
        %v3538 = vmul.f32 %v3383, %v3511
        %v3539 = vmul.f32 %v3384, %v3511
        %v3540 = vmul.f32 %v3385, %v3511
        %v3541 = vmul.f32 %v3386, %v3511
        %v3542 = vmul.f32 %v3387, %v3511
        %v3543 = vmul.f32 %v3388, %v3511
        %v3544 = vlaneseq
        %v3545 = vshrl.u32 %v3544, 7
        %v3546 = vsub.s32 1, %v3545
        %v3547 = vrot.slane %v3507, %v3546
        %v3548 = vadd.f32 %v3512, %v3547
        %v3549 = vadd.f32 %v3513, %v3547
        %v3550 = vadd.f32 %v3514, %v3547
        %v3551 = vadd.f32 %v3515, %v3547
        %v3552 = vadd.f32 %v3516, %v3547
        %v3553 = vadd.f32 %v3517, %v3547
        %v3554 = vadd.f32 %v3518, %v3547
        %v3555 = vadd.f32 %v3519, %v3547
        %v3556 = vadd.f32 %v3520, %v3547
        %v3557 = vadd.f32 %v3521, %v3547
        %v3558 = vadd.f32 %v3522, %v3547
        %v3559 = vadd.f32 %v3523, %v3547
        %v3560 = vadd.f32 %v3524, %v3547
        %v3561 = vadd.f32 %v3525, %v3547
        %v3562 = vadd.f32 %v3526, %v3547
        %v3563 = vadd.f32 %v3527, %v3547
        %v3564 = vadd.f32 %v3528, %v3547
        %v3565 = vadd.f32 %v3529, %v3547
        %v3566 = vadd.f32 %v3530, %v3547
        %v3567 = vadd.f32 %v3531, %v3547
        %v3568 = vadd.f32 %v3532, %v3547
        %v3569 = vadd.f32 %v3533, %v3547
        %v3570 = vadd.f32 %v3534, %v3547
        %v3571 = vadd.f32 %v3535, %v3547
        %v3572 = vadd.f32 %v3536, %v3547
        %v3573 = vadd.f32 %v3537, %v3547
        %v3574 = vadd.f32 %v3538, %v3547
        %v3575 = vadd.f32 %v3539, %v3547
        %v3576 = vadd.f32 %v3540, %v3547
        %v3577 = vadd.f32 %v3541, %v3547
        %v3578 = vadd.f32 %v3542, %v3547
        %v3579 = vadd.f32 %v3543, %v3547
        %vm3580 = vcmp.gt.f32.partialorder %v3548, 0.0
        %vm3581 = vcmp.gt.f32.partialorder %v3549, 0.0
        %vm3582 = vcmp.gt.f32.partialorder %v3550, 0.0
        %vm3583 = vcmp.gt.f32.partialorder %v3551, 0.0
        %vm3584 = vcmp.gt.f32.partialorder %v3552, 0.0
        %vm3585 = vcmp.gt.f32.partialorder %v3553, 0.0
        %vm3586 = vcmp.gt.f32.partialorder %v3554, 0.0
        %vm3587 = vcmp.gt.f32.partialorder %v3555, 0.0
        %vm3588 = vcmp.gt.f32.partialorder %v3556, 0.0
        %vm3589 = vcmp.gt.f32.partialorder %v3557, 0.0
        %vm3590 = vcmp.gt.f32.partialorder %v3558, 0.0
        %vm3591 = vcmp.gt.f32.partialorder %v3559, 0.0
        %vm3592 = vcmp.gt.f32.partialorder %v3560, 0.0
        %vm3593 = vcmp.gt.f32.partialorder %v3561, 0.0
        %vm3594 = vcmp.gt.f32.partialorder %v3562, 0.0
        %vm3595 = vcmp.gt.f32.partialorder %v3563, 0.0
        %vm3596 = vcmp.gt.f32.partialorder %v3564, 0.0
        %vm3597 = vcmp.gt.f32.partialorder %v3565, 0.0
        %vm3598 = vcmp.gt.f32.partialorder %v3566, 0.0
        %vm3599 = vcmp.gt.f32.partialorder %v3567, 0.0
        %vm3600 = vcmp.gt.f32.partialorder %v3568, 0.0
        %vm3601 = vcmp.gt.f32.partialorder %v3569, 0.0
        %vm3602 = vcmp.gt.f32.partialorder %v3570, 0.0
        %vm3603 = vcmp.gt.f32.partialorder %v3571, 0.0
        %vm3604 = vcmp.gt.f32.partialorder %v3572, 0.0
        %vm3605 = vcmp.gt.f32.partialorder %v3573, 0.0
        %vm3606 = vcmp.gt.f32.partialorder %v3574, 0.0
        %vm3607 = vcmp.gt.f32.partialorder %v3575, 0.0
        %vm3608 = vcmp.gt.f32.partialorder %v3576, 0.0
        %vm3609 = vcmp.gt.f32.partialorder %v3577, 0.0
        %vm3610 = vcmp.gt.f32.partialorder %v3578, 0.0
        %vm3611 = vcmp.gt.f32.partialorder %v3579, 0.0
        %v3612 = vlaneseq
        %v3613 = vshrl.u32 %v3612, 7
        %v3614 = vsub.s32 2, %v3613
        %v3615 = vrot.slane %v337, %v3614
        %v3616 = vmul.f32 %v3615, %v3548
        %v3617 = vmul.f32 %v3615, %v3549
        %v3618 = vmul.f32 %v3615, %v3550
        %v3619 = vmul.f32 %v3615, %v3551
        %v3620 = vmul.f32 %v3615, %v3552
        %v3621 = vmul.f32 %v3615, %v3553
        %v3622 = vmul.f32 %v3615, %v3554
        %v3623 = vmul.f32 %v3615, %v3555
        %v3624 = vmul.f32 %v3615, %v3556
        %v3625 = vmul.f32 %v3615, %v3557
        %v3626 = vmul.f32 %v3615, %v3558
        %v3627 = vmul.f32 %v3615, %v3559
        %v3628 = vmul.f32 %v3615, %v3560
        %v3629 = vmul.f32 %v3615, %v3561
        %v3630 = vmul.f32 %v3615, %v3562
        %v3631 = vmul.f32 %v3615, %v3563
        %v3632 = vmul.f32 %v3615, %v3564
        %v3633 = vmul.f32 %v3615, %v3565
        %v3634 = vmul.f32 %v3615, %v3566
        %v3635 = vmul.f32 %v3615, %v3567
        %v3636 = vmul.f32 %v3615, %v3568
        %v3637 = vmul.f32 %v3615, %v3569
        %v3638 = vmul.f32 %v3615, %v3570
        %v3639 = vmul.f32 %v3615, %v3571
        %v3640 = vmul.f32 %v3615, %v3572
        %v3641 = vmul.f32 %v3615, %v3573
        %v3642 = vmul.f32 %v3615, %v3574
        %v3643 = vmul.f32 %v3615, %v3575
        %v3644 = vmul.f32 %v3615, %v3576
        %v3645 = vmul.f32 %v3615, %v3577
        %v3646 = vmul.f32 %v3615, %v3578
        %v3647 = vmul.f32 %v3615, %v3579
        %v3648 = vsel %vm3580, %v3548, %v3616
        %v3649 = vsel %vm3581, %v3549, %v3617
        %v3650 = vsel %vm3582, %v3550, %v3618
        %v3651 = vsel %vm3583, %v3551, %v3619
        %v3652 = vsel %vm3584, %v3552, %v3620
        %v3653 = vsel %vm3585, %v3553, %v3621
        %v3654 = vsel %vm3586, %v3554, %v3622
        %v3655 = vsel %vm3587, %v3555, %v3623
        %v3656 = vsel %vm3588, %v3556, %v3624
        %v3657 = vsel %vm3589, %v3557, %v3625
        %v3658 = vsel %vm3590, %v3558, %v3626
        %v3659 = vsel %vm3591, %v3559, %v3627
        %v3660 = vsel %vm3592, %v3560, %v3628
        %v3661 = vsel %vm3593, %v3561, %v3629
        %v3662 = vsel %vm3594, %v3562, %v3630
        %v3663 = vsel %vm3595, %v3563, %v3631
        %v3664 = vsel %vm3596, %v3564, %v3632
        %v3665 = vsel %vm3597, %v3565, %v3633
        %v3666 = vsel %vm3598, %v3566, %v3634
        %v3667 = vsel %vm3599, %v3567, %v3635
        %v3668 = vsel %vm3600, %v3568, %v3636
        %v3669 = vsel %vm3601, %v3569, %v3637
        %v3670 = vsel %vm3602, %v3570, %v3638
        %v3671 = vsel %vm3603, %v3571, %v3639
        %v3672 = vsel %vm3604, %v3572, %v3640
        %v3673 = vsel %vm3605, %v3573, %v3641
        %v3674 = vsel %vm3606, %v3574, %v3642
        %v3675 = vsel %vm3607, %v3575, %v3643
        %v3676 = vsel %vm3608, %v3576, %v3644
        %v3677 = vsel %vm3609, %v3577, %v3645
        %v3678 = vsel %vm3610, %v3578, %v3646
        %v3679 = vsel %vm3611, %v3579, %v3647
        %v3712 = vrot.slane %v3648, 7
        %v3713 = vrot.slane %v3649, 7
        %v3714 = vsel %vm562, %v3712, %v3713
        %v3715 = vrot.slane %v3650, 7
        %v3716 = vsel %vm562, %v3713, %v3715
        %v3717 = vrot.slane %v3651, 7
        %v3718 = vsel %vm562, %v3715, %v3717
        %v3719 = vrot.slane %v3652, 7
        %v3720 = vsel %vm562, %v3717, %v3719
        %v3721 = vrot.slane %v3653, 7
        %v3722 = vsel %vm562, %v3719, %v3721
        %v3723 = vrot.slane %v3654, 7
        %v3724 = vsel %vm562, %v3721, %v3723
        %v3725 = vrot.slane %v3655, 7
        %v3726 = vsel %vm562, %v3723, %v3725
        %v3727 = vrot.slane %v3656, 7
        %v3728 = vsel %vm562, %v3725, %v3727
        %v3729 = vrot.slane %v3657, 7
        %v3730 = vsel %vm562, %v3727, %v3729
        %v3731 = vrot.slane %v3658, 7
        %v3732 = vsel %vm562, %v3729, %v3731
        %v3733 = vrot.slane %v3659, 7
        %v3734 = vsel %vm562, %v3731, %v3733
        %v3735 = vrot.slane %v3660, 7
        %v3736 = vsel %vm562, %v3733, %v3735
        %v3737 = vrot.slane %v3661, 7
        %v3738 = vsel %vm562, %v3735, %v3737
        %v3739 = vrot.slane %v3662, 7
        %v3740 = vsel %vm562, %v3737, %v3739
        %v3741 = vrot.slane %v3663, 7
        %v3742 = vsel %vm562, %v3739, %v3741
        %v3743 = vrot.slane %v3664, 7
        %v3744 = vsel %vm562, %v3741, %v3743
        %v3745 = vrot.slane %v3665, 7
        %v3746 = vsel %vm562, %v3743, %v3745
        %v3747 = vrot.slane %v3666, 7
        %v3748 = vsel %vm562, %v3745, %v3747
        %v3749 = vrot.slane %v3667, 7
        %v3750 = vsel %vm562, %v3747, %v3749
        %v3751 = vrot.slane %v3668, 7
        %v3752 = vsel %vm562, %v3749, %v3751
        %v3753 = vrot.slane %v3669, 7
        %v3754 = vsel %vm562, %v3751, %v3753
        %v3755 = vrot.slane %v3670, 7
        %v3756 = vsel %vm562, %v3753, %v3755
        %v3757 = vrot.slane %v3671, 7
        %v3758 = vsel %vm562, %v3755, %v3757
        %v3759 = vrot.slane %v3672, 7
        %v3760 = vsel %vm562, %v3757, %v3759
        %v3761 = vrot.slane %v3673, 7
        %v3762 = vsel %vm562, %v3759, %v3761
        %v3763 = vrot.slane %v3674, 7
        %v3764 = vsel %vm562, %v3761, %v3763
        %v3765 = vrot.slane %v3675, 7
        %v3766 = vsel %vm562, %v3763, %v3765
        %v3767 = vrot.slane %v3676, 7
        %v3768 = vsel %vm562, %v3765, %v3767
        %v3769 = vrot.slane %v3677, 7
        %v3770 = vsel %vm562, %v3767, %v3769
        %v3771 = vrot.slane %v3678, 7
        %v3772 = vsel %vm562, %v3769, %v3771
        %v3773 = vrot.slane %v3679, 7
        %v3774 = vsel %vm562, %v3771, %v3773
        %v3807 = vsel %vm562, 0.0, %v3712
        %v3808 = vsel %vm434, %v3807, 0.0
        %v3809 = vsel %vm435, %v3714, 0.0
        %v3810 = vsel %vm436, %v3716, 0.0
        %v3811 = vsel %vm437, %v3718, 0.0
        %v3812 = vsel %vm438, %v3720, 0.0
        %v3813 = vsel %vm439, %v3722, 0.0
        %v3814 = vsel %vm440, %v3724, 0.0
        %v3815 = vsel %vm441, %v3726, 0.0
        %v3816 = vsel %vm442, %v3728, 0.0
        %v3817 = vsel %vm443, %v3730, 0.0
        %v3818 = vsel %vm444, %v3732, 0.0
        %v3819 = vsel %vm445, %v3734, 0.0
        %v3820 = vsel %vm446, %v3736, 0.0
        %v3821 = vsel %vm447, %v3738, 0.0
        %v3822 = vsel %vm448, %v3740, 0.0
        %v3823 = vsel %vm449, %v3742, 0.0
        %v3824 = vsel %vm450, %v3744, 0.0
        %v3825 = vsel %vm451, %v3746, 0.0
        %v3826 = vsel %vm452, %v3748, 0.0
        %v3827 = vsel %vm453, %v3750, 0.0
        %v3828 = vsel %vm454, %v3752, 0.0
        %v3829 = vsel %vm455, %v3754, 0.0
        %v3830 = vsel %vm456, %v3756, 0.0
        %v3831 = vsel %vm457, %v3758, 0.0
        %v3832 = vsel %vm458, %v3760, 0.0
        %v3833 = vsel %vm459, %v3762, 0.0
        %v3834 = vsel %vm460, %v3764, 0.0
        %v3835 = vsel %vm461, %v3766, 0.0
        %v3836 = vsel %vm462, %v3768, 0.0
        %v3837 = vsel %vm463, %v3770, 0.0
        %v3838 = vsel %vm464, %v3772, 0.0
        %v3839 = vsel %vm465, %v3774, 0.0
        %v3840 = vpack.c.bf16 %v3809, %v3808
        %v3841 = vpack.c.bf16 %v3811, %v3810
        %v3842 = vpack.c.bf16 %v3813, %v3812
        %v3843 = vpack.c.bf16 %v3815, %v3814
        %v3844 = vpack.c.bf16 %v3817, %v3816
        %v3845 = vpack.c.bf16 %v3819, %v3818
        %v3846 = vpack.c.bf16 %v3821, %v3820
        %v3847 = vpack.c.bf16 %v3823, %v3822
        %v3848 = vpack.c.bf16 %v3825, %v3824
        %v3849 = vpack.c.bf16 %v3827, %v3826
        %v3850 = vpack.c.bf16 %v3829, %v3828
        %v3851 = vpack.c.bf16 %v3831, %v3830
        %v3852 = vpack.c.bf16 %v3833, %v3832
        %v3853 = vpack.c.bf16 %v3835, %v3834
        %v3854 = vpack.c.bf16 %v3837, %v3836
        %v3855 = vpack.c.bf16 %v3839, %v3838
        %v3856 = vpack.c.bf16 %v3649, %v3648
        %v3857 = vpack.c.bf16 %v3651, %v3650
        %v3858 = vpack.c.bf16 %v3653, %v3652
        %v3859 = vpack.c.bf16 %v3655, %v3654
        %v3860 = vpack.c.bf16 %v3657, %v3656
        %v3861 = vpack.c.bf16 %v3659, %v3658
        %v3862 = vpack.c.bf16 %v3661, %v3660
        %v3863 = vpack.c.bf16 %v3663, %v3662
        %v3864 = vpack.c.bf16 %v3665, %v3664
        %v3865 = vpack.c.bf16 %v3667, %v3666
        %v3866 = vpack.c.bf16 %v3669, %v3668
        %v3867 = vpack.c.bf16 %v3671, %v3670
        %v3868 = vpack.c.bf16 %v3673, %v3672
        %v3869 = vpack.c.bf16 %v3675, %v3674
        %v3870 = vpack.c.bf16 %v3677, %v3676
        %v3871 = vpack.c.bf16 %v3679, %v3678
        %v3872 = vrot.slane %v3648, 1
        %v3873 = vrot.slane %v3649, 1
        %v3874 = vsel %vm723, %v3872, %v3873
        %v3875 = vrot.slane %v3650, 1
        %v3876 = vsel %vm723, %v3873, %v3875
        %v3877 = vrot.slane %v3651, 1
        %v3878 = vsel %vm723, %v3875, %v3877
        %v3879 = vrot.slane %v3652, 1
        %v3880 = vsel %vm723, %v3877, %v3879
        %v3881 = vrot.slane %v3653, 1
        %v3882 = vsel %vm723, %v3879, %v3881
        %v3883 = vrot.slane %v3654, 1
        %v3884 = vsel %vm723, %v3881, %v3883
        %v3885 = vrot.slane %v3655, 1
        %v3886 = vsel %vm723, %v3883, %v3885
        %v3887 = vrot.slane %v3656, 1
        %v3888 = vsel %vm723, %v3885, %v3887
        %v3889 = vrot.slane %v3657, 1
        %v3890 = vsel %vm723, %v3887, %v3889
        %v3891 = vrot.slane %v3658, 1
        %v3892 = vsel %vm723, %v3889, %v3891
        %v3893 = vrot.slane %v3659, 1
        %v3894 = vsel %vm723, %v3891, %v3893
        %v3895 = vrot.slane %v3660, 1
        %v3896 = vsel %vm723, %v3893, %v3895
        %v3897 = vrot.slane %v3661, 1
        %v3898 = vsel %vm723, %v3895, %v3897
        %v3899 = vrot.slane %v3662, 1
        %v3900 = vsel %vm723, %v3897, %v3899
        %v3901 = vrot.slane %v3663, 1
        %v3902 = vsel %vm723, %v3899, %v3901
        %v3903 = vrot.slane %v3664, 1
        %v3904 = vsel %vm723, %v3901, %v3903
        %v3905 = vrot.slane %v3665, 1
        %v3906 = vsel %vm723, %v3903, %v3905
        %v3907 = vrot.slane %v3666, 1
        %v3908 = vsel %vm723, %v3905, %v3907
        %v3909 = vrot.slane %v3667, 1
        %v3910 = vsel %vm723, %v3907, %v3909
        %v3911 = vrot.slane %v3668, 1
        %v3912 = vsel %vm723, %v3909, %v3911
        %v3913 = vrot.slane %v3669, 1
        %v3914 = vsel %vm723, %v3911, %v3913
        %v3915 = vrot.slane %v3670, 1
        %v3916 = vsel %vm723, %v3913, %v3915
        %v3917 = vrot.slane %v3671, 1
        %v3918 = vsel %vm723, %v3915, %v3917
        %v3919 = vrot.slane %v3672, 1
        %v3920 = vsel %vm723, %v3917, %v3919
        %v3921 = vrot.slane %v3673, 1
        %v3922 = vsel %vm723, %v3919, %v3921
        %v3923 = vrot.slane %v3674, 1
        %v3924 = vsel %vm723, %v3921, %v3923
        %v3925 = vrot.slane %v3675, 1
        %v3926 = vsel %vm723, %v3923, %v3925
        %v3927 = vrot.slane %v3676, 1
        %v3928 = vsel %vm723, %v3925, %v3927
        %v3929 = vrot.slane %v3677, 1
        %v3930 = vsel %vm723, %v3927, %v3929
        %v3931 = vrot.slane %v3678, 1
        %v3932 = vsel %vm723, %v3929, %v3931
        %v3933 = vrot.slane %v3679, 1
        %v3934 = vsel %vm723, %v3931, %v3933
        %v3967 = vsel %vm723, %v3933, 0.0
        %v3968 = vsel %vm466, %v3874, 0.0
        %v3969 = vsel %vm467, %v3876, 0.0
        %v3970 = vsel %vm468, %v3878, 0.0
        %v3971 = vsel %vm469, %v3880, 0.0
        %v3972 = vsel %vm470, %v3882, 0.0
        %v3973 = vsel %vm471, %v3884, 0.0
        %v3974 = vsel %vm472, %v3886, 0.0
        %v3975 = vsel %vm473, %v3888, 0.0
        %v3976 = vsel %vm474, %v3890, 0.0
        %v3977 = vsel %vm475, %v3892, 0.0
        %v3978 = vsel %vm476, %v3894, 0.0
        %v3979 = vsel %vm477, %v3896, 0.0
        %v3980 = vsel %vm478, %v3898, 0.0
        %v3981 = vsel %vm479, %v3900, 0.0
        %v3982 = vsel %vm480, %v3902, 0.0
        %v3983 = vsel %vm481, %v3904, 0.0
        %v3984 = vsel %vm482, %v3906, 0.0
        %v3985 = vsel %vm483, %v3908, 0.0
        %v3986 = vsel %vm484, %v3910, 0.0
        %v3987 = vsel %vm485, %v3912, 0.0
        %v3988 = vsel %vm486, %v3914, 0.0
        %v3989 = vsel %vm487, %v3916, 0.0
        %v3990 = vsel %vm488, %v3918, 0.0
        %v3991 = vsel %vm489, %v3920, 0.0
        %v3992 = vsel %vm490, %v3922, 0.0
        %v3993 = vsel %vm491, %v3924, 0.0
        %v3994 = vsel %vm492, %v3926, 0.0
        %v3995 = vsel %vm493, %v3928, 0.0
        %v3996 = vsel %vm494, %v3930, 0.0
        %v3997 = vsel %vm495, %v3932, 0.0
        %v3998 = vsel %vm496, %v3934, 0.0
        %v3999 = vsel %vm497, %v3967, 0.0
        %v4000 = vpack.c.bf16 %v3969, %v3968
        %v4001 = vpack.c.bf16 %v3971, %v3970
        %v4002 = vpack.c.bf16 %v3973, %v3972
        %v4003 = vpack.c.bf16 %v3975, %v3974
        %v4004 = vpack.c.bf16 %v3977, %v3976
        %v4005 = vpack.c.bf16 %v3979, %v3978
        %v4006 = vpack.c.bf16 %v3981, %v3980
        %v4007 = vpack.c.bf16 %v3983, %v3982
        %v4008 = vpack.c.bf16 %v3985, %v3984
        %v4009 = vpack.c.bf16 %v3987, %v3986
        %v4010 = vpack.c.bf16 %v3989, %v3988
        %v4011 = vpack.c.bf16 %v3991, %v3990
        %v4012 = vpack.c.bf16 %v3993, %v3992
        %v4013 = vpack.c.bf16 %v3995, %v3994
        %v4014 = vpack.c.bf16 %v3997, %v3996
        %v4015 = vpack.c.bf16 %v3999, %v3998
        %v4016 = vld [vmem:[#allocation7] sm:$0xf]
        %v4017 = vld [vmem:[#allocation7 + $0x4] sm:$0xf]
        %v4018 = vld [vmem:[#allocation7 + $0x8] sm:$0xf]
        %v4019 = vld [vmem:[#allocation7 + $0xc] sm:$0xf]
        %v4020 = vld [vmem:[#allocation7 + $0x10] sm:$0xf]
        %v4021 = vld [vmem:[#allocation7 + $0x14] sm:$0xf]
        %v4022 = vld [vmem:[#allocation7 + $0x18] sm:$0xf]
        %v4023 = vld [vmem:[#allocation7 + $0x1c] sm:$0xf]
        %v4024 = vld [vmem:[#allocation7 + $0x20] sm:$0xf]
        %v4025 = vld [vmem:[#allocation7 + $0x24] sm:$0xf]
        %v4026 = vld [vmem:[#allocation7 + $0x28] sm:$0xf]
        %v4027 = vld [vmem:[#allocation7 + $0x2c] sm:$0xf]
        %v4028 = vld [vmem:[#allocation7 + $0x30] sm:$0xf]
        %v4029 = vld [vmem:[#allocation7 + $0x34] sm:$0xf]
        %v4030 = vld [vmem:[#allocation7 + $0x38] sm:$0xf]
        %v4031 = vld [vmem:[#allocation7 + $0x3c] sm:$0xf]
        %v4032 = vld [vmem:[#allocation7 + $0x40] sm:$0xf]
        %v4033 = vld [vmem:[#allocation7 + $0x44] sm:$0xf]
        %v4034 = vld [vmem:[#allocation7 + $0x48] sm:$0xf]
        %v4035 = vld [vmem:[#allocation7 + $0x4c] sm:$0xf]
        %v4036 = vld [vmem:[#allocation7 + $0x50] sm:$0xf]
        %v4037 = vld [vmem:[#allocation7 + $0x54] sm:$0xf]
        %v4038 = vld [vmem:[#allocation7 + $0x58] sm:$0xf]
        %v4039 = vld [vmem:[#allocation7 + $0x5c] sm:$0xf]
        %v4040 = vld [vmem:[#allocation7 + $0x60] sm:$0xf]
        %v4041 = vld [vmem:[#allocation7 + $0x64] sm:$0xf]
        %v4042 = vld [vmem:[#allocation7 + $0x68] sm:$0xf]
        %v4043 = vld [vmem:[#allocation7 + $0x6c] sm:$0xf]
        %v4044 = vld [vmem:[#allocation7 + $0x70] sm:$0xf]
        %v4045 = vld [vmem:[#allocation7 + $0x74] sm:$0xf]
        %v4046 = vld [vmem:[#allocation7 + $0x78] sm:$0xf]
        %v4047 = vld [vmem:[#allocation7 + $0x7c] sm:$0xf]
        %v4048 = vld [vmem:[#allocation7 + $0x80] sm:$0xf]
        %v4049 = vld [vmem:[#allocation7 + $0x84] sm:$0xf]
        %v4050 = vld [vmem:[#allocation7 + $0x88] sm:$0xf]
        %v4051 = vld [vmem:[#allocation7 + $0x8c] sm:$0xf]
        %v4052 = vld [vmem:[#allocation7 + $0x90] sm:$0xf]
        %v4053 = vld [vmem:[#allocation7 + $0x94] sm:$0xf]
        %v4054 = vld [vmem:[#allocation7 + $0x98] sm:$0xf]
        %v4055 = vld [vmem:[#allocation7 + $0x9c] sm:$0xf]
        %v4056 = vld [vmem:[#allocation7 + $0xa0] sm:$0xf]
        %v4057 = vld [vmem:[#allocation7 + $0xa4] sm:$0xf]
        %v4058 = vld [vmem:[#allocation7 + $0xa8] sm:$0xf]
        %v4059 = vld [vmem:[#allocation7 + $0xac] sm:$0xf]
        %v4060 = vld [vmem:[#allocation7 + $0xb0] sm:$0xf]
        %v4061 = vld [vmem:[#allocation7 + $0xb4] sm:$0xf]
        %v4062 = vld [vmem:[#allocation7 + $0xb8] sm:$0xf]
        %v4063 = vld [vmem:[#allocation7 + $0xbc] sm:$0xf]
        %v4064 = vld [vmem:[#allocation7 + $0xc0] sm:$0xf]
        %v4065 = vld [vmem:[#allocation7 + $0xc4] sm:$0xf]
        %v4066 = vld [vmem:[#allocation7 + $0xc8] sm:$0xf]
        %v4067 = vld [vmem:[#allocation7 + $0xcc] sm:$0xf]
        %v4068 = vld [vmem:[#allocation7 + $0xd0] sm:$0xf]
        %v4069 = vld [vmem:[#allocation7 + $0xd4] sm:$0xf]
        %v4070 = vld [vmem:[#allocation7 + $0xd8] sm:$0xf]
        %v4071 = vld [vmem:[#allocation7 + $0xdc] sm:$0xf]
        %v4072 = vld [vmem:[#allocation7 + $0xe0] sm:$0xf]
        %v4073 = vld [vmem:[#allocation7 + $0xe4] sm:$0xf]
        %v4074 = vld [vmem:[#allocation7 + $0xe8] sm:$0xf]
        %v4075 = vld [vmem:[#allocation7 + $0xec] sm:$0xf]
        %v4076 = vld [vmem:[#allocation7 + $0xf0] sm:$0xf]
        %v4077 = vld [vmem:[#allocation7 + $0xf4] sm:$0xf]
        %v4078 = vld [vmem:[#allocation7 + $0xf8] sm:$0xf]
        %v4079 = vld [vmem:[#allocation7 + $0xfc] sm:$0xf]
        %v4080 = vld [vmem:[#allocation7 + $0x100] sm:$0xf]
        %v4081 = vld [vmem:[#allocation7 + $0x104] sm:$0xf]
        %v4082 = vld [vmem:[#allocation7 + $0x108] sm:$0xf]
        %v4083 = vld [vmem:[#allocation7 + $0x10c] sm:$0xf]
        %v4084 = vld [vmem:[#allocation7 + $0x110] sm:$0xf]
        %v4085 = vld [vmem:[#allocation7 + $0x114] sm:$0xf]
        %v4086 = vld [vmem:[#allocation7 + $0x118] sm:$0xf]
        %v4087 = vld [vmem:[#allocation7 + $0x11c] sm:$0xf]
        %v4088 = vld [vmem:[#allocation7 + $0x120] sm:$0xf]
        %v4089 = vld [vmem:[#allocation7 + $0x124] sm:$0xf]
        %v4090 = vld [vmem:[#allocation7 + $0x128] sm:$0xf]
        %v4091 = vld [vmem:[#allocation7 + $0x12c] sm:$0xf]
        %v4092 = vld [vmem:[#allocation7 + $0x130] sm:$0xf]
        %v4093 = vld [vmem:[#allocation7 + $0x134] sm:$0xf]
        %v4094 = vld [vmem:[#allocation7 + $0x138] sm:$0xf]
        %v4095 = vld [vmem:[#allocation7 + $0x13c] sm:$0xf]
        %v4096 = vld [vmem:[#allocation7 + $0x140] sm:$0xf]
        %v4097 = vld [vmem:[#allocation7 + $0x144] sm:$0xf]
        %v4098 = vld [vmem:[#allocation7 + $0x148] sm:$0xf]
        %v4099 = vld [vmem:[#allocation7 + $0x14c] sm:$0xf]
        %v4100 = vld [vmem:[#allocation7 + $0x150] sm:$0xf]
        %v4101 = vld [vmem:[#allocation7 + $0x154] sm:$0xf]
        %v4102 = vld [vmem:[#allocation7 + $0x158] sm:$0xf]
        %v4103 = vld [vmem:[#allocation7 + $0x15c] sm:$0xf]
        %v4104 = vld [vmem:[#allocation7 + $0x160] sm:$0xf]
        %v4105 = vld [vmem:[#allocation7 + $0x164] sm:$0xf]
        %v4106 = vld [vmem:[#allocation7 + $0x168] sm:$0xf]
        %v4107 = vld [vmem:[#allocation7 + $0x16c] sm:$0xf]
        %v4108 = vld [vmem:[#allocation7 + $0x170] sm:$0xf]
        %v4109 = vld [vmem:[#allocation7 + $0x174] sm:$0xf]
        %v4110 = vld [vmem:[#allocation7 + $0x178] sm:$0xf]
        %v4111 = vld [vmem:[#allocation7 + $0x17c] sm:$0xf]
        %v4160 = vunpack.c.l.b16 %v4064
        %v4161 = vunpack.c.l.b16 %v4065
        %v4162 = vunpack.c.l.b16 %v4066
        %v4163 = vunpack.c.l.b16 %v4067
        %v4164 = vunpack.c.l.b16 %v4068
        %v4165 = vunpack.c.l.b16 %v4069
        %v4166 = vunpack.c.l.b16 %v4070
        %v4167 = vunpack.c.l.b16 %v4071
        %v4168 = vunpack.c.l.b16 %v4072
        %v4169 = vunpack.c.l.b16 %v4073
        %v4170 = vunpack.c.l.b16 %v4074
        %v4171 = vunpack.c.l.b16 %v4075
        %v4172 = vunpack.c.l.b16 %v4076
        %v4173 = vunpack.c.l.b16 %v4077
        %v4174 = vunpack.c.l.b16 %v4078
        %v4175 = vunpack.c.l.b16 %v4079
        %v4176 = vunpack.c.l.b16 %v4080
        %v4177 = vunpack.c.l.b16 %v4081
        %v4178 = vunpack.c.l.b16 %v4082
        %v4179 = vunpack.c.l.b16 %v4083
        %v4180 = vunpack.c.l.b16 %v4084
        %v4181 = vunpack.c.l.b16 %v4085
        %v4182 = vunpack.c.l.b16 %v4086
        %v4183 = vunpack.c.l.b16 %v4087
        %v4184 = vunpack.c.l.b16 %v4088
        %v4185 = vunpack.c.l.b16 %v4089
        %v4186 = vunpack.c.l.b16 %v4090
        %v4187 = vunpack.c.l.b16 %v4091
        %v4188 = vunpack.c.l.b16 %v4092
        %v4189 = vunpack.c.l.b16 %v4093
        %v4190 = vunpack.c.l.b16 %v4094
        %v4191 = vunpack.c.l.b16 %v4095
        %v4192 = vunpack.c.l.b16 %v4096
        %v4193 = vunpack.c.l.b16 %v4097
        %v4194 = vunpack.c.l.b16 %v4098
        %v4195 = vunpack.c.l.b16 %v4099
        %v4196 = vunpack.c.l.b16 %v4100
        %v4197 = vunpack.c.l.b16 %v4101
        %v4198 = vunpack.c.l.b16 %v4102
        %v4199 = vunpack.c.l.b16 %v4103
        %v4200 = vunpack.c.l.b16 %v4104
        %v4201 = vunpack.c.l.b16 %v4105
        %v4202 = vunpack.c.l.b16 %v4106
        %v4203 = vunpack.c.l.b16 %v4107
        %v4204 = vunpack.c.l.b16 %v4108
        %v4205 = vunpack.c.l.b16 %v4109
        %v4206 = vunpack.c.l.b16 %v4110
        %v4207 = vunpack.c.l.b16 %v4111
        %v4208 = vpack.c.b16 %v4161, %v4160
        %v4209 = vpack.c.b16 %v4163, %v4162
        %v4210 = vpack.c.b16 %v4165, %v4164
        %v4211 = vpack.c.b16 %v4167, %v4166
        %v4212 = vpack.c.b16 %v4169, %v4168
        %v4213 = vpack.c.b16 %v4171, %v4170
        %v4214 = vpack.c.b16 %v4173, %v4172
        %v4215 = vpack.c.b16 %v4175, %v4174
        %v4216 = vpack.c.b16 %v4177, %v4176
        %v4217 = vpack.c.b16 %v4179, %v4178
        %v4218 = vpack.c.b16 %v4181, %v4180
        %v4219 = vpack.c.b16 %v4183, %v4182
        %v4220 = vpack.c.b16 %v4185, %v4184
        %v4221 = vpack.c.b16 %v4187, %v4186
        %v4222 = vpack.c.b16 %v4189, %v4188
        %v4223 = vpack.c.b16 %v4191, %v4190
        %v4224 = vpack.c.b16 %v4193, %v4192
        %v4225 = vpack.c.b16 %v4195, %v4194
        %v4226 = vpack.c.b16 %v4197, %v4196
        %v4227 = vpack.c.b16 %v4199, %v4198
        %v4228 = vpack.c.b16 %v4201, %v4200
        %v4229 = vpack.c.b16 %v4203, %v4202
        %v4230 = vpack.c.b16 %v4205, %v4204
        %v4231 = vpack.c.b16 %v4207, %v4206
        %4256 = vmatprep.subr.bf16.mxu0 0
        %4257 = vmatpush1.bf16.msra.mxu0 %v4215
        %4258 = vmatprep.subr.bf16.mxu0 0
        %4259 = vmatpush1.bf16.msra.mxu0 %v4214
        %4260 = vmatprep.subr.bf16.mxu0 0
        %4261 = vmatpush1.bf16.msra.mxu0 %v4213
        %4262 = vmatprep.subr.bf16.mxu0 0
        %4263 = vmatpush1.bf16.msra.mxu0 %v4212
        %4264 = vmatprep.subr.bf16.mxu0 0
        %4265 = vmatpush1.bf16.msra.mxu0 %v4211
        %4266 = vmatprep.subr.bf16.mxu0 0
        %4267 = vmatpush1.bf16.msra.mxu0 %v4210
        %4268 = vmatprep.subr.bf16.mxu0 0
        %4269 = vmatpush1.bf16.msra.mxu0 %v4209
        %4270 = vmatprep.subr.bf16.mxu0 0
        %4271 = vmatpush1.bf16.msra.mxu0 %v4208
        %4272 = vmatprep.subr.bf16.mxu0 0
        %4273 = vmatpush2.bf16.msra.mxu0 %v4223
        %4274 = vmatprep.subr.bf16.mxu0 0
        %4275 = vmatpush2.bf16.msra.mxu0 %v4222
        %4276 = vmatprep.subr.bf16.mxu0 0
        %4277 = vmatpush2.bf16.msra.mxu0 %v4221
        %4278 = vmatprep.subr.bf16.mxu0 0
        %4279 = vmatpush2.bf16.msra.mxu0 %v4220
        %4280 = vmatprep.subr.bf16.mxu0 0
        %4281 = vmatpush2.bf16.msra.mxu0 %v4219
        %4282 = vmatprep.subr.bf16.mxu0 0
        %4283 = vmatpush2.bf16.msra.mxu0 %v4218
        %4284 = vmatprep.subr.bf16.mxu0 0
        %4285 = vmatpush2.bf16.msra.mxu0 %v4217
        %4286 = vmatprep.subr.bf16.mxu0 0
        %4287 = vmatpush2.bf16.msra.mxu0 %v4216
        %4288 = vmatprep.mubr.bf16.mxu0 %v3856
        %4289 = vmatmul.mubr.bf16.gmra.mxu0 %v3840
        %v4290 = vpop.f32.mrf.mxu0
        %v4291 = vadd.f32 0.0, %v4290
        %v4292 = vpop.f32.mrf.mxu0
        %v4293 = vpop.f32.mrf.mxu0
        %v4294 = vadd.f32 0.0, %v4293
        %v4295 = vpop.f32.mrf.mxu0
        %4296 = vmatprep.mubr.bf16.mxu0 %v3857
        %4297 = vmatmul.mubr.bf16.gmra.mxu0 %v3841
        %v4298 = vpop.f32.mrf.mxu0
        %v4299 = vadd.f32 0.0, %v4298
        %v4300 = vpop.f32.mrf.mxu0
        %v4301 = vpop.f32.mrf.mxu0
        %v4302 = vadd.f32 0.0, %v4301
        %v4303 = vpop.f32.mrf.mxu0
        %4304 = vmatprep.mubr.bf16.mxu0 %v3858
        %4305 = vmatmul.mubr.bf16.gmra.mxu0 %v3842
        %v4306 = vpop.f32.mrf.mxu0
        %v4307 = vadd.f32 0.0, %v4306
        %v4308 = vpop.f32.mrf.mxu0
        %v4309 = vpop.f32.mrf.mxu0
        %v4310 = vadd.f32 0.0, %v4309
        %v4311 = vpop.f32.mrf.mxu0
        %4312 = vmatprep.mubr.bf16.mxu0 %v3859
        %4313 = vmatmul.mubr.bf16.gmra.mxu0 %v3843
        %v4314 = vpop.f32.mrf.mxu0
        %v4315 = vadd.f32 0.0, %v4314
        %v4316 = vpop.f32.mrf.mxu0
        %v4317 = vpop.f32.mrf.mxu0
        %v4318 = vadd.f32 0.0, %v4317
        %v4319 = vpop.f32.mrf.mxu0
        %4320 = vmatprep.mubr.bf16.mxu0 %v3860
        %4321 = vmatmul.mubr.bf16.gmra.mxu0 %v3844
        %v4322 = vpop.f32.mrf.mxu0
        %v4323 = vadd.f32 0.0, %v4322
        %v4324 = vpop.f32.mrf.mxu0
        %v4325 = vpop.f32.mrf.mxu0
        %v4326 = vadd.f32 0.0, %v4325
        %v4327 = vpop.f32.mrf.mxu0
        %4328 = vmatprep.mubr.bf16.mxu0 %v3861
        %4329 = vmatmul.mubr.bf16.gmra.mxu0 %v3845
        %v4330 = vpop.f32.mrf.mxu0
        %v4331 = vadd.f32 0.0, %v4330
        %v4332 = vpop.f32.mrf.mxu0
        %v4333 = vpop.f32.mrf.mxu0
        %v4334 = vadd.f32 0.0, %v4333
        %v4335 = vpop.f32.mrf.mxu0
        %4336 = vmatprep.mubr.bf16.mxu0 %v3862
        %4337 = vmatmul.mubr.bf16.gmra.mxu0 %v3846
        %v4338 = vpop.f32.mrf.mxu0
        %v4339 = vadd.f32 0.0, %v4338
        %v4340 = vpop.f32.mrf.mxu0
        %v4341 = vpop.f32.mrf.mxu0
        %v4342 = vadd.f32 0.0, %v4341
        %v4343 = vpop.f32.mrf.mxu0
        %4344 = vmatprep.mubr.bf16.mxu0 %v3863
        %4345 = vmatmul.mubr.bf16.gmra.mxu0 %v3847
        %v4346 = vpop.f32.mrf.mxu0
        %v4347 = vadd.f32 0.0, %v4346
        %v4348 = vpop.f32.mrf.mxu0
        %v4349 = vpop.f32.mrf.mxu0
        %v4350 = vadd.f32 0.0, %v4349
        %v4351 = vpop.f32.mrf.mxu0
        %4352 = vmatprep.mubr.bf16.mxu0 %v3864
        %4353 = vmatmul.mubr.bf16.gmra.mxu0 %v3848
        %v4354 = vpop.f32.mrf.mxu0
        %v4355 = vadd.f32 0.0, %v4354
        %v4356 = vpop.f32.mrf.mxu0
        %v4357 = vpop.f32.mrf.mxu0
        %v4358 = vadd.f32 0.0, %v4357
        %v4359 = vpop.f32.mrf.mxu0
        %4360 = vmatprep.mubr.bf16.mxu0 %v3865
        %4361 = vmatmul.mubr.bf16.gmra.mxu0 %v3849
        %v4362 = vpop.f32.mrf.mxu0
        %v4363 = vadd.f32 0.0, %v4362
        %v4364 = vpop.f32.mrf.mxu0
        %v4365 = vpop.f32.mrf.mxu0
        %v4366 = vadd.f32 0.0, %v4365
        %v4367 = vpop.f32.mrf.mxu0
        %4368 = vmatprep.mubr.bf16.mxu0 %v3866
        %4369 = vmatmul.mubr.bf16.gmra.mxu0 %v3850
        %v4370 = vpop.f32.mrf.mxu0
        %v4371 = vadd.f32 0.0, %v4370
        %v4372 = vpop.f32.mrf.mxu0
        %v4373 = vpop.f32.mrf.mxu0
        %v4374 = vadd.f32 0.0, %v4373
        %v4375 = vpop.f32.mrf.mxu0
        %4376 = vmatprep.mubr.bf16.mxu0 %v3867
        %4377 = vmatmul.mubr.bf16.gmra.mxu0 %v3851
        %v4378 = vpop.f32.mrf.mxu0
        %v4379 = vadd.f32 0.0, %v4378
        %v4380 = vpop.f32.mrf.mxu0
        %v4381 = vpop.f32.mrf.mxu0
        %v4382 = vadd.f32 0.0, %v4381
        %v4383 = vpop.f32.mrf.mxu0
        %4384 = vmatprep.mubr.bf16.mxu0 %v3868
        %4385 = vmatmul.mubr.bf16.gmra.mxu0 %v3852
        %v4386 = vpop.f32.mrf.mxu0
        %v4387 = vadd.f32 0.0, %v4386
        %v4388 = vpop.f32.mrf.mxu0
        %v4389 = vpop.f32.mrf.mxu0
        %v4390 = vadd.f32 0.0, %v4389
        %v4391 = vpop.f32.mrf.mxu0
        %4392 = vmatprep.mubr.bf16.mxu0 %v3869
        %4393 = vmatmul.mubr.bf16.gmra.mxu0 %v3853
        %v4394 = vpop.f32.mrf.mxu0
        %v4395 = vadd.f32 0.0, %v4394
        %v4396 = vpop.f32.mrf.mxu0
        %v4397 = vpop.f32.mrf.mxu0
        %v4398 = vadd.f32 0.0, %v4397
        %v4399 = vpop.f32.mrf.mxu0
        %4400 = vmatprep.mubr.bf16.mxu0 %v3870
        %4401 = vmatmul.mubr.bf16.gmra.mxu0 %v3854
        %v4402 = vpop.f32.mrf.mxu0
        %v4403 = vadd.f32 0.0, %v4402
        %v4404 = vpop.f32.mrf.mxu0
        %v4405 = vpop.f32.mrf.mxu0
        %v4406 = vadd.f32 0.0, %v4405
        %v4407 = vpop.f32.mrf.mxu0
        %4408 = vmatprep.mubr.bf16.mxu0 %v3871
        %4409 = vmatmul.mubr.bf16.gmra.mxu0 %v3855
        %v4410 = vpop.f32.mrf.mxu0
        %v4411 = vadd.f32 0.0, %v4410
        %v4412 = vpop.f32.mrf.mxu0
        %v4413 = vpop.f32.mrf.mxu0
        %v4414 = vadd.f32 0.0, %v4413
        %v4415 = vpop.f32.mrf.mxu0
        %4416 = vdwg.mxu0
        %4417 = vmatprep.subr.bf16.mxu0 0
        %4418 = vmatpush1.bf16.msra.mxu0 %v4231
        %4419 = vmatprep.subr.bf16.mxu0 0
        %4420 = vmatpush1.bf16.msra.mxu0 %v4230
        %4421 = vmatprep.subr.bf16.mxu0 0
        %4422 = vmatpush1.bf16.msra.mxu0 %v4229
        %4423 = vmatprep.subr.bf16.mxu0 0
        %4424 = vmatpush1.bf16.msra.mxu0 %v4228
        %4425 = vmatprep.subr.bf16.mxu0 0
        %4426 = vmatpush1.bf16.msra.mxu0 %v4227
        %4427 = vmatprep.subr.bf16.mxu0 0
        %4428 = vmatpush1.bf16.msra.mxu0 %v4226
        %4429 = vmatprep.subr.bf16.mxu0 0
        %4430 = vmatpush1.bf16.msra.mxu0 %v4225
        %4431 = vmatprep.subr.bf16.mxu0 0
        %4432 = vmatpush1.bf16.msra.mxu0 %v4224
        %4433 = vmatprep.subr.bf16.mxu0 0
        %4434 = vmatpush2.bf16.msra.mxu0 0
        %4435 = vmatprep.subr.bf16.mxu0 0
        %4436 = vmatpush2.bf16.msra.mxu0 0
        %4437 = vmatprep.subr.bf16.mxu0 0
        %4438 = vmatpush2.bf16.msra.mxu0 0
        %4439 = vmatprep.subr.bf16.mxu0 0
        %4440 = vmatpush2.bf16.msra.mxu0 0
        %4441 = vmatprep.subr.bf16.mxu0 0
        %4442 = vmatpush2.bf16.msra.mxu0 0
        %4443 = vmatprep.subr.bf16.mxu0 0
        %4444 = vmatpush2.bf16.msra.mxu0 0
        %4445 = vmatprep.subr.bf16.mxu0 0
        %4446 = vmatpush2.bf16.msra.mxu0 0
        %4447 = vmatprep.subr.bf16.mxu0 0
        %4448 = vmatpush2.bf16.msra.mxu0 0
        %4449 = vmatprep.mubr.bf16.mxu0 0
        %4450 = vmatmul.mubr.bf16.gmra.mxu0 %v4000
        %v4451 = vpop.f32.mrf.mxu0
        %v4452 = vadd.f32 %v4291, %v4451
        %v4453 = vpop.f32.mrf.mxu0
        %v4454 = vpop.f32.mrf.mxu0
        %v4455 = vadd.f32 %v4294, %v4454
        %v4456 = vpop.f32.mrf.mxu0
        %4457 = vmatprep.mubr.bf16.mxu0 0
        %4458 = vmatmul.mubr.bf16.gmra.mxu0 %v4001
        %v4459 = vpop.f32.mrf.mxu0
        %v4460 = vadd.f32 %v4299, %v4459
        %v4461 = vpop.f32.mrf.mxu0
        %v4462 = vpop.f32.mrf.mxu0
        %v4463 = vadd.f32 %v4302, %v4462
        %v4464 = vpop.f32.mrf.mxu0
        %4465 = vmatprep.mubr.bf16.mxu0 0
        %4466 = vmatmul.mubr.bf16.gmra.mxu0 %v4002
        %v4467 = vpop.f32.mrf.mxu0
        %v4468 = vadd.f32 %v4307, %v4467
        %v4469 = vpop.f32.mrf.mxu0
        %v4470 = vpop.f32.mrf.mxu0
        %v4471 = vadd.f32 %v4310, %v4470
        %v4472 = vpop.f32.mrf.mxu0
        %4473 = vmatprep.mubr.bf16.mxu0 0
        %4474 = vmatmul.mubr.bf16.gmra.mxu0 %v4003
        %v4475 = vpop.f32.mrf.mxu0
        %v4476 = vadd.f32 %v4315, %v4475
        %v4477 = vpop.f32.mrf.mxu0
        %v4478 = vpop.f32.mrf.mxu0
        %v4479 = vadd.f32 %v4318, %v4478
        %v4480 = vpop.f32.mrf.mxu0
        %4481 = vmatprep.mubr.bf16.mxu0 0
        %4482 = vmatmul.mubr.bf16.gmra.mxu0 %v4004
        %v4483 = vpop.f32.mrf.mxu0
        %v4484 = vadd.f32 %v4323, %v4483
        %v4485 = vpop.f32.mrf.mxu0
        %v4486 = vpop.f32.mrf.mxu0
        %v4487 = vadd.f32 %v4326, %v4486
        %v4488 = vpop.f32.mrf.mxu0
        %4489 = vmatprep.mubr.bf16.mxu0 0
        %4490 = vmatmul.mubr.bf16.gmra.mxu0 %v4005
        %v4491 = vpop.f32.mrf.mxu0
        %v4492 = vadd.f32 %v4331, %v4491
        %v4493 = vpop.f32.mrf.mxu0
        %v4494 = vpop.f32.mrf.mxu0
        %v4495 = vadd.f32 %v4334, %v4494
        %v4496 = vpop.f32.mrf.mxu0
        %4497 = vmatprep.mubr.bf16.mxu0 0
        %4498 = vmatmul.mubr.bf16.gmra.mxu0 %v4006
        %v4499 = vpop.f32.mrf.mxu0
        %v4500 = vadd.f32 %v4339, %v4499
        %v4501 = vpop.f32.mrf.mxu0
        %v4502 = vpop.f32.mrf.mxu0
        %v4503 = vadd.f32 %v4342, %v4502
        %v4504 = vpop.f32.mrf.mxu0
        %4505 = vmatprep.mubr.bf16.mxu0 0
        %4506 = vmatmul.mubr.bf16.gmra.mxu0 %v4007
        %v4507 = vpop.f32.mrf.mxu0
        %v4508 = vadd.f32 %v4347, %v4507
        %v4509 = vpop.f32.mrf.mxu0
        %v4510 = vpop.f32.mrf.mxu0
        %v4511 = vadd.f32 %v4350, %v4510
        %v4512 = vpop.f32.mrf.mxu0
        %4513 = vmatprep.mubr.bf16.mxu0 0
        %4514 = vmatmul.mubr.bf16.gmra.mxu0 %v4008
        %v4515 = vpop.f32.mrf.mxu0
        %v4516 = vadd.f32 %v4355, %v4515
        %v4517 = vpop.f32.mrf.mxu0
        %v4518 = vpop.f32.mrf.mxu0
        %v4519 = vadd.f32 %v4358, %v4518
        %v4520 = vpop.f32.mrf.mxu0
        %4521 = vmatprep.mubr.bf16.mxu0 0
        %4522 = vmatmul.mubr.bf16.gmra.mxu0 %v4009
        %v4523 = vpop.f32.mrf.mxu0
        %v4524 = vadd.f32 %v4363, %v4523
        %v4525 = vpop.f32.mrf.mxu0
        %v4526 = vpop.f32.mrf.mxu0
        %v4527 = vadd.f32 %v4366, %v4526
        %v4528 = vpop.f32.mrf.mxu0
        %4529 = vmatprep.mubr.bf16.mxu0 0
        %4530 = vmatmul.mubr.bf16.gmra.mxu0 %v4010
        %v4531 = vpop.f32.mrf.mxu0
        %v4532 = vadd.f32 %v4371, %v4531
        %v4533 = vpop.f32.mrf.mxu0
        %v4534 = vpop.f32.mrf.mxu0
        %v4535 = vadd.f32 %v4374, %v4534
        %v4536 = vpop.f32.mrf.mxu0
        %4537 = vmatprep.mubr.bf16.mxu0 0
        %4538 = vmatmul.mubr.bf16.gmra.mxu0 %v4011
        %v4539 = vpop.f32.mrf.mxu0
        %v4540 = vadd.f32 %v4379, %v4539
        %v4541 = vpop.f32.mrf.mxu0
        %v4542 = vpop.f32.mrf.mxu0
        %v4543 = vadd.f32 %v4382, %v4542
        %v4544 = vpop.f32.mrf.mxu0
        %4545 = vmatprep.mubr.bf16.mxu0 0
        %4546 = vmatmul.mubr.bf16.gmra.mxu0 %v4012
        %v4547 = vpop.f32.mrf.mxu0
        %v4548 = vadd.f32 %v4387, %v4547
        %v4549 = vpop.f32.mrf.mxu0
        %v4550 = vpop.f32.mrf.mxu0
        %v4551 = vadd.f32 %v4390, %v4550
        %v4552 = vpop.f32.mrf.mxu0
        %4553 = vmatprep.mubr.bf16.mxu0 0
        %4554 = vmatmul.mubr.bf16.gmra.mxu0 %v4013
        %v4555 = vpop.f32.mrf.mxu0
        %v4556 = vadd.f32 %v4395, %v4555
        %v4557 = vpop.f32.mrf.mxu0
        %v4558 = vpop.f32.mrf.mxu0
        %v4559 = vadd.f32 %v4398, %v4558
        %v4560 = vpop.f32.mrf.mxu0
        %4561 = vmatprep.mubr.bf16.mxu0 0
        %4562 = vmatmul.mubr.bf16.gmra.mxu0 %v4014
        %v4563 = vpop.f32.mrf.mxu0
        %v4564 = vadd.f32 %v4403, %v4563
        %v4565 = vpop.f32.mrf.mxu0
        %v4566 = vpop.f32.mrf.mxu0
        %v4567 = vadd.f32 %v4406, %v4566
        %v4568 = vpop.f32.mrf.mxu0
        %4569 = vmatprep.mubr.bf16.mxu0 0
        %4570 = vmatmul.mubr.bf16.gmra.mxu0 %v4015
        %v4571 = vpop.f32.mrf.mxu0
        %v4572 = vadd.f32 %v4411, %v4571
        %v4573 = vpop.f32.mrf.mxu0
        %v4574 = vpop.f32.mrf.mxu0
        %v4575 = vadd.f32 %v4414, %v4574
        %v4576 = vpop.f32.mrf.mxu0
        %4577 = vdwg.mxu0
        %v4626 = vunpack.c.l.b16 %v4016
        %v4627 = vunpack.c.l.b16 %v4017
        %v4628 = vunpack.c.l.b16 %v4018
        %v4629 = vunpack.c.l.b16 %v4019
        %v4630 = vunpack.c.l.b16 %v4020
        %v4631 = vunpack.c.l.b16 %v4021
        %v4632 = vunpack.c.l.b16 %v4022
        %v4633 = vunpack.c.l.b16 %v4023
        %v4634 = vunpack.c.l.b16 %v4024
        %v4635 = vunpack.c.l.b16 %v4025
        %v4636 = vunpack.c.l.b16 %v4026
        %v4637 = vunpack.c.l.b16 %v4027
        %v4638 = vunpack.c.l.b16 %v4028
        %v4639 = vunpack.c.l.b16 %v4029
        %v4640 = vunpack.c.l.b16 %v4030
        %v4641 = vunpack.c.l.b16 %v4031
        %v4642 = vunpack.c.l.b16 %v4032
        %v4643 = vunpack.c.l.b16 %v4033
        %v4644 = vunpack.c.l.b16 %v4034
        %v4645 = vunpack.c.l.b16 %v4035
        %v4646 = vunpack.c.l.b16 %v4036
        %v4647 = vunpack.c.l.b16 %v4037
        %v4648 = vunpack.c.l.b16 %v4038
        %v4649 = vunpack.c.l.b16 %v4039
        %v4650 = vunpack.c.l.b16 %v4040
        %v4651 = vunpack.c.l.b16 %v4041
        %v4652 = vunpack.c.l.b16 %v4042
        %v4653 = vunpack.c.l.b16 %v4043
        %v4654 = vunpack.c.l.b16 %v4044
        %v4655 = vunpack.c.l.b16 %v4045
        %v4656 = vunpack.c.l.b16 %v4046
        %v4657 = vunpack.c.l.b16 %v4047
        %v4658 = vunpack.c.l.b16 %v4048
        %v4659 = vunpack.c.l.b16 %v4049
        %v4660 = vunpack.c.l.b16 %v4050
        %v4661 = vunpack.c.l.b16 %v4051
        %v4662 = vunpack.c.l.b16 %v4052
        %v4663 = vunpack.c.l.b16 %v4053
        %v4664 = vunpack.c.l.b16 %v4054
        %v4665 = vunpack.c.l.b16 %v4055
        %v4666 = vunpack.c.l.b16 %v4056
        %v4667 = vunpack.c.l.b16 %v4057
        %v4668 = vunpack.c.l.b16 %v4058
        %v4669 = vunpack.c.l.b16 %v4059
        %v4670 = vunpack.c.l.b16 %v4060
        %v4671 = vunpack.c.l.b16 %v4061
        %v4672 = vunpack.c.l.b16 %v4062
        %v4673 = vunpack.c.l.b16 %v4063
        %v4674 = vpack.c.b16 %v4627, %v4626
        %v4675 = vpack.c.b16 %v4629, %v4628
        %v4676 = vpack.c.b16 %v4631, %v4630
        %v4677 = vpack.c.b16 %v4633, %v4632
        %v4678 = vpack.c.b16 %v4635, %v4634
        %v4679 = vpack.c.b16 %v4637, %v4636
        %v4680 = vpack.c.b16 %v4639, %v4638
        %v4681 = vpack.c.b16 %v4641, %v4640
        %v4682 = vpack.c.b16 %v4643, %v4642
        %v4683 = vpack.c.b16 %v4645, %v4644
        %v4684 = vpack.c.b16 %v4647, %v4646
        %v4685 = vpack.c.b16 %v4649, %v4648
        %v4686 = vpack.c.b16 %v4651, %v4650
        %v4687 = vpack.c.b16 %v4653, %v4652
        %v4688 = vpack.c.b16 %v4655, %v4654
        %v4689 = vpack.c.b16 %v4657, %v4656
        %v4690 = vpack.c.b16 %v4659, %v4658
        %v4691 = vpack.c.b16 %v4661, %v4660
        %v4692 = vpack.c.b16 %v4663, %v4662
        %v4693 = vpack.c.b16 %v4665, %v4664
        %v4694 = vpack.c.b16 %v4667, %v4666
        %v4695 = vpack.c.b16 %v4669, %v4668
        %v4696 = vpack.c.b16 %v4671, %v4670
        %v4697 = vpack.c.b16 %v4673, %v4672
        %4722 = vmatprep.subr.bf16.mxu0 0
        %4723 = vmatpush1.bf16.msra.mxu0 %v4681
        %4724 = vmatprep.subr.bf16.mxu0 0
        %4725 = vmatpush1.bf16.msra.mxu0 %v4680
        %4726 = vmatprep.subr.bf16.mxu0 0
        %4727 = vmatpush1.bf16.msra.mxu0 %v4679
        %4728 = vmatprep.subr.bf16.mxu0 0
        %4729 = vmatpush1.bf16.msra.mxu0 %v4678
        %4730 = vmatprep.subr.bf16.mxu0 0
        %4731 = vmatpush1.bf16.msra.mxu0 %v4677
        %4732 = vmatprep.subr.bf16.mxu0 0
        %4733 = vmatpush1.bf16.msra.mxu0 %v4676
        %4734 = vmatprep.subr.bf16.mxu0 0
        %4735 = vmatpush1.bf16.msra.mxu0 %v4675
        %4736 = vmatprep.subr.bf16.mxu0 0
        %4737 = vmatpush1.bf16.msra.mxu0 %v4674
        %4738 = vmatprep.subr.bf16.mxu0 0
        %4739 = vmatpush2.bf16.msra.mxu0 %v4689
        %4740 = vmatprep.subr.bf16.mxu0 0
        %4741 = vmatpush2.bf16.msra.mxu0 %v4688
        %4742 = vmatprep.subr.bf16.mxu0 0
        %4743 = vmatpush2.bf16.msra.mxu0 %v4687
        %4744 = vmatprep.subr.bf16.mxu0 0
        %4745 = vmatpush2.bf16.msra.mxu0 %v4686
        %4746 = vmatprep.subr.bf16.mxu0 0
        %4747 = vmatpush2.bf16.msra.mxu0 %v4685
        %4748 = vmatprep.subr.bf16.mxu0 0
        %4749 = vmatpush2.bf16.msra.mxu0 %v4684
        %4750 = vmatprep.subr.bf16.mxu0 0
        %4751 = vmatpush2.bf16.msra.mxu0 %v4683
        %4752 = vmatprep.subr.bf16.mxu0 0
        %4753 = vmatpush2.bf16.msra.mxu0 %v4682
        %4754 = vmatprep.mubr.bf16.mxu0 0
        %4755 = vmatmul.mubr.bf16.gmra.mxu0 0
        %v4756 = vpop.f32.mrf.mxu0
        %v4757 = vadd.f32 %v4452, %v4756
        %v4758 = vpop.f32.mrf.mxu0
        %v4759 = vpop.f32.mrf.mxu0
        %v4760 = vadd.f32 %v4455, %v4759
        %v4761 = vpop.f32.mrf.mxu0
        %4762 = vmatprep.mubr.bf16.mxu0 %v3856
        %4763 = vmatmul.mubr.bf16.gmra.mxu0 %v3840
        %v4764 = vpop.f32.mrf.mxu0
        %v4765 = vadd.f32 %v4460, %v4764
        %v4766 = vpop.f32.mrf.mxu0
        %v4767 = vpop.f32.mrf.mxu0
        %v4768 = vadd.f32 %v4463, %v4767
        %v4769 = vpop.f32.mrf.mxu0
        %4770 = vmatprep.mubr.bf16.mxu0 %v3857
        %4771 = vmatmul.mubr.bf16.gmra.mxu0 %v3841
        %v4772 = vpop.f32.mrf.mxu0
        %v4773 = vadd.f32 %v4468, %v4772
        %v4774 = vpop.f32.mrf.mxu0
        %v4775 = vpop.f32.mrf.mxu0
        %v4776 = vadd.f32 %v4471, %v4775
        %v4777 = vpop.f32.mrf.mxu0
        %4778 = vmatprep.mubr.bf16.mxu0 %v3858
        %4779 = vmatmul.mubr.bf16.gmra.mxu0 %v3842
        %v4780 = vpop.f32.mrf.mxu0
        %v4781 = vadd.f32 %v4476, %v4780
        %v4782 = vpop.f32.mrf.mxu0
        %v4783 = vpop.f32.mrf.mxu0
        %v4784 = vadd.f32 %v4479, %v4783
        %v4785 = vpop.f32.mrf.mxu0
        %4786 = vmatprep.mubr.bf16.mxu0 %v3859
        %4787 = vmatmul.mubr.bf16.gmra.mxu0 %v3843
        %v4788 = vpop.f32.mrf.mxu0
        %v4789 = vadd.f32 %v4484, %v4788
        %v4790 = vpop.f32.mrf.mxu0
        %v4791 = vpop.f32.mrf.mxu0
        %v4792 = vadd.f32 %v4487, %v4791
        %v4793 = vpop.f32.mrf.mxu0
        %4794 = vmatprep.mubr.bf16.mxu0 %v3860
        %4795 = vmatmul.mubr.bf16.gmra.mxu0 %v3844
        %v4796 = vpop.f32.mrf.mxu0
        %v4797 = vadd.f32 %v4492, %v4796
        %v4798 = vpop.f32.mrf.mxu0
        %v4799 = vpop.f32.mrf.mxu0
        %v4800 = vadd.f32 %v4495, %v4799
        %v4801 = vpop.f32.mrf.mxu0
        %4802 = vmatprep.mubr.bf16.mxu0 %v3861
        %4803 = vmatmul.mubr.bf16.gmra.mxu0 %v3845
        %v4804 = vpop.f32.mrf.mxu0
        %v4805 = vadd.f32 %v4500, %v4804
        %v4806 = vpop.f32.mrf.mxu0
        %v4807 = vpop.f32.mrf.mxu0
        %v4808 = vadd.f32 %v4503, %v4807
        %v4809 = vpop.f32.mrf.mxu0
        %4810 = vmatprep.mubr.bf16.mxu0 %v3862
        %4811 = vmatmul.mubr.bf16.gmra.mxu0 %v3846
        %v4812 = vpop.f32.mrf.mxu0
        %v4813 = vadd.f32 %v4508, %v4812
        %v4814 = vpop.f32.mrf.mxu0
        %v4815 = vpop.f32.mrf.mxu0
        %v4816 = vadd.f32 %v4511, %v4815
        %v4817 = vpop.f32.mrf.mxu0
        %4818 = vmatprep.mubr.bf16.mxu0 %v3863
        %4819 = vmatmul.mubr.bf16.gmra.mxu0 %v3847
        %v4820 = vpop.f32.mrf.mxu0
        %v4821 = vadd.f32 %v4516, %v4820
        %v4822 = vpop.f32.mrf.mxu0
        %v4823 = vpop.f32.mrf.mxu0
        %v4824 = vadd.f32 %v4519, %v4823
        %v4825 = vpop.f32.mrf.mxu0
        %4826 = vmatprep.mubr.bf16.mxu0 %v3864
        %4827 = vmatmul.mubr.bf16.gmra.mxu0 %v3848
        %v4828 = vpop.f32.mrf.mxu0
        %v4829 = vadd.f32 %v4524, %v4828
        %v4830 = vpop.f32.mrf.mxu0
        %v4831 = vpop.f32.mrf.mxu0
        %v4832 = vadd.f32 %v4527, %v4831
        %v4833 = vpop.f32.mrf.mxu0
        %4834 = vmatprep.mubr.bf16.mxu0 %v3865
        %4835 = vmatmul.mubr.bf16.gmra.mxu0 %v3849
        %v4836 = vpop.f32.mrf.mxu0
        %v4837 = vadd.f32 %v4532, %v4836
        %v4838 = vpop.f32.mrf.mxu0
        %v4839 = vpop.f32.mrf.mxu0
        %v4840 = vadd.f32 %v4535, %v4839
        %v4841 = vpop.f32.mrf.mxu0
        %4842 = vmatprep.mubr.bf16.mxu0 %v3866
        %4843 = vmatmul.mubr.bf16.gmra.mxu0 %v3850
        %v4844 = vpop.f32.mrf.mxu0
        %v4845 = vadd.f32 %v4540, %v4844
        %v4846 = vpop.f32.mrf.mxu0
        %v4847 = vpop.f32.mrf.mxu0
        %v4848 = vadd.f32 %v4543, %v4847
        %v4849 = vpop.f32.mrf.mxu0
        %4850 = vmatprep.mubr.bf16.mxu0 %v3867
        %4851 = vmatmul.mubr.bf16.gmra.mxu0 %v3851
        %v4852 = vpop.f32.mrf.mxu0
        %v4853 = vadd.f32 %v4548, %v4852
        %v4854 = vpop.f32.mrf.mxu0
        %v4855 = vpop.f32.mrf.mxu0
        %v4856 = vadd.f32 %v4551, %v4855
        %v4857 = vpop.f32.mrf.mxu0
        %4858 = vmatprep.mubr.bf16.mxu0 %v3868
        %4859 = vmatmul.mubr.bf16.gmra.mxu0 %v3852
        %v4860 = vpop.f32.mrf.mxu0
        %v4861 = vadd.f32 %v4556, %v4860
        %v4862 = vpop.f32.mrf.mxu0
        %v4863 = vpop.f32.mrf.mxu0
        %v4864 = vadd.f32 %v4559, %v4863
        %v4865 = vpop.f32.mrf.mxu0
        %4866 = vmatprep.mubr.bf16.mxu0 %v3869
        %4867 = vmatmul.mubr.bf16.gmra.mxu0 %v3853
        %v4868 = vpop.f32.mrf.mxu0
        %v4869 = vadd.f32 %v4564, %v4868
        %v4870 = vpop.f32.mrf.mxu0
        %v4871 = vpop.f32.mrf.mxu0
        %v4872 = vadd.f32 %v4567, %v4871
        %v4873 = vpop.f32.mrf.mxu0
        %4874 = vmatprep.mubr.bf16.mxu0 %v3870
        %4875 = vmatmul.mubr.bf16.gmra.mxu0 %v3854
        %v4876 = vpop.f32.mrf.mxu0
        %v4877 = vadd.f32 %v4572, %v4876
        %v4878 = vpop.f32.mrf.mxu0
        %v4879 = vpop.f32.mrf.mxu0
        %v4880 = vadd.f32 %v4575, %v4879
        %v4881 = vpop.f32.mrf.mxu0
        %4882 = vdwg.mxu0
        %4883 = vmatprep.subr.bf16.mxu0 0
        %4884 = vmatpush1.bf16.msra.mxu0 %v4697
        %4885 = vmatprep.subr.bf16.mxu0 0
        %4886 = vmatpush1.bf16.msra.mxu0 %v4696
        %4887 = vmatprep.subr.bf16.mxu0 0
        %4888 = vmatpush1.bf16.msra.mxu0 %v4695
        %4889 = vmatprep.subr.bf16.mxu0 0
        %4890 = vmatpush1.bf16.msra.mxu0 %v4694
        %4891 = vmatprep.subr.bf16.mxu0 0
        %4892 = vmatpush1.bf16.msra.mxu0 %v4693
        %4893 = vmatprep.subr.bf16.mxu0 0
        %4894 = vmatpush1.bf16.msra.mxu0 %v4692
        %4895 = vmatprep.subr.bf16.mxu0 0
        %4896 = vmatpush1.bf16.msra.mxu0 %v4691
        %4897 = vmatprep.subr.bf16.mxu0 0
        %4898 = vmatpush1.bf16.msra.mxu0 %v4690
        %4899 = vmatprep.subr.bf16.mxu0 0
        %4900 = vmatpush2.bf16.msra.mxu0 0
        %4901 = vmatprep.subr.bf16.mxu0 0
        %4902 = vmatpush2.bf16.msra.mxu0 0
        %4903 = vmatprep.subr.bf16.mxu0 0
        %4904 = vmatpush2.bf16.msra.mxu0 0
        %4905 = vmatprep.subr.bf16.mxu0 0
        %4906 = vmatpush2.bf16.msra.mxu0 0
        %4907 = vmatprep.subr.bf16.mxu0 0
        %4908 = vmatpush2.bf16.msra.mxu0 0
        %4909 = vmatprep.subr.bf16.mxu0 0
        %4910 = vmatpush2.bf16.msra.mxu0 0
        %4911 = vmatprep.subr.bf16.mxu0 0
        %4912 = vmatpush2.bf16.msra.mxu0 0
        %4913 = vmatprep.subr.bf16.mxu0 0
        %4914 = vmatpush2.bf16.msra.mxu0 0
        %4915 = vmatprep.mubr.bf16.mxu0 0
        %4916 = vmatmul.mubr.bf16.gmra.mxu0 0
        %v4917 = vpop.f32.mrf.mxu0
        %v4918 = vadd.f32 %v4757, %v4917
        %v4919 = vpop.f32.mrf.mxu0
        %v4920 = vpop.f32.mrf.mxu0
        %v4921 = vadd.f32 %v4760, %v4920
        %v4922 = vpop.f32.mrf.mxu0
        %4923 = vmatprep.mubr.bf16.mxu0 0
        %4924 = vmatmul.mubr.bf16.gmra.mxu0 %v4000
        %v4925 = vpop.f32.mrf.mxu0
        %v4926 = vadd.f32 %v4765, %v4925
        %v4927 = vpop.f32.mrf.mxu0
        %v4928 = vpop.f32.mrf.mxu0
        %v4929 = vadd.f32 %v4768, %v4928
        %v4930 = vpop.f32.mrf.mxu0
        %4931 = vmatprep.mubr.bf16.mxu0 0
        %4932 = vmatmul.mubr.bf16.gmra.mxu0 %v4001
        %v4933 = vpop.f32.mrf.mxu0
        %v4934 = vadd.f32 %v4773, %v4933
        %v4935 = vpop.f32.mrf.mxu0
        %v4936 = vpop.f32.mrf.mxu0
        %v4937 = vadd.f32 %v4776, %v4936
        %v4938 = vpop.f32.mrf.mxu0
        %4939 = vmatprep.mubr.bf16.mxu0 0
        %4940 = vmatmul.mubr.bf16.gmra.mxu0 %v4002
        %v4941 = vpop.f32.mrf.mxu0
        %v4942 = vadd.f32 %v4781, %v4941
        %v4943 = vpop.f32.mrf.mxu0
        %v4944 = vpop.f32.mrf.mxu0
        %v4945 = vadd.f32 %v4784, %v4944
        %v4946 = vpop.f32.mrf.mxu0
        %4947 = vmatprep.mubr.bf16.mxu0 0
        %4948 = vmatmul.mubr.bf16.gmra.mxu0 %v4003
        %v4949 = vpop.f32.mrf.mxu0
        %v4950 = vadd.f32 %v4789, %v4949
        %v4951 = vpop.f32.mrf.mxu0
        %v4952 = vpop.f32.mrf.mxu0
        %v4953 = vadd.f32 %v4792, %v4952
        %v4954 = vpop.f32.mrf.mxu0
        %4955 = vmatprep.mubr.bf16.mxu0 0
        %4956 = vmatmul.mubr.bf16.gmra.mxu0 %v4004
        %v4957 = vpop.f32.mrf.mxu0
        %v4958 = vadd.f32 %v4797, %v4957
        %v4959 = vpop.f32.mrf.mxu0
        %v4960 = vpop.f32.mrf.mxu0
        %v4961 = vadd.f32 %v4800, %v4960
        %v4962 = vpop.f32.mrf.mxu0
        %4963 = vmatprep.mubr.bf16.mxu0 0
        %4964 = vmatmul.mubr.bf16.gmra.mxu0 %v4005
        %v4965 = vpop.f32.mrf.mxu0
        %v4966 = vadd.f32 %v4805, %v4965
        %v4967 = vpop.f32.mrf.mxu0
        %v4968 = vpop.f32.mrf.mxu0
        %v4969 = vadd.f32 %v4808, %v4968
        %v4970 = vpop.f32.mrf.mxu0
        %4971 = vmatprep.mubr.bf16.mxu0 0
        %4972 = vmatmul.mubr.bf16.gmra.mxu0 %v4006
        %v4973 = vpop.f32.mrf.mxu0
        %v4974 = vadd.f32 %v4813, %v4973
        %v4975 = vpop.f32.mrf.mxu0
        %v4976 = vpop.f32.mrf.mxu0
        %v4977 = vadd.f32 %v4816, %v4976
        %v4978 = vpop.f32.mrf.mxu0
        %4979 = vmatprep.mubr.bf16.mxu0 0
        %4980 = vmatmul.mubr.bf16.gmra.mxu0 %v4007
        %v4981 = vpop.f32.mrf.mxu0
        %v4982 = vadd.f32 %v4821, %v4981
        %v4983 = vpop.f32.mrf.mxu0
        %v4984 = vpop.f32.mrf.mxu0
        %v4985 = vadd.f32 %v4824, %v4984
        %v4986 = vpop.f32.mrf.mxu0
        %4987 = vmatprep.mubr.bf16.mxu0 0
        %4988 = vmatmul.mubr.bf16.gmra.mxu0 %v4008
        %v4989 = vpop.f32.mrf.mxu0
        %v4990 = vadd.f32 %v4829, %v4989
        %v4991 = vpop.f32.mrf.mxu0
        %v4992 = vpop.f32.mrf.mxu0
        %v4993 = vadd.f32 %v4832, %v4992
        %v4994 = vpop.f32.mrf.mxu0
        %4995 = vmatprep.mubr.bf16.mxu0 0
        %4996 = vmatmul.mubr.bf16.gmra.mxu0 %v4009
        %v4997 = vpop.f32.mrf.mxu0
        %v4998 = vadd.f32 %v4837, %v4997
        %v4999 = vpop.f32.mrf.mxu0
        %v5000 = vpop.f32.mrf.mxu0
        %v5001 = vadd.f32 %v4840, %v5000
        %v5002 = vpop.f32.mrf.mxu0
        %5003 = vmatprep.mubr.bf16.mxu0 0
        %5004 = vmatmul.mubr.bf16.gmra.mxu0 %v4010
        %v5005 = vpop.f32.mrf.mxu0
        %v5006 = vadd.f32 %v4845, %v5005
        %v5007 = vpop.f32.mrf.mxu0
        %v5008 = vpop.f32.mrf.mxu0
        %v5009 = vadd.f32 %v4848, %v5008
        %v5010 = vpop.f32.mrf.mxu0
        %5011 = vmatprep.mubr.bf16.mxu0 0
        %5012 = vmatmul.mubr.bf16.gmra.mxu0 %v4011
        %v5013 = vpop.f32.mrf.mxu0
        %v5014 = vadd.f32 %v4853, %v5013
        %v5015 = vpop.f32.mrf.mxu0
        %v5016 = vpop.f32.mrf.mxu0
        %v5017 = vadd.f32 %v4856, %v5016
        %v5018 = vpop.f32.mrf.mxu0
        %5019 = vmatprep.mubr.bf16.mxu0 0
        %5020 = vmatmul.mubr.bf16.gmra.mxu0 %v4012
        %v5021 = vpop.f32.mrf.mxu0
        %v5022 = vadd.f32 %v4861, %v5021
        %v5023 = vpop.f32.mrf.mxu0
        %v5024 = vpop.f32.mrf.mxu0
        %v5025 = vadd.f32 %v4864, %v5024
        %v5026 = vpop.f32.mrf.mxu0
        %5027 = vmatprep.mubr.bf16.mxu0 0
        %5028 = vmatmul.mubr.bf16.gmra.mxu0 %v4013
        %v5029 = vpop.f32.mrf.mxu0
        %v5030 = vadd.f32 %v4869, %v5029
        %v5031 = vpop.f32.mrf.mxu0
        %v5032 = vpop.f32.mrf.mxu0
        %v5033 = vadd.f32 %v4872, %v5032
        %v5034 = vpop.f32.mrf.mxu0
        %5035 = vmatprep.mubr.bf16.mxu0 0
        %5036 = vmatmul.mubr.bf16.gmra.mxu0 %v4014
        %v5037 = vpop.f32.mrf.mxu0
        %v5038 = vadd.f32 %v4877, %v5037
        %v5039 = vpop.f32.mrf.mxu0
        %v5040 = vpop.f32.mrf.mxu0
        %v5041 = vadd.f32 %v4880, %v5040
        %v5042 = vpop.f32.mrf.mxu0
        %5043 = vdwg.mxu0
        %v5044 = vld [vmem:[#allocation7 + $0x180] sm:$0xf]
        %v5045 = vld [vmem:[#allocation7 + $0x184] sm:$0xf]
        %v5046 = vld [vmem:[#allocation7 + $0x188] sm:$0xf]
        %v5047 = vld [vmem:[#allocation7 + $0x18c] sm:$0xf]
        %v5048 = vld [vmem:[#allocation7 + $0x190] sm:$0xf]
        %v5049 = vld [vmem:[#allocation7 + $0x194] sm:$0xf]
        %v5050 = vld [vmem:[#allocation7 + $0x198] sm:$0xf]
        %v5051 = vld [vmem:[#allocation7 + $0x19c] sm:$0xf]
        %v5052 = vld [vmem:[#allocation7 + $0x1a0] sm:$0xf]
        %v5053 = vld [vmem:[#allocation7 + $0x1a4] sm:$0xf]
        %v5054 = vld [vmem:[#allocation7 + $0x1a8] sm:$0xf]
        %v5055 = vld [vmem:[#allocation7 + $0x1ac] sm:$0xf]
        %v5056 = vld [vmem:[#allocation7 + $0x1b0] sm:$0xf]
        %v5057 = vld [vmem:[#allocation7 + $0x1b4] sm:$0xf]
        %v5058 = vld [vmem:[#allocation7 + $0x1b8] sm:$0xf]
        %v5059 = vld [vmem:[#allocation7 + $0x1bc] sm:$0xf]
        %v5060 = vld [vmem:[#allocation7 + $0x1c0] sm:$0xf]
        %v5061 = vld [vmem:[#allocation7 + $0x1c4] sm:$0xf]
        %v5062 = vld [vmem:[#allocation7 + $0x1c8] sm:$0xf]
        %v5063 = vld [vmem:[#allocation7 + $0x1cc] sm:$0xf]
        %v5064 = vld [vmem:[#allocation7 + $0x1d0] sm:$0xf]
        %v5065 = vld [vmem:[#allocation7 + $0x1d4] sm:$0xf]
        %v5066 = vld [vmem:[#allocation7 + $0x1d8] sm:$0xf]
        %v5067 = vld [vmem:[#allocation7 + $0x1dc] sm:$0xf]
        %v5068 = vld [vmem:[#allocation7 + $0x1e0] sm:$0xf]
        %v5069 = vld [vmem:[#allocation7 + $0x1e4] sm:$0xf]
        %v5070 = vld [vmem:[#allocation7 + $0x1e8] sm:$0xf]
        %v5071 = vld [vmem:[#allocation7 + $0x1ec] sm:$0xf]
        %v5072 = vld [vmem:[#allocation7 + $0x1f0] sm:$0xf]
        %v5073 = vld [vmem:[#allocation7 + $0x1f4] sm:$0xf]
        %v5074 = vld [vmem:[#allocation7 + $0x1f8] sm:$0xf]
        %v5075 = vld [vmem:[#allocation7 + $0x1fc] sm:$0xf]
        %v5076 = vld [vmem:[#allocation7 + $0x200] sm:$0xf]
        %v5077 = vld [vmem:[#allocation7 + $0x204] sm:$0xf]
        %v5078 = vld [vmem:[#allocation7 + $0x208] sm:$0xf]
        %v5079 = vld [vmem:[#allocation7 + $0x20c] sm:$0xf]
        %v5080 = vld [vmem:[#allocation7 + $0x210] sm:$0xf]
        %v5081 = vld [vmem:[#allocation7 + $0x214] sm:$0xf]
        %v5082 = vld [vmem:[#allocation7 + $0x218] sm:$0xf]
        %v5083 = vld [vmem:[#allocation7 + $0x21c] sm:$0xf]
        %v5084 = vld [vmem:[#allocation7 + $0x220] sm:$0xf]
        %v5085 = vld [vmem:[#allocation7 + $0x224] sm:$0xf]
        %v5086 = vld [vmem:[#allocation7 + $0x228] sm:$0xf]
        %v5087 = vld [vmem:[#allocation7 + $0x22c] sm:$0xf]
        %v5088 = vld [vmem:[#allocation7 + $0x230] sm:$0xf]
        %v5089 = vld [vmem:[#allocation7 + $0x234] sm:$0xf]
        %v5090 = vld [vmem:[#allocation7 + $0x238] sm:$0xf]
        %v5091 = vld [vmem:[#allocation7 + $0x23c] sm:$0xf]
        %v5140 = vunpack.c.l.b16 %v5044
        %v5141 = vunpack.c.l.b16 %v5045
        %v5142 = vunpack.c.l.b16 %v5046
        %v5143 = vunpack.c.l.b16 %v5047
        %v5144 = vunpack.c.l.b16 %v5048
        %v5145 = vunpack.c.l.b16 %v5049
        %v5146 = vunpack.c.l.b16 %v5050
        %v5147 = vunpack.c.l.b16 %v5051
        %v5148 = vunpack.c.l.b16 %v5052
        %v5149 = vunpack.c.l.b16 %v5053
        %v5150 = vunpack.c.l.b16 %v5054
        %v5151 = vunpack.c.l.b16 %v5055
        %v5152 = vunpack.c.l.b16 %v5056
        %v5153 = vunpack.c.l.b16 %v5057
        %v5154 = vunpack.c.l.b16 %v5058
        %v5155 = vunpack.c.l.b16 %v5059
        %v5156 = vunpack.c.l.b16 %v5060
        %v5157 = vunpack.c.l.b16 %v5061
        %v5158 = vunpack.c.l.b16 %v5062
        %v5159 = vunpack.c.l.b16 %v5063
        %v5160 = vunpack.c.l.b16 %v5064
        %v5161 = vunpack.c.l.b16 %v5065
        %v5162 = vunpack.c.l.b16 %v5066
        %v5163 = vunpack.c.l.b16 %v5067
        %v5164 = vunpack.c.l.b16 %v5068
        %v5165 = vunpack.c.l.b16 %v5069
        %v5166 = vunpack.c.l.b16 %v5070
        %v5167 = vunpack.c.l.b16 %v5071
        %v5168 = vunpack.c.l.b16 %v5072
        %v5169 = vunpack.c.l.b16 %v5073
        %v5170 = vunpack.c.l.b16 %v5074
        %v5171 = vunpack.c.l.b16 %v5075
        %v5172 = vunpack.c.l.b16 %v5076
        %v5173 = vunpack.c.l.b16 %v5077
        %v5174 = vunpack.c.l.b16 %v5078
        %v5175 = vunpack.c.l.b16 %v5079
        %v5176 = vunpack.c.l.b16 %v5080
        %v5177 = vunpack.c.l.b16 %v5081
        %v5178 = vunpack.c.l.b16 %v5082
        %v5179 = vunpack.c.l.b16 %v5083
        %v5180 = vunpack.c.l.b16 %v5084
        %v5181 = vunpack.c.l.b16 %v5085
        %v5182 = vunpack.c.l.b16 %v5086
        %v5183 = vunpack.c.l.b16 %v5087
        %v5184 = vunpack.c.l.b16 %v5088
        %v5185 = vunpack.c.l.b16 %v5089
        %v5186 = vunpack.c.l.b16 %v5090
        %v5187 = vunpack.c.l.b16 %v5091
        %v5188 = vpack.c.b16 %v5141, %v5140
        %v5189 = vpack.c.b16 %v5143, %v5142
        %v5190 = vpack.c.b16 %v5145, %v5144
        %v5191 = vpack.c.b16 %v5147, %v5146
        %v5192 = vpack.c.b16 %v5149, %v5148
        %v5193 = vpack.c.b16 %v5151, %v5150
        %v5194 = vpack.c.b16 %v5153, %v5152
        %v5195 = vpack.c.b16 %v5155, %v5154
        %v5196 = vpack.c.b16 %v5157, %v5156
        %v5197 = vpack.c.b16 %v5159, %v5158
        %v5198 = vpack.c.b16 %v5161, %v5160
        %v5199 = vpack.c.b16 %v5163, %v5162
        %v5200 = vpack.c.b16 %v5165, %v5164
        %v5201 = vpack.c.b16 %v5167, %v5166
        %v5202 = vpack.c.b16 %v5169, %v5168
        %v5203 = vpack.c.b16 %v5171, %v5170
        %v5204 = vpack.c.b16 %v5173, %v5172
        %v5205 = vpack.c.b16 %v5175, %v5174
        %v5206 = vpack.c.b16 %v5177, %v5176
        %v5207 = vpack.c.b16 %v5179, %v5178
        %v5208 = vpack.c.b16 %v5181, %v5180
        %v5209 = vpack.c.b16 %v5183, %v5182
        %v5210 = vpack.c.b16 %v5185, %v5184
        %v5211 = vpack.c.b16 %v5187, %v5186
        %5236 = vmatprep.subr.bf16.mxu0 0
        %5237 = vmatpush1.bf16.msra.mxu0 %v5195
        %5238 = vmatprep.subr.bf16.mxu0 0
        %5239 = vmatpush1.bf16.msra.mxu0 %v5194
        %5240 = vmatprep.subr.bf16.mxu0 0
        %5241 = vmatpush1.bf16.msra.mxu0 %v5193
        %5242 = vmatprep.subr.bf16.mxu0 0
        %5243 = vmatpush1.bf16.msra.mxu0 %v5192
        %5244 = vmatprep.subr.bf16.mxu0 0
        %5245 = vmatpush1.bf16.msra.mxu0 %v5191
        %5246 = vmatprep.subr.bf16.mxu0 0
        %5247 = vmatpush1.bf16.msra.mxu0 %v5190
        %5248 = vmatprep.subr.bf16.mxu0 0
        %5249 = vmatpush1.bf16.msra.mxu0 %v5189
        %5250 = vmatprep.subr.bf16.mxu0 0
        %5251 = vmatpush1.bf16.msra.mxu0 %v5188
        %5252 = vmatprep.subr.bf16.mxu0 0
        %5253 = vmatpush2.bf16.msra.mxu0 %v5203
        %5254 = vmatprep.subr.bf16.mxu0 0
        %5255 = vmatpush2.bf16.msra.mxu0 %v5202
        %5256 = vmatprep.subr.bf16.mxu0 0
        %5257 = vmatpush2.bf16.msra.mxu0 %v5201
        %5258 = vmatprep.subr.bf16.mxu0 0
        %5259 = vmatpush2.bf16.msra.mxu0 %v5200
        %5260 = vmatprep.subr.bf16.mxu0 0
        %5261 = vmatpush2.bf16.msra.mxu0 %v5199
        %5262 = vmatprep.subr.bf16.mxu0 0
        %5263 = vmatpush2.bf16.msra.mxu0 %v5198
        %5264 = vmatprep.subr.bf16.mxu0 0
        %5265 = vmatpush2.bf16.msra.mxu0 %v5197
        %5266 = vmatprep.subr.bf16.mxu0 0
        %5267 = vmatpush2.bf16.msra.mxu0 %v5196
        %5268 = vmatprep.mubr.bf16.mxu0 %v3857
        %5269 = vmatmul.mubr.bf16.gmra.mxu0 %v3841
        %v5270 = vpop.f32.mrf.mxu0
        %v5271 = vadd.f32 0.0, %v5270
        %v5272 = vpop.f32.mrf.mxu0
        %v5273 = vpop.f32.mrf.mxu0
        %v5274 = vadd.f32 0.0, %v5273
        %v5275 = vpop.f32.mrf.mxu0
        %5276 = vmatprep.mubr.bf16.mxu0 %v3858
        %5277 = vmatmul.mubr.bf16.gmra.mxu0 %v3842
        %v5278 = vpop.f32.mrf.mxu0
        %v5279 = vadd.f32 0.0, %v5278
        %v5280 = vpop.f32.mrf.mxu0
        %v5281 = vpop.f32.mrf.mxu0
        %v5282 = vadd.f32 0.0, %v5281
        %v5283 = vpop.f32.mrf.mxu0
        %5284 = vmatprep.mubr.bf16.mxu0 %v3859
        %5285 = vmatmul.mubr.bf16.gmra.mxu0 %v3843
        %v5286 = vpop.f32.mrf.mxu0
        %v5287 = vadd.f32 0.0, %v5286
        %v5288 = vpop.f32.mrf.mxu0
        %v5289 = vpop.f32.mrf.mxu0
        %v5290 = vadd.f32 0.0, %v5289
        %v5291 = vpop.f32.mrf.mxu0
        %5292 = vmatprep.mubr.bf16.mxu0 %v3860
        %5293 = vmatmul.mubr.bf16.gmra.mxu0 %v3844
        %v5294 = vpop.f32.mrf.mxu0
        %v5295 = vadd.f32 0.0, %v5294
        %v5296 = vpop.f32.mrf.mxu0
        %v5297 = vpop.f32.mrf.mxu0
        %v5298 = vadd.f32 0.0, %v5297
        %v5299 = vpop.f32.mrf.mxu0
        %5300 = vmatprep.mubr.bf16.mxu0 %v3861
        %5301 = vmatmul.mubr.bf16.gmra.mxu0 %v3845
        %v5302 = vpop.f32.mrf.mxu0
        %v5303 = vadd.f32 0.0, %v5302
        %v5304 = vpop.f32.mrf.mxu0
        %v5305 = vpop.f32.mrf.mxu0
        %v5306 = vadd.f32 0.0, %v5305
        %v5307 = vpop.f32.mrf.mxu0
        %5308 = vmatprep.mubr.bf16.mxu0 %v3862
        %5309 = vmatmul.mubr.bf16.gmra.mxu0 %v3846
        %v5310 = vpop.f32.mrf.mxu0
        %v5311 = vadd.f32 0.0, %v5310
        %v5312 = vpop.f32.mrf.mxu0
        %v5313 = vpop.f32.mrf.mxu0
        %v5314 = vadd.f32 0.0, %v5313
        %v5315 = vpop.f32.mrf.mxu0
        %5316 = vmatprep.mubr.bf16.mxu0 %v3863
        %5317 = vmatmul.mubr.bf16.gmra.mxu0 %v3847
        %v5318 = vpop.f32.mrf.mxu0
        %v5319 = vadd.f32 0.0, %v5318
        %v5320 = vpop.f32.mrf.mxu0
        %v5321 = vpop.f32.mrf.mxu0
        %v5322 = vadd.f32 0.0, %v5321
        %v5323 = vpop.f32.mrf.mxu0
        %5324 = vmatprep.mubr.bf16.mxu0 %v3864
        %5325 = vmatmul.mubr.bf16.gmra.mxu0 %v3848
        %v5326 = vpop.f32.mrf.mxu0
        %v5327 = vadd.f32 0.0, %v5326
        %v5328 = vpop.f32.mrf.mxu0
        %v5329 = vpop.f32.mrf.mxu0
        %v5330 = vadd.f32 0.0, %v5329
        %v5331 = vpop.f32.mrf.mxu0
        %5332 = vmatprep.mubr.bf16.mxu0 %v3865
        %5333 = vmatmul.mubr.bf16.gmra.mxu0 %v3849
        %v5334 = vpop.f32.mrf.mxu0
        %v5335 = vadd.f32 0.0, %v5334
        %v5336 = vpop.f32.mrf.mxu0
        %v5337 = vpop.f32.mrf.mxu0
        %v5338 = vadd.f32 0.0, %v5337
        %v5339 = vpop.f32.mrf.mxu0
        %5340 = vmatprep.mubr.bf16.mxu0 %v3866
        %5341 = vmatmul.mubr.bf16.gmra.mxu0 %v3850
        %v5342 = vpop.f32.mrf.mxu0
        %v5343 = vadd.f32 0.0, %v5342
        %v5344 = vpop.f32.mrf.mxu0
        %v5345 = vpop.f32.mrf.mxu0
        %v5346 = vadd.f32 0.0, %v5345
        %v5347 = vpop.f32.mrf.mxu0
        %5348 = vmatprep.mubr.bf16.mxu0 %v3867
        %5349 = vmatmul.mubr.bf16.gmra.mxu0 %v3851
        %v5350 = vpop.f32.mrf.mxu0
        %v5351 = vadd.f32 0.0, %v5350
        %v5352 = vpop.f32.mrf.mxu0
        %v5353 = vpop.f32.mrf.mxu0
        %v5354 = vadd.f32 0.0, %v5353
        %v5355 = vpop.f32.mrf.mxu0
        %5356 = vmatprep.mubr.bf16.mxu0 %v3868
        %5357 = vmatmul.mubr.bf16.gmra.mxu0 %v3852
        %v5358 = vpop.f32.mrf.mxu0
        %v5359 = vadd.f32 0.0, %v5358
        %v5360 = vpop.f32.mrf.mxu0
        %v5361 = vpop.f32.mrf.mxu0
        %v5362 = vadd.f32 0.0, %v5361
        %v5363 = vpop.f32.mrf.mxu0
        %5364 = vmatprep.mubr.bf16.mxu0 %v3869
        %5365 = vmatmul.mubr.bf16.gmra.mxu0 %v3853
        %v5366 = vpop.f32.mrf.mxu0
        %v5367 = vadd.f32 0.0, %v5366
        %v5368 = vpop.f32.mrf.mxu0
        %v5369 = vpop.f32.mrf.mxu0
        %v5370 = vadd.f32 0.0, %v5369
        %v5371 = vpop.f32.mrf.mxu0
        %5372 = vmatprep.mubr.bf16.mxu0 %v3870
        %5373 = vmatmul.mubr.bf16.gmra.mxu0 %v3854
        %v5374 = vpop.f32.mrf.mxu0
        %v5375 = vadd.f32 0.0, %v5374
        %v5376 = vpop.f32.mrf.mxu0
        %v5377 = vpop.f32.mrf.mxu0
        %v5378 = vadd.f32 0.0, %v5377
        %v5379 = vpop.f32.mrf.mxu0
        %5380 = vmatprep.mubr.bf16.mxu0 %v3871
        %5381 = vmatmul.mubr.bf16.gmra.mxu0 %v3855
        %v5382 = vpop.f32.mrf.mxu0
        %v5383 = vadd.f32 0.0, %v5382
        %v5384 = vpop.f32.mrf.mxu0
        %v5385 = vpop.f32.mrf.mxu0
        %v5386 = vadd.f32 0.0, %v5385
        %v5387 = vpop.f32.mrf.mxu0
        %5388 = vmatprep.mubr.bf16.mxu0 0
        %5389 = vmatmul.mubr.bf16.gmra.mxu0 0
        %v5390 = vpop.f32.mrf.mxu0
        %v5391 = vadd.f32 0.0, %v5390
        %v5392 = vpop.f32.mrf.mxu0
        %v5393 = vpop.f32.mrf.mxu0
        %v5394 = vadd.f32 0.0, %v5393
        %v5395 = vpop.f32.mrf.mxu0
        %5396 = vdwg.mxu0
        %5397 = vmatprep.subr.bf16.mxu0 0
        %5398 = vmatpush1.bf16.msra.mxu0 %v5211
        %5399 = vmatprep.subr.bf16.mxu0 0
        %5400 = vmatpush1.bf16.msra.mxu0 %v5210
        %5401 = vmatprep.subr.bf16.mxu0 0
        %5402 = vmatpush1.bf16.msra.mxu0 %v5209
        %5403 = vmatprep.subr.bf16.mxu0 0
        %5404 = vmatpush1.bf16.msra.mxu0 %v5208
        %5405 = vmatprep.subr.bf16.mxu0 0
        %5406 = vmatpush1.bf16.msra.mxu0 %v5207
        %5407 = vmatprep.subr.bf16.mxu0 0
        %5408 = vmatpush1.bf16.msra.mxu0 %v5206
        %5409 = vmatprep.subr.bf16.mxu0 0
        %5410 = vmatpush1.bf16.msra.mxu0 %v5205
        %5411 = vmatprep.subr.bf16.mxu0 0
        %5412 = vmatpush1.bf16.msra.mxu0 %v5204
        %5413 = vmatprep.subr.bf16.mxu0 0
        %5414 = vmatpush2.bf16.msra.mxu0 0
        %5415 = vmatprep.subr.bf16.mxu0 0
        %5416 = vmatpush2.bf16.msra.mxu0 0
        %5417 = vmatprep.subr.bf16.mxu0 0
        %5418 = vmatpush2.bf16.msra.mxu0 0
        %5419 = vmatprep.subr.bf16.mxu0 0
        %5420 = vmatpush2.bf16.msra.mxu0 0
        %5421 = vmatprep.subr.bf16.mxu0 0
        %5422 = vmatpush2.bf16.msra.mxu0 0
        %5423 = vmatprep.subr.bf16.mxu0 0
        %5424 = vmatpush2.bf16.msra.mxu0 0
        %5425 = vmatprep.subr.bf16.mxu0 0
        %5426 = vmatpush2.bf16.msra.mxu0 0
        %5427 = vmatprep.subr.bf16.mxu0 0
        %5428 = vmatpush2.bf16.msra.mxu0 0
        %5429 = vmatprep.mubr.bf16.mxu0 0
        %5430 = vmatmul.mubr.bf16.gmra.mxu0 %v4001
        %v5431 = vpop.f32.mrf.mxu0
        %v5432 = vadd.f32 %v5271, %v5431
        %v5433 = vpop.f32.mrf.mxu0
        %v5434 = vpop.f32.mrf.mxu0
        %v5435 = vadd.f32 %v5274, %v5434
        %v5436 = vpop.f32.mrf.mxu0
        %5437 = vmatprep.mubr.bf16.mxu0 0
        %5438 = vmatmul.mubr.bf16.gmra.mxu0 %v4002
        %v5439 = vpop.f32.mrf.mxu0
        %v5440 = vadd.f32 %v5279, %v5439
        %v5441 = vpop.f32.mrf.mxu0
        %v5442 = vpop.f32.mrf.mxu0
        %v5443 = vadd.f32 %v5282, %v5442
        %v5444 = vpop.f32.mrf.mxu0
        %5445 = vmatprep.mubr.bf16.mxu0 0
        %5446 = vmatmul.mubr.bf16.gmra.mxu0 %v4003
        %v5447 = vpop.f32.mrf.mxu0
        %v5448 = vadd.f32 %v5287, %v5447
        %v5449 = vpop.f32.mrf.mxu0
        %v5450 = vpop.f32.mrf.mxu0
        %v5451 = vadd.f32 %v5290, %v5450
        %v5452 = vpop.f32.mrf.mxu0
        %5453 = vmatprep.mubr.bf16.mxu0 0
        %5454 = vmatmul.mubr.bf16.gmra.mxu0 %v4004
        %v5455 = vpop.f32.mrf.mxu0
        %v5456 = vadd.f32 %v5295, %v5455
        %v5457 = vpop.f32.mrf.mxu0
        %v5458 = vpop.f32.mrf.mxu0
        %v5459 = vadd.f32 %v5298, %v5458
        %v5460 = vpop.f32.mrf.mxu0
        %5461 = vmatprep.mubr.bf16.mxu0 0
        %5462 = vmatmul.mubr.bf16.gmra.mxu0 %v4005
        %v5463 = vpop.f32.mrf.mxu0
        %v5464 = vadd.f32 %v5303, %v5463
        %v5465 = vpop.f32.mrf.mxu0
        %v5466 = vpop.f32.mrf.mxu0
        %v5467 = vadd.f32 %v5306, %v5466
        %v5468 = vpop.f32.mrf.mxu0
        %5469 = vmatprep.mubr.bf16.mxu0 0
        %5470 = vmatmul.mubr.bf16.gmra.mxu0 %v4006
        %v5471 = vpop.f32.mrf.mxu0
        %v5472 = vadd.f32 %v5311, %v5471
        %v5473 = vpop.f32.mrf.mxu0
        %v5474 = vpop.f32.mrf.mxu0
        %v5475 = vadd.f32 %v5314, %v5474
        %v5476 = vpop.f32.mrf.mxu0
        %5477 = vmatprep.mubr.bf16.mxu0 0
        %5478 = vmatmul.mubr.bf16.gmra.mxu0 %v4007
        %v5479 = vpop.f32.mrf.mxu0
        %v5480 = vadd.f32 %v5319, %v5479
        %v5481 = vpop.f32.mrf.mxu0
        %v5482 = vpop.f32.mrf.mxu0
        %v5483 = vadd.f32 %v5322, %v5482
        %v5484 = vpop.f32.mrf.mxu0
        %5485 = vmatprep.mubr.bf16.mxu0 0
        %5486 = vmatmul.mubr.bf16.gmra.mxu0 %v4008
        %v5487 = vpop.f32.mrf.mxu0
        %v5488 = vadd.f32 %v5327, %v5487
        %v5489 = vpop.f32.mrf.mxu0
        %v5490 = vpop.f32.mrf.mxu0
        %v5491 = vadd.f32 %v5330, %v5490
        %v5492 = vpop.f32.mrf.mxu0
        %5493 = vmatprep.mubr.bf16.mxu0 0
        %5494 = vmatmul.mubr.bf16.gmra.mxu0 %v4009
        %v5495 = vpop.f32.mrf.mxu0
        %v5496 = vadd.f32 %v5335, %v5495
        %v5497 = vpop.f32.mrf.mxu0
        %v5498 = vpop.f32.mrf.mxu0
        %v5499 = vadd.f32 %v5338, %v5498
        %v5500 = vpop.f32.mrf.mxu0
        %5501 = vmatprep.mubr.bf16.mxu0 0
        %5502 = vmatmul.mubr.bf16.gmra.mxu0 %v4010
        %v5503 = vpop.f32.mrf.mxu0
        %v5504 = vadd.f32 %v5343, %v5503
        %v5505 = vpop.f32.mrf.mxu0
        %v5506 = vpop.f32.mrf.mxu0
        %v5507 = vadd.f32 %v5346, %v5506
        %v5508 = vpop.f32.mrf.mxu0
        %5509 = vmatprep.mubr.bf16.mxu0 0
        %5510 = vmatmul.mubr.bf16.gmra.mxu0 %v4011
        %v5511 = vpop.f32.mrf.mxu0
        %v5512 = vadd.f32 %v5351, %v5511
        %v5513 = vpop.f32.mrf.mxu0
        %v5514 = vpop.f32.mrf.mxu0
        %v5515 = vadd.f32 %v5354, %v5514
        %v5516 = vpop.f32.mrf.mxu0
        %5517 = vmatprep.mubr.bf16.mxu0 0
        %5518 = vmatmul.mubr.bf16.gmra.mxu0 %v4012
        %v5519 = vpop.f32.mrf.mxu0
        %v5520 = vadd.f32 %v5359, %v5519
        %v5521 = vpop.f32.mrf.mxu0
        %v5522 = vpop.f32.mrf.mxu0
        %v5523 = vadd.f32 %v5362, %v5522
        %v5524 = vpop.f32.mrf.mxu0
        %5525 = vmatprep.mubr.bf16.mxu0 0
        %5526 = vmatmul.mubr.bf16.gmra.mxu0 %v4013
        %v5527 = vpop.f32.mrf.mxu0
        %v5528 = vadd.f32 %v5367, %v5527
        %v5529 = vpop.f32.mrf.mxu0
        %v5530 = vpop.f32.mrf.mxu0
        %v5531 = vadd.f32 %v5370, %v5530
        %v5532 = vpop.f32.mrf.mxu0
        %5533 = vmatprep.mubr.bf16.mxu0 0
        %5534 = vmatmul.mubr.bf16.gmra.mxu0 %v4014
        %v5535 = vpop.f32.mrf.mxu0
        %v5536 = vadd.f32 %v5375, %v5535
        %v5537 = vpop.f32.mrf.mxu0
        %v5538 = vpop.f32.mrf.mxu0
        %v5539 = vadd.f32 %v5378, %v5538
        %v5540 = vpop.f32.mrf.mxu0
        %5541 = vmatprep.mubr.bf16.mxu0 0
        %5542 = vmatmul.mubr.bf16.gmra.mxu0 %v4015
        %v5543 = vpop.f32.mrf.mxu0
        %v5544 = vadd.f32 %v5383, %v5543
        %v5545 = vpop.f32.mrf.mxu0
        %v5546 = vpop.f32.mrf.mxu0
        %v5547 = vadd.f32 %v5386, %v5546
        %v5548 = vpop.f32.mrf.mxu0
        %5549 = vmatprep.mubr.bf16.mxu0 0
        %5550 = vmatmul.mubr.bf16.gmra.mxu0 0
        %v5551 = vpop.f32.mrf.mxu0
        %v5552 = vadd.f32 %v5391, %v5551
        %v5553 = vpop.f32.mrf.mxu0
        %v5554 = vpop.f32.mrf.mxu0
        %v5555 = vadd.f32 %v5394, %v5554
        %v5556 = vpop.f32.mrf.mxu0
        %5557 = vdwg.mxu0
        %v5558 = vadd.f32 %v4918, %v5432
        %v5559 = vadd.f32 %v4921, %v5435
        %v5560 = vadd.f32 %v4926, %v5440
        %v5561 = vadd.f32 %v4929, %v5443
        %v5562 = vadd.f32 %v4934, %v5448
        %v5563 = vadd.f32 %v4937, %v5451
        %v5564 = vadd.f32 %v4942, %v5456
        %v5565 = vadd.f32 %v4945, %v5459
        %v5566 = vadd.f32 %v4950, %v5464
        %v5567 = vadd.f32 %v4953, %v5467
        %v5568 = vadd.f32 %v4958, %v5472
        %v5569 = vadd.f32 %v4961, %v5475
        %v5570 = vadd.f32 %v4966, %v5480
        %v5571 = vadd.f32 %v4969, %v5483
        %v5572 = vadd.f32 %v4974, %v5488
        %v5573 = vadd.f32 %v4977, %v5491
        %v5574 = vadd.f32 %v4982, %v5496
        %v5575 = vadd.f32 %v4985, %v5499
        %v5576 = vadd.f32 %v4990, %v5504
        %v5577 = vadd.f32 %v4993, %v5507
        %v5578 = vadd.f32 %v4998, %v5512
        %v5579 = vadd.f32 %v5001, %v5515
        %v5580 = vadd.f32 %v5006, %v5520
        %v5581 = vadd.f32 %v5009, %v5523
        %v5582 = vadd.f32 %v5014, %v5528
        %v5583 = vadd.f32 %v5017, %v5531
        %v5584 = vadd.f32 %v5022, %v5536
        %v5585 = vadd.f32 %v5025, %v5539
        %v5586 = vadd.f32 %v5030, %v5544
        %v5587 = vadd.f32 %v5033, %v5547
        %v5588 = vadd.f32 %v5038, %v5552
        %v5589 = vadd.f32 %v5041, %v5555
        %v5590 = vadd.f32 %v5558, %v5559
        %v5591 = vadd.f32 %v5590, %v5560
        %v5592 = vadd.f32 %v5591, %v5561
        %v5593 = vadd.f32 %v5592, %v5562
        %v5594 = vadd.f32 %v5593, %v5563
        %v5595 = vadd.f32 %v5594, %v5564
        %v5596 = vadd.f32 %v5595, %v5565
        %v5597 = vadd.f32 %v5596, %v5566
        %v5598 = vadd.f32 %v5597, %v5567
        %v5599 = vadd.f32 %v5598, %v5568
        %v5600 = vadd.f32 %v5599, %v5569
        %v5601 = vadd.f32 %v5600, %v5570
        %v5602 = vadd.f32 %v5601, %v5571
        %v5603 = vadd.f32 %v5602, %v5572
        %v5604 = vadd.f32 %v5603, %v5573
        %v5605 = vadd.f32 %v5604, %v5574
        %v5606 = vadd.f32 %v5605, %v5575
        %v5607 = vadd.f32 %v5606, %v5576
        %v5608 = vadd.f32 %v5607, %v5577
        %v5609 = vadd.f32 %v5608, %v5578
        %v5610 = vadd.f32 %v5609, %v5579
        %v5611 = vadd.f32 %v5610, %v5580
        %v5612 = vadd.f32 %v5611, %v5581
        %v5613 = vadd.f32 %v5612, %v5582
        %v5614 = vadd.f32 %v5613, %v5583
        %v5615 = vadd.f32 %v5614, %v5584
        %v5616 = vadd.f32 %v5615, %v5585
        %v5617 = vadd.f32 %v5616, %v5586
        %v5618 = vadd.f32 %v5617, %v5587
        %v5619 = vadd.f32 %v5618, %v5588
        %v5620 = vadd.f32 %v5619, %v5589
        %v5621 = vrot.slane %v5620, 4
        %v5622 = vadd.f32 %v5620, %v5621
        %v5623 = vrot.slane %v5622, 2
        %v5624 = vadd.f32 %v5622, %v5623
        %v5625 = vrot.slane %v5624, 1
        %v5626 = vadd.f32 %v5624, %v5625
        %v5627 = vmul.f32 %v5558, %v5558
        %v5628 = vmul.f32 %v5559, %v5559
        %v5629 = vmul.f32 %v5560, %v5560
        %v5630 = vmul.f32 %v5561, %v5561
        %v5631 = vmul.f32 %v5562, %v5562
        %v5632 = vmul.f32 %v5563, %v5563
        %v5633 = vmul.f32 %v5564, %v5564
        %v5634 = vmul.f32 %v5565, %v5565
        %v5635 = vmul.f32 %v5566, %v5566
        %v5636 = vmul.f32 %v5567, %v5567
        %v5637 = vmul.f32 %v5568, %v5568
        %v5638 = vmul.f32 %v5569, %v5569
        %v5639 = vmul.f32 %v5570, %v5570
        %v5640 = vmul.f32 %v5571, %v5571
        %v5641 = vmul.f32 %v5572, %v5572
        %v5642 = vmul.f32 %v5573, %v5573
        %v5643 = vmul.f32 %v5574, %v5574
        %v5644 = vmul.f32 %v5575, %v5575
        %v5645 = vmul.f32 %v5576, %v5576
        %v5646 = vmul.f32 %v5577, %v5577
        %v5647 = vmul.f32 %v5578, %v5578
        %v5648 = vmul.f32 %v5579, %v5579
        %v5649 = vmul.f32 %v5580, %v5580
        %v5650 = vmul.f32 %v5581, %v5581
        %v5651 = vmul.f32 %v5582, %v5582
        %v5652 = vmul.f32 %v5583, %v5583
        %v5653 = vmul.f32 %v5584, %v5584
        %v5654 = vmul.f32 %v5585, %v5585
        %v5655 = vmul.f32 %v5586, %v5586
        %v5656 = vmul.f32 %v5587, %v5587
        %v5657 = vmul.f32 %v5588, %v5588
        %v5658 = vmul.f32 %v5589, %v5589
        %v5659 = vadd.f32 %v5627, %v5628
        %v5660 = vadd.f32 %v5659, %v5629
        %v5661 = vadd.f32 %v5660, %v5630
        %v5662 = vadd.f32 %v5661, %v5631
        %v5663 = vadd.f32 %v5662, %v5632
        %v5664 = vadd.f32 %v5663, %v5633
        %v5665 = vadd.f32 %v5664, %v5634
        %v5666 = vadd.f32 %v5665, %v5635
        %v5667 = vadd.f32 %v5666, %v5636
        %v5668 = vadd.f32 %v5667, %v5637
        %v5669 = vadd.f32 %v5668, %v5638
        %v5670 = vadd.f32 %v5669, %v5639
        %v5671 = vadd.f32 %v5670, %v5640
        %v5672 = vadd.f32 %v5671, %v5641
        %v5673 = vadd.f32 %v5672, %v5642
        %v5674 = vadd.f32 %v5673, %v5643
        %v5675 = vadd.f32 %v5674, %v5644
        %v5676 = vadd.f32 %v5675, %v5645
        %v5677 = vadd.f32 %v5676, %v5646
        %v5678 = vadd.f32 %v5677, %v5647
        %v5679 = vadd.f32 %v5678, %v5648
        %v5680 = vadd.f32 %v5679, %v5649
        %v5681 = vadd.f32 %v5680, %v5650
        %v5682 = vadd.f32 %v5681, %v5651
        %v5683 = vadd.f32 %v5682, %v5652
        %v5684 = vadd.f32 %v5683, %v5653
        %v5685 = vadd.f32 %v5684, %v5654
        %v5686 = vadd.f32 %v5685, %v5655
        %v5687 = vadd.f32 %v5686, %v5656
        %v5688 = vadd.f32 %v5687, %v5657
        %v5689 = vadd.f32 %v5688, %v5658
        %v5690 = vrot.slane %v5689, 4
        %v5691 = vadd.f32 %v5689, %v5690
        %v5692 = vrot.slane %v5691, 2
        %v5693 = vadd.f32 %v5691, %v5692
        %v5694 = vrot.slane %v5693, 1
        %v5695 = vadd.f32 %v5693, %v5694
        %v5696 = vmul.f32 %v5626, 0.00390625
        %v5697 = vmul.f32 %v5695, 0.00390625
        %v5698 = vmul.f32 %v5696, %v5696
        %v5699 = vsub.f32 %v5697, %v5698
        %v5700 = vmax.f32 %v5699, 0.0
        %v5701 = vadd.f32 %v5700, 1e-05
        %v5702 = vrsqrt.pop %v5701
        %v5703 = vmul.f32 %v5702, %v337
        %v5704 = vmul.f32 %v5696, %v5703
        %v5706 = vrot.slane %v5704, 7
        %v5708 = vsub.f32 %v337, %v5706
        %v5709 = vlaneseq
        %v5710 = vshrl.u32 %v5709, 7
        %v5711 = vsub.s32 3, %v5710
        %v5712 = vrot.slane %v5703, %v5711
        %v5713 = vmul.f32 %v5558, %v5712
        %v5714 = vmul.f32 %v5559, %v5712
        %v5715 = vmul.f32 %v5560, %v5712
        %v5716 = vmul.f32 %v5561, %v5712
        %v5717 = vmul.f32 %v5562, %v5712
        %v5718 = vmul.f32 %v5563, %v5712
        %v5719 = vmul.f32 %v5564, %v5712
        %v5720 = vmul.f32 %v5565, %v5712
        %v5721 = vmul.f32 %v5566, %v5712
        %v5722 = vmul.f32 %v5567, %v5712
        %v5723 = vmul.f32 %v5568, %v5712
        %v5724 = vmul.f32 %v5569, %v5712
        %v5725 = vmul.f32 %v5570, %v5712
        %v5726 = vmul.f32 %v5571, %v5712
        %v5727 = vmul.f32 %v5572, %v5712
        %v5728 = vmul.f32 %v5573, %v5712
        %v5729 = vmul.f32 %v5574, %v5712
        %v5730 = vmul.f32 %v5575, %v5712
        %v5731 = vmul.f32 %v5576, %v5712
        %v5732 = vmul.f32 %v5577, %v5712
        %v5733 = vmul.f32 %v5578, %v5712
        %v5734 = vmul.f32 %v5579, %v5712
        %v5735 = vmul.f32 %v5580, %v5712
        %v5736 = vmul.f32 %v5581, %v5712
        %v5737 = vmul.f32 %v5582, %v5712
        %v5738 = vmul.f32 %v5583, %v5712
        %v5739 = vmul.f32 %v5584, %v5712
        %v5740 = vmul.f32 %v5585, %v5712
        %v5741 = vmul.f32 %v5586, %v5712
        %v5742 = vmul.f32 %v5587, %v5712
        %v5743 = vmul.f32 %v5588, %v5712
        %v5744 = vmul.f32 %v5589, %v5712
        %v5745 = vlaneseq
        %v5746 = vshrl.u32 %v5745, 7
        %v5747 = vsub.s32 4, %v5746
        %v5748 = vrot.slane %v5708, %v5747
        %v5749 = vadd.f32 %v5713, %v5748
        %v5750 = vadd.f32 %v5714, %v5748
        %v5751 = vadd.f32 %v5715, %v5748
        %v5752 = vadd.f32 %v5716, %v5748
        %v5753 = vadd.f32 %v5717, %v5748
        %v5754 = vadd.f32 %v5718, %v5748
        %v5755 = vadd.f32 %v5719, %v5748
        %v5756 = vadd.f32 %v5720, %v5748
        %v5757 = vadd.f32 %v5721, %v5748
        %v5758 = vadd.f32 %v5722, %v5748
        %v5759 = vadd.f32 %v5723, %v5748
        %v5760 = vadd.f32 %v5724, %v5748
        %v5761 = vadd.f32 %v5725, %v5748
        %v5762 = vadd.f32 %v5726, %v5748
        %v5763 = vadd.f32 %v5727, %v5748
        %v5764 = vadd.f32 %v5728, %v5748
        %v5765 = vadd.f32 %v5729, %v5748
        %v5766 = vadd.f32 %v5730, %v5748
        %v5767 = vadd.f32 %v5731, %v5748
        %v5768 = vadd.f32 %v5732, %v5748
        %v5769 = vadd.f32 %v5733, %v5748
        %v5770 = vadd.f32 %v5734, %v5748
        %v5771 = vadd.f32 %v5735, %v5748
        %v5772 = vadd.f32 %v5736, %v5748
        %v5773 = vadd.f32 %v5737, %v5748
        %v5774 = vadd.f32 %v5738, %v5748
        %v5775 = vadd.f32 %v5739, %v5748
        %v5776 = vadd.f32 %v5740, %v5748
        %v5777 = vadd.f32 %v5741, %v5748
        %v5778 = vadd.f32 %v5742, %v5748
        %v5779 = vadd.f32 %v5743, %v5748
        %v5780 = vadd.f32 %v5744, %v5748
        %v5781 = vadd.f32 %v5749, %v273
        %v5782 = vadd.f32 %v5750, %v274
        %v5783 = vadd.f32 %v5751, %v275
        %v5784 = vadd.f32 %v5752, %v276
        %v5785 = vadd.f32 %v5753, %v277
        %v5786 = vadd.f32 %v5754, %v278
        %v5787 = vadd.f32 %v5755, %v279
        %v5788 = vadd.f32 %v5756, %v280
        %v5789 = vadd.f32 %v5757, %v281
        %v5790 = vadd.f32 %v5758, %v282
        %v5791 = vadd.f32 %v5759, %v283
        %v5792 = vadd.f32 %v5760, %v284
        %v5793 = vadd.f32 %v5761, %v285
        %v5794 = vadd.f32 %v5762, %v286
        %v5795 = vadd.f32 %v5763, %v287
        %v5796 = vadd.f32 %v5764, %v288
        %v5797 = vadd.f32 %v5765, %v289
        %v5798 = vadd.f32 %v5766, %v290
        %v5799 = vadd.f32 %v5767, %v291
        %v5800 = vadd.f32 %v5768, %v292
        %v5801 = vadd.f32 %v5769, %v293
        %v5802 = vadd.f32 %v5770, %v294
        %v5803 = vadd.f32 %v5771, %v295
        %v5804 = vadd.f32 %v5772, %v296
        %v5805 = vadd.f32 %v5773, %v297
        %v5806 = vadd.f32 %v5774, %v298
        %v5807 = vadd.f32 %v5775, %v299
        %v5808 = vadd.f32 %v5776, %v300
        %v5809 = vadd.f32 %v5777, %v301
        %v5810 = vadd.f32 %v5778, %v302
        %v5811 = vadd.f32 %v5779, %v303
        %v5812 = vadd.f32 %v5780, %v304
        %5813 = vst [vmem:[%s271] sm:$0xff] %v5781
        %5814 = vst [vmem:[%s271 + $0x8] sm:$0xff] %v5782
        %5815 = vst [vmem:[%s271 + $0x10] sm:$0xff] %v5783
        %5816 = vst [vmem:[%s271 + $0x18] sm:$0xff] %v5784
        %5817 = vst [vmem:[%s271 + $0x20] sm:$0xff] %v5785
        %5818 = vst [vmem:[%s271 + $0x28] sm:$0xff] %v5786
        %5819 = vst [vmem:[%s271 + $0x30] sm:$0xff] %v5787
        %5820 = vst [vmem:[%s271 + $0x38] sm:$0xff] %v5788
        %5821 = vst [vmem:[%s271 + $0x40] sm:$0xff] %v5789
        %5822 = vst [vmem:[%s271 + $0x48] sm:$0xff] %v5790
        %5823 = vst [vmem:[%s271 + $0x50] sm:$0xff] %v5791
        %5824 = vst [vmem:[%s271 + $0x58] sm:$0xff] %v5792
        %5825 = vst [vmem:[%s271 + $0x60] sm:$0xff] %v5793
        %5826 = vst [vmem:[%s271 + $0x68] sm:$0xff] %v5794
        %5827 = vst [vmem:[%s271 + $0x70] sm:$0xff] %v5795
        %5828 = vst [vmem:[%s271 + $0x78] sm:$0xff] %v5796
        %5829 = vst [vmem:[%s271 + $0x80] sm:$0xff] %v5797
        %5830 = vst [vmem:[%s271 + $0x88] sm:$0xff] %v5798
        %5831 = vst [vmem:[%s271 + $0x90] sm:$0xff] %v5799
        %5832 = vst [vmem:[%s271 + $0x98] sm:$0xff] %v5800
        %5833 = vst [vmem:[%s271 + $0xa0] sm:$0xff] %v5801
        %5834 = vst [vmem:[%s271 + $0xa8] sm:$0xff] %v5802
        %5835 = vst [vmem:[%s271 + $0xb0] sm:$0xff] %v5803
        %5836 = vst [vmem:[%s271 + $0xb8] sm:$0xff] %v5804
        %5837 = vst [vmem:[%s271 + $0xc0] sm:$0xff] %v5805
        %5838 = vst [vmem:[%s271 + $0xc8] sm:$0xff] %v5806
        %5839 = vst [vmem:[%s271 + $0xd0] sm:$0xff] %v5807
        %5840 = vst [vmem:[%s271 + $0xd8] sm:$0xff] %v5808
        %5841 = vst [vmem:[%s271 + $0xe0] sm:$0xff] %v5809
        %5842 = vst [vmem:[%s271 + $0xe8] sm:$0xff] %v5810
        %5843 = vst [vmem:[%s271 + $0xf0] sm:$0xff] %v5811
        %5844 = vst [vmem:[%s271 + $0xf8] sm:$0xff] %v5812
        %s5845 = sand.u32 %s141, 1
        %s5846 = scalar_lea.sflag [#allocation4], %s5845
        %s5847 = sand.u32 %s141, 1
        %s5848 = smul.addr %s5847, 256
        %s5849 = scalar_lea.vmem [#allocation8], %s5848
        // Predicated region
        $region53: #{tpu_custom_call.1} parent=39 // pred_check
          %p5850 = pneg %p151
        $region54: #{tpu_custom_call.1} parent=39 // pred_check_branch
          %5852 = sbr.rel (%p5850) target = $region56
        $region55: #{tpu_custom_call.1} parent=39 // pred_region
          %s5854 = ssub.s32 4096, 4096
          %5855 = vsyncadd %s5846, %s5854
          %s5856 = smul.addr %s23, 32
          %s5857 = smul.addr %s5856, 128
          %s5858 = scalar_lea.hbm %s5, %s5857
          %s5859 = sshll.u32 %s5849, 4
          %s5860 = int_to_ptr.vmem [resolvable:$true] %s5859
          %5865 = dma.vmem_to_hbm [thread:$0]  %s5860, 4096, %s5858, %s5846, 128, 128, 8
        $region56: #{tpu_custom_call.1} parent=39 // pred_fallthru
          _
      $region40: #{tpu_custom_call.1} parent=5 // pred_fallthru
        _
      %p5866 = scmp.le.s32.totalorder 2, %s18
      // Predicated region
      $region57: #{tpu_custom_call.1} parent=5 // pred_check
        %p5867 = pneg %p5866
      $region58: #{tpu_custom_call.1} parent=5 // pred_check_branch
        %5869 = sbr.rel (%p5867) target = $region60
      $region59: #{tpu_custom_call.1} parent=5 // pred_region
        %s5870 = ssub.s32 %s18, 2
        // Predicated region
        $region61: #{tpu_custom_call.1} parent=59 // pred_check
          %p5871 = pneg %p157
        $region62: #{tpu_custom_call.1} parent=59 // pred_check_branch
          %5873 = sbr.rel (%p5871) target = $region64
        $region63: #{tpu_custom_call.1} parent=59 // pred_region
          %s5874 = sand.u32 %s142, 1
          %s5875 = scalar_lea.sflag [#allocation4], %s5874
          %s5876 = sand.u32 %s142, 1
          %s5877 = smul.addr %s5876, 256
          %s5878 = scalar_lea.vmem [#allocation8], %s5877
          %5879 = dma.done %s5875, 4096
        $region64: #{tpu_custom_call.1} parent=59 // pred_fallthru
          _
      $region60: #{tpu_custom_call.1} parent=5 // pred_fallthru
        _
    $region6: #{tpu_custom_call.1} parent=1 // loop_footer
      %s22 = sadd.s32 1, %s18
    $region7: #{tpu_custom_call.1} parent=1 // loop_footer_branch
      %17 = sbr.rel target = $region3
    $region8: #{tpu_custom_call.1} parent=1 // loop_exit
      _
    %5880 = vsyncpa [#allocation3], 1
    %s5881 = scalar_lea.sflag [#allocation3], 1
    %5882 = vsyncpa %s5881, 1
    %5883 = vsyncpa [#allocation6], 1
    %5884 = vsyncpa [#allocation4], 1
    %s5885 = scalar_lea.sflag [#allocation4], 1
    %5886 = vsyncpa %s5885, 1

</llo_original>
